<compile_context>
chip_gen: v7x
topology: tpu7x:2x2x1
jax: 0.10.0
libtpu: 0.0.40
codegen_flags: <defaults>
</compile_context>

<pallas_src>
import math

import jax
import jax.numpy as jnp
from jax.experimental import pallas as pl
from jax.experimental.pallas import tpu as pltpu


def _layernorm(x, gamma, beta, eps=1e-5):
    mu = jnp.mean(x, axis=-1, keepdims=True)
    xc = x - mu
    var = jnp.mean(xc * xc, axis=-1, keepdims=True)
    return xc * jax.lax.rsqrt(var + eps) * gamma + beta


def _pick_tb(batch, seq):
    """Batch-block size: enough rows (TB*S) to amortize weight DMA / fill the
    MXU, while keeping >=2 parallel grid steps when possible (v7x: 2 TCs)."""
    tb = max(1, min(batch, max(1, 256 // max(seq, 1))))
    while batch % tb:
        tb -= 1
    while tb > 1 and batch // tb < 2:
        tb -= 1
        while batch % tb:
            tb -= 1
    return max(tb, 1)


def _make_encoder_kernel(nhead, tb, has_final_norm):
    def kernel(src_ref, pos_ref, mask_ref,
               wqk_ref, bqk_ref, wv_ref, bv_ref, wo_ref, bo_ref,
               g1_ref, be1_ref, w1_ref, fb1_ref, w2_ref, fb2_ref,
               g2_ref, be2_ref, *rest):
        if has_final_norm:
            gf_ref, bf_ref, out_ref, x_sc = rest
        else:
            out_ref, x_sc = rest

        layer = pl.program_id(1)

        # Layer 0: load this batch block into the resident VMEM scratch.
        @pl.when(layer == 0)
        def _():
            x_sc[...] = src_ref[...].reshape(x_sc.shape).astype(jnp.float32)

        x = x_sc[...]                                      # (TB*S, D) f32
        p = pos_ref[...].astype(jnp.float32).reshape(x.shape)

        M, D = x.shape
        S = M // tb
        dh = D // nhead
        scale = 1.0 / math.sqrt(dh)

        # ---- fused QK projection (single (D, 2D) bf16 weight stream) + V ----
        xp = x + p
        xp_b = xp.astype(jnp.bfloat16)
        x_b = x.astype(jnp.bfloat16)
        qk = jnp.dot(xp_b, wqk_ref[0],
                     preferred_element_type=jnp.float32) + bqk_ref[0]
        q = qk[:, :D]                                      # lane-tile aligned
        k = qk[:, D:]
        v = (jnp.dot(x_b, wv_ref[0],
                     preferred_element_type=jnp.float32) + bv_ref[0]
             ).astype(jnp.bfloat16)

        # ---- per-batch-row, per-head attention (scores stay (S, S)) ----
        # Static loops: TB and nhead are small; head slices need static lane
        # offsets.  Softmax normalization uses the EUP reciprocal.
        o_rows = []
        for b in range(tb):
            lo = b * S
            qr = q[lo:lo + S]
            kr = k[lo:lo + S]
            vr = v[lo:lo + S]
            bias = mask_ref[b]                             # (1, S) additive mask
            ohs = []
            for h in range(nhead):
                c0 = h * dh
                qh = qr[:, c0:c0 + dh]
                kh = kr[:, c0:c0 + dh]
                vh = vr[:, c0:c0 + dh]
                s = jax.lax.dot_general(qh, kh, (((1,), (1,)), ((), ())),
                                        preferred_element_type=jnp.float32)
                s = s * scale + bias
                s = s - jnp.max(s, axis=-1, keepdims=True)
                e = jnp.exp(s)
                a = e * pl.reciprocal(jnp.sum(e, axis=-1, keepdims=True),
                                      approx=True)
                ohs.append(jnp.dot(a.astype(jnp.bfloat16), vh,
                                   preferred_element_type=jnp.float32))
            o_rows.append(jnp.concatenate(ohs, axis=-1))    # (S, D) head-concat
        o = jnp.concatenate(o_rows, axis=0)                 # (TB*S, D)

        # ---- single full-depth (K = D) output projection over all rows ----
        attn = jnp.dot(o.astype(jnp.bfloat16), wo_ref[0],
                       preferred_element_type=jnp.float32) + bo_ref[0]

        y = _layernorm(x + attn, g1_ref[0], be1_ref[0])

        # ---- feed-forward (batch-blocked, bf16 weight streams) ----
        f = jnp.dot(y.astype(jnp.bfloat16), w1_ref[0],
                    preferred_element_type=jnp.float32) + fb1_ref[0]
        f = jnp.maximum(f, 0.0)
        f = jnp.dot(f.astype(jnp.bfloat16), w2_ref[0],
                    preferred_element_type=jnp.float32) + fb2_ref[0]
        z = _layernorm(y + f, g2_ref[0], be2_ref[0])

        x_sc[...] = z

        # Last layer: optional final LayerNorm, one lane-dense full-tile store.
        @pl.when(layer == pl.num_programs(1) - 1)
        def _():
            out = z
            if has_final_norm:
                out = _layernorm(out, gf_ref[...], bf_ref[...])
            out_ref[...] = out.reshape(out_ref.shape).astype(out_ref.dtype)

    return kernel


def transformer_encoder_forward(src, pos, key_padding_mask, layer_params,
                                norm_params=None, nhead=4, tb=None):
    """Standard (non-deformable) TransformerEncoder.forward.

    src, pos: (B, S, D) ; key_padding_mask: (B, S) bool (True = padded token).
    layer_params: list (one dict per layer) of weights laid out for x @ W
    (i.e. (in, out)).  Returns (output, None, None).
    """
    B, S, D = src.shape
    L = len(layer_params)
    F = layer_params[0]["w1"].shape[1]
    assert D % nhead == 0 and D % 128 == 0

    if tb is None:
        tb = _pick_tb(B, S)
    assert B % tb == 0

    # Additive key-padding bias (PyTorch masked_fill(-inf) approximated by -1e9
    # so a fully padded row stays finite).
    mask_bias = jnp.where(key_padding_mask, -1e9, 0.0).astype(jnp.float32)
    mask_bias = mask_bias.reshape(B, 1, S)

    wdt = jnp.bfloat16   # weight-streaming dtype (halves HBM weight traffic)

    def stk(name, shape, dtype):
        return jnp.stack([jnp.asarray(lp[name], jnp.float32)
                          for lp in layer_params]).astype(dtype).reshape((L,) + shape)

    # Fused Wq/Wk -> (L, D, 2D), fused bias -> (L, 1, 2D).
    wqk = jnp.stack([
        jnp.concatenate([jnp.asarray(lp["wq"], jnp.float32),
                         jnp.asarray(lp["wk"], jnp.float32)], axis=1)
        for lp in layer_params]).astype(wdt)
    bqk = jnp.stack([
        jnp.concatenate([jnp.asarray(lp["bq"], jnp.float32).reshape(-1),
                         jnp.asarray(lp["bk"], jnp.float32).reshape(-1)])
        for lp in layer_params]).astype(jnp.float32).reshape(L, 1, 2 * D)

    f32 = jnp.float32
    operands = [
        src, pos, mask_bias,
        wqk, bqk,
        stk("wv", (D, D), wdt), stk("bv", (1, D), f32),
        stk("wo", (D, D), wdt), stk("bo", (1, D), f32),
        stk("g1", (1, D), f32), stk("be1", (1, D), f32),
        stk("w1", (D, F), wdt), stk("fb1", (1, F), f32),
        stk("w2", (F, D), wdt), stk("fb2", (1, D), f32),
        stk("g2", (1, D), f32), stk("be2", (1, D), f32),
    ]

    def xspec(shape):   # activations / mask: indexed by batch block
        return pl.BlockSpec(shape, lambda b, l: (b, 0, 0))

    def wspec(shape):   # stacked per-layer weights: indexed by layer
        return pl.BlockSpec(shape, lambda b, l: (l, 0, 0))

    in_specs = [
        xspec((tb, S, D)), xspec((tb, S, D)), xspec((tb, 1, S)),
        wspec((1, D, 2 * D)), wspec((1, 1, 2 * D)),
        wspec((1, D, D)), wspec((1, 1, D)),
        wspec((1, D, D)), wspec((1, 1, D)),
        wspec((1, 1, D)), wspec((1, 1, D)),
        wspec((1, D, F)), wspec((1, 1, F)),
        wspec((1, F, D)), wspec((1, 1, D)),
        wspec((1, 1, D)), wspec((1, 1, D)),
    ]

    has_final = norm_params is not None
    if has_final:
        gf = jnp.asarray(norm_params[0], jnp.float32).reshape(1, D)
        bf = jnp.asarray(norm_params[1], jnp.float32).reshape(1, D)
        operands += [gf, bf]
        in_specs += [pl.BlockSpec((1, D), lambda b, l: (0, 0)),
                     pl.BlockSpec((1, D), lambda b, l: (0, 0))]

    kernel = _make_encoder_kernel(nhead=nhead, tb=tb, has_final_norm=has_final)

    out = pl.pallas_call(
        kernel,
        out_shape=jax.ShapeDtypeStruct((B, S, D), src.dtype),
        grid_spec=pltpu.PrefetchScalarGridSpec(
            num_scalar_prefetch=0,
            grid=(B // tb, L),
            in_specs=in_specs,
            out_specs=pl.BlockSpec((tb, S, D), lambda b, l: (b, 0, 0)),
            scratch_shapes=[pltpu.VMEM((tb * S, D), jnp.float32)],
        ),
        compiler_params=pltpu.CompilerParams(
            dimension_semantics=("parallel", "arbitrary"),
            # Explicit scoped-VMEM budget: above v5e's 16 MiB / v6e's 32 MiB
            # defaults, below v7x's 64 MiB physical capacity.
            vmem_limit_bytes=48 * 1024 * 1024),
    )(*operands)

    # Matches the module's return signature when ref_token_index is None.
    return out, None, None


# ---------------- pure-JAX reference (mirrors PyTorch f32 semantics) ----------------
def _reference(src, pos, key_padding_mask, layer_params, norm_params, nhead):
    hp = jax.lax.Precision.HIGHEST
    x = src.astype(jnp.float32)
    p = pos.astype(jnp.float32)
    B, S, D = x.shape
    dh = D // nhead
    bias = jnp.where(key_padding_mask, -1e9, 0.0).astype(jnp.float32)
    for lp in layer_params:
        xp = x + p
        q = jnp.einsum("bsd,de->bse", xp, lp["wq"], precision=hp) + lp["bq"]
        k = jnp.einsum("bsd,de->bse", xp, lp["wk"], precision=hp) + lp["bk"]
        v = jnp.einsum("bsd,de->bse", x, lp["wv"], precision=hp) + lp["bv"]
        q = q.reshape(B, S, nhead, dh)
        k = k.reshape(B, S, nhead, dh)
        v = v.reshape(B, S, nhead, dh)
        s = jnp.einsum("bqhd,bkhd->bhqk", q, k, precision=hp) / math.sqrt(dh)
        s = s + bias[:, None, None, :]
        a = jax.nn.softmax(s, axis=-1)
        o = jnp.einsum("bhqk,bkhd->bqhd", a, v, precision=hp).reshape(B, S, D)
        o = jnp.einsum("bsd,de->bse", o, lp["wo"], precision=hp) + lp["bo"]
        x = _layernorm(x + o, lp["g1"], lp["be1"])
        f = jax.nn.relu(
            jnp.einsum("bsd,df->bsf", x, lp["w1"], precision=hp) + lp["fb1"])
        f = jnp.einsum("bsf,fd->bsd", f, lp["w2"], precision=hp) + lp["fb2"]
        x = _layernorm(x + f, lp["g2"], lp["be2"])
    if norm_params is not None:
        x = _layernorm(x, norm_params[0], norm_params[1])
    return x


def _init_layer_params(key, D, F, scale=0.05):
    ks = jax.random.split(key, 16)
    n = lambda k, shp: scale * jax.random.normal(k, shp, jnp.float32)
    return dict(
        wq=n(ks[0], (D, D)), bq=n(ks[1], (D,)),
        wk=n(ks[2], (D, D)), bk=n(ks[3], (D,)),
        wv=n(ks[4], (D, D)), bv=n(ks[5], (D,)),
        wo=n(ks[6], (D, D)), bo=n(ks[7], (D,)),
        g1=1.0 + n(ks[8], (D,)), be1=n(ks[9], (D,)),
        w1=n(ks[10], (D, F)), fb1=n(ks[11], (F,)),
        w2=n(ks[12], (F, D)), fb2=n(ks[13], (D,)),
        g2=1.0 + n(ks[14], (D,)), be2=n(ks[15], (D,)),
    )


if __name__ == "__main__":
    # Small shapes consistent with the module (d_model lane-dense).
    # B=4 exercises both batch-blocking (TB=2) and >=2 parallel grid steps.
    B, S, D, F, NHEAD, NLAYERS = 4, 16, 128, 256, 4, 2

    key = jax.random.PRNGKey(0)
    k_src, k_pos, k_norm, *k_layers = jax.random.split(key, 3 + NLAYERS)

    src = jax.random.normal(k_src, (B, S, D), jnp.float32)
    pos = jax.random.normal(k_pos, (B, S, D), jnp.float32)
    # key_padding_mask: True = padded token.
    lengths = jnp.array([S, S - 3, S - 5, S - 1])
    key_padding_mask = jnp.arange(S)[None, :] >= lengths[:, None]

    layer_params = [_init_layer_params(k_layers[i], D, F) for i in range(NLAYERS)]
    kg, kb = jax.random.split(k_norm)
    norm_params = (1.0 + 0.05 * jax.random.normal(kg, (D,), jnp.float32),
                   0.05 * jax.random.normal(kb, (D,), jnp.float32))

    out, inter_out, inter_ref = transformer_encoder_forward(
        src, pos, key_padding_mask, layer_params, norm_params, nhead=NHEAD)
    out = jax.block_until_ready(out)

    ref = _reference(src, pos, key_padding_mask, layer_params, norm_params, NHEAD)
    assert out.shape == (B, S, D)
    assert inter_out is None and inter_ref is None
    max_err = float(jnp.max(jnp.abs(out - ref)))
    # Tolerance accounts for bf16 weight/activation streaming into the MXU
    # (f32 accumulation); structural bugs would produce errors >> 5e-2.
    assert jnp.allclose(out, ref, atol=5e-2, rtol=5e-2), \
        f"mismatch, max err {max_err}"

    print("KERNEL_OK")
</pallas_src>

<mosaic_0001>
module attributes {stable_mosaic.version = 11 : i64} {
  func.func @kernel(%arg0: i32, %arg1: i32, %arg2: memref<2x16x128xf32, #tpu.memory_space<vmem>>, %arg3: memref<2x16x128xf32, #tpu.memory_space<vmem>>, %arg4: memref<2x1x16xf32, #tpu.memory_space<vmem>>, %arg5: memref<1x128x256xbf16, #tpu.memory_space<vmem>>, %arg6: memref<1x1x256xf32, #tpu.memory_space<vmem>>, %arg7: memref<1x128x128xbf16, #tpu.memory_space<vmem>>, %arg8: memref<1x1x128xf32, #tpu.memory_space<vmem>>, %arg9: memref<1x128x128xbf16, #tpu.memory_space<vmem>>, %arg10: memref<1x1x128xf32, #tpu.memory_space<vmem>>, %arg11: memref<1x1x128xf32, #tpu.memory_space<vmem>>, %arg12: memref<1x1x128xf32, #tpu.memory_space<vmem>>, %arg13: memref<1x128x256xbf16, #tpu.memory_space<vmem>>, %arg14: memref<1x1x256xf32, #tpu.memory_space<vmem>>, %arg15: memref<1x256x128xbf16, #tpu.memory_space<vmem>>, %arg16: memref<1x1x128xf32, #tpu.memory_space<vmem>>, %arg17: memref<1x1x128xf32, #tpu.memory_space<vmem>>, %arg18: memref<1x1x128xf32, #tpu.memory_space<vmem>>, %arg19: memref<1x128xf32, #tpu.memory_space<vmem>>, %arg20: memref<1x128xf32, #tpu.memory_space<vmem>>, %arg21: memref<2x16x128xf32, #tpu.memory_space<vmem>>, %arg22: memref<32x128xf32, #tpu.memory_space<vmem>>) attributes {dimension_semantics = [#tpu.dimension_semantics<parallel>, #tpu.dimension_semantics<arbitrary>], iteration_bounds = array<i64: 2, 2>, scalar_prefetch = 0 : i64, scratch_operands = 1 : i64, tpu.core_type = #tpu.core_type<tc>, window_params = [{transform_indices = @transform_0, window_bounds = array<i64: 2, 16, 128>}, {transform_indices = @transform_1, window_bounds = array<i64: 2, 16, 128>}, {transform_indices = @transform_2, window_bounds = array<i64: 2, 1, 16>}, {transform_indices = @transform_3, window_bounds = array<i64: 1, 128, 256>}, {transform_indices = @transform_4, window_bounds = array<i64: 1, 1, 256>}, {transform_indices = @transform_5, window_bounds = array<i64: 1, 128, 128>}, {transform_indices = @transform_6, window_bounds = array<i64: 1, 1, 128>}, {transform_indices = @transform_7, window_bounds = array<i64: 1, 128, 128>}, {transform_indices = @transform_8, window_bounds = array<i64: 1, 1, 128>}, {transform_indices = @transform_9, window_bounds = array<i64: 1, 1, 128>}, {transform_indices = @transform_10, window_bounds = array<i64: 1, 1, 128>}, {transform_indices = @transform_11, window_bounds = array<i64: 1, 128, 256>}, {transform_indices = @transform_12, window_bounds = array<i64: 1, 1, 256>}, {transform_indices = @transform_13, window_bounds = array<i64: 1, 256, 128>}, {transform_indices = @transform_14, window_bounds = array<i64: 1, 1, 128>}, {transform_indices = @transform_15, window_bounds = array<i64: 1, 1, 128>}, {transform_indices = @transform_16, window_bounds = array<i64: 1, 1, 128>}, {pipeline_mode = #tpu.pipeline_mode<synchronous>, transform_indices = @transform_17, window_bounds = array<i64: 1, 128>}, {pipeline_mode = #tpu.pipeline_mode<synchronous>, transform_indices = @transform_18, window_bounds = array<i64: 1, 128>}, {transform_indices = @transform_19, window_bounds = array<i64: 2, 16, 128>}]} {
    %c0_i32 = arith.constant 0 : i32
    %0 = arith.cmpi eq, %arg1, %c0_i32 : i32
    %1 = arith.extui %0 : i1 to i32
    %c0_i32_0 = arith.constant 0 : i32
    %2 = arith.cmpi ne, %1, %c0_i32_0 : i32
    scf.if %2 {
      %c0_110 = arith.constant 0 : index
      %c0_111 = arith.constant 0 : index
      %c0_112 = arith.constant 0 : index
      %279 = vector.load %arg2[%c0_110, %c0_111, %c0_112] : memref<2x16x128xf32, #tpu.memory_space<vmem>>, vector<2x16x128xf32>
      %280 = vector.shape_cast %279 : vector<2x16x128xf32> to vector<32x128xf32>
      %c0_113 = arith.constant 0 : index
      %c0_114 = arith.constant 0 : index
      %281 = vector.load %arg22[%c0_113, %c0_114] : memref<32x128xf32, #tpu.memory_space<vmem>>, vector<32x128xf32>
      tpu.vector_store %arg22[%c0_113, %c0_114], %280 {strides = array<i32>} : memref<32x128xf32, #tpu.memory_space<vmem>>, vector<32x128xf32>,
    } else {
    }
    %c0 = arith.constant 0 : index
    %c0_1 = arith.constant 0 : index
    %3 = vector.load %arg22[%c0, %c0_1] : memref<32x128xf32, #tpu.memory_space<vmem>>, vector<32x128xf32>
    %c0_2 = arith.constant 0 : index
    %c0_3 = arith.constant 0 : index
    %c0_4 = arith.constant 0 : index
    %4 = vector.load %arg3[%c0_2, %c0_3, %c0_4] : memref<2x16x128xf32, #tpu.memory_space<vmem>>, vector<2x16x128xf32>
    %5 = vector.shape_cast %4 : vector<2x16x128xf32> to vector<32x128xf32>
    %6 = arith.addf %3, %5 : vector<32x128xf32>
    %7 = arith.truncf %6 : vector<32x128xf32> to vector<32x128xbf16>
    %8 = arith.truncf %3 : vector<32x128xf32> to vector<32x128xbf16>
    %c0_5 = arith.constant 0 : index
    %c0_6 = arith.constant 0 : index
    %c0_7 = arith.constant 0 : index
    %9 = vector.load %arg5[%c0_5, %c0_6, %c0_7] : memref<1x128x256xbf16, #tpu.memory_space<vmem>>, vector<1x128x256xbf16>
    %10 = vector.shape_cast %9 : vector<1x128x256xbf16> to vector<128x256xbf16>
    %cst = arith.constant dense<0.000000e+00> : vector<32x256xf32>
    %11 = tpu.matmul %7, %10, %cst {dimension_numbers = #tpu.dot_dimension_numbers<[1], [0], [0], [1], [0, 0, 1, 1], [], []>} : vector<32x128xbf16>, vector<128x256xbf16>, vector<32x256xf32> -> vector<32x256xf32>
    %c0_8 = arith.constant 0 : index
    %c0_9 = arith.constant 0 : index
    %c0_10 = arith.constant 0 : index
    %12 = vector.load %arg6[%c0_8, %c0_9, %c0_10] : memref<1x1x256xf32, #tpu.memory_space<vmem>>, vector<1x1x256xf32>
    %13 = vector.shape_cast %12 : vector<1x1x256xf32> to vector<1x256xf32>
    %14 = vector.broadcast %13 : vector<1x256xf32> to vector<32x256xf32>
    %15 = arith.addf %11, %14 : vector<32x256xf32>
    %16 = vector.extract_strided_slice %15 {offsets = [0, 0], sizes = [32, 128], strides = [1, 1]} : vector<32x256xf32> to vector<32x128xf32>
    %17 = vector.extract_strided_slice %15 {offsets = [0, 128], sizes = [32, 128], strides = [1, 1]} : vector<32x256xf32> to vector<32x128xf32>
    %c0_11 = arith.constant 0 : index
    %c0_12 = arith.constant 0 : index
    %c0_13 = arith.constant 0 : index
    %18 = vector.load %arg7[%c0_11, %c0_12, %c0_13] : memref<1x128x128xbf16, #tpu.memory_space<vmem>>, vector<1x128x128xbf16>
    %19 = vector.shape_cast %18 : vector<1x128x128xbf16> to vector<128x128xbf16>
    %cst_14 = arith.constant dense<0.000000e+00> : vector<32x128xf32>
    %20 = tpu.matmul %8, %19, %cst_14 {dimension_numbers = #tpu.dot_dimension_numbers<[1], [0], [0], [1], [0, 0, 1, 1], [], []>} : vector<32x128xbf16>, vector<128x128xbf16>, vector<32x128xf32> -> vector<32x128xf32>
    %c0_15 = arith.constant 0 : index
    %c0_16 = arith.constant 0 : index
    %c0_17 = arith.constant 0 : index
    %21 = vector.load %arg8[%c0_15, %c0_16, %c0_17] : memref<1x1x128xf32, #tpu.memory_space<vmem>>, vector<1x1x128xf32>
    %22 = vector.shape_cast %21 : vector<1x1x128xf32> to vector<1x128xf32>
    %23 = vector.broadcast %22 : vector<1x128xf32> to vector<32x128xf32>
    %24 = arith.addf %20, %23 : vector<32x128xf32>
    %25 = arith.truncf %24 : vector<32x128xf32> to vector<32x128xbf16>
    %26 = vector.extract_strided_slice %16 {offsets = [0, 0], sizes = [16, 128], strides = [1, 1]} : vector<32x128xf32> to vector<16x128xf32>
    %27 = vector.extract_strided_slice %17 {offsets = [0, 0], sizes = [16, 128], strides = [1, 1]} : vector<32x128xf32> to vector<16x128xf32>
    %28 = vector.extract_strided_slice %25 {offsets = [0, 0], sizes = [16, 128], strides = [1, 1]} : vector<32x128xbf16> to vector<16x128xbf16>
    %c0_18 = arith.constant 0 : index
    %c0_19 = arith.constant 0 : index
    %c0_20 = arith.constant 0 : index
    %29 = vector.load %arg4[%c0_18, %c0_19, %c0_20] : memref<2x1x16xf32, #tpu.memory_space<vmem>>, vector<1x1x16xf32>
    %30 = vector.shape_cast %29 : vector<1x1x16xf32> to vector<1x16xf32>
    %31 = vector.extract_strided_slice %26 {offsets = [0, 0], sizes = [16, 32], strides = [1, 1]} : vector<16x128xf32> to vector<16x32xf32>
    %32 = vector.extract_strided_slice %27 {offsets = [0, 0], sizes = [16, 32], strides = [1, 1]} : vector<16x128xf32> to vector<16x32xf32>
    %33 = vector.extract_strided_slice %28 {offsets = [0, 0], sizes = [16, 32], strides = [1, 1]} : vector<16x128xbf16> to vector<16x32xbf16>
    %cst_21 = arith.constant dense<0.000000e+00> : vector<16x16xf32>
    %34 = tpu.matmul %31, %32, %cst_21 {dimension_numbers = #tpu.dot_dimension_numbers<[1], [1], [0], [0], [0, 0, 1, 0], [], []>} : vector<16x32xf32>, vector<16x32xf32>, vector<16x16xf32> -> vector<16x16xf32>
    %cst_22 = arith.constant 0.176776692 : f32
    %35 = vector.broadcast %cst_22 : f32 to vector<16x16xf32>
    %36 = arith.mulf %34, %35 : vector<16x16xf32>
    %37 = vector.broadcast %30 : vector<1x16xf32> to vector<16x16xf32>
    %38 = arith.addf %36, %37 : vector<16x16xf32>
    %cst_23 = arith.constant dense<0xFF800000> : vector<16xf32>
    %39 = vector.multi_reduction <maximumf>, %38, %cst_23 [1] : vector<16x16xf32> to vector<16xf32>
    %40 = vector.shape_cast %39 : vector<16xf32> to vector<16x1xf32>
    %41 = vector.broadcast %40 : vector<16x1xf32> to vector<16x16xf32>
    %42 = arith.subf %38, %41 : vector<16x16xf32>
    %43 = math.exp %42 : vector<16x16xf32>
    %cst_24 = arith.constant dense<0.000000e+00> : vector<16xf32>
    %44 = vector.multi_reduction <add>, %43, %cst_24 [1] : vector<16x16xf32> to vector<16xf32>
    %45 = vector.shape_cast %44 : vector<16xf32> to vector<16x1xf32>
    %46 = tpu.reciprocal %45 {approx = true} : vector<16x1xf32> -> vector<16x1xf32>
    %47 = vector.broadcast %46 : vector<16x1xf32> to vector<16x16xf32>
    %48 = arith.mulf %43, %47 : vector<16x16xf32>
    %49 = arith.truncf %48 : vector<16x16xf32> to vector<16x16xbf16>
    %cst_25 = arith.constant dense<0.000000e+00> : vector<16x32xf32>
    %50 = tpu.matmul %49, %33, %cst_25 {dimension_numbers = #tpu.dot_dimension_numbers<[1], [0], [0], [1], [0, 0, 1, 1], [], []>} : vector<16x16xbf16>, vector<16x32xbf16>, vector<16x32xf32> -> vector<16x32xf32>
    %51 = vector.extract_strided_slice %26 {offsets = [0, 32], sizes = [16, 32], strides = [1, 1]} : vector<16x128xf32> to vector<16x32xf32>
    %52 = vector.extract_strided_slice %27 {offsets = [0, 32], sizes = [16, 32], strides = [1, 1]} : vector<16x128xf32> to vector<16x32xf32>
    %53 = vector.extract_strided_slice %28 {offsets = [0, 32], sizes = [16, 32], strides = [1, 1]} : vector<16x128xbf16> to vector<16x32xbf16>
    %cst_26 = arith.constant dense<0.000000e+00> : vector<16x16xf32>
    %54 = tpu.matmul %51, %52, %cst_26 {dimension_numbers = #tpu.dot_dimension_numbers<[1], [1], [0], [0], [0, 0, 1, 0], [], []>} : vector<16x32xf32>, vector<16x32xf32>, vector<16x16xf32> -> vector<16x16xf32>
    %cst_27 = arith.constant 0.176776692 : f32
    %55 = vector.broadcast %cst_27 : f32 to vector<16x16xf32>
    %56 = arith.mulf %54, %55 : vector<16x16xf32>
    %57 = vector.broadcast %30 : vector<1x16xf32> to vector<16x16xf32>
    %58 = arith.addf %56, %57 : vector<16x16xf32>
    %cst_28 = arith.constant dense<0xFF800000> : vector<16xf32>
    %59 = vector.multi_reduction <maximumf>, %58, %cst_28 [1] : vector<16x16xf32> to vector<16xf32>
    %60 = vector.shape_cast %59 : vector<16xf32> to vector<16x1xf32>
    %61 = vector.broadcast %60 : vector<16x1xf32> to vector<16x16xf32>
    %62 = arith.subf %58, %61 : vector<16x16xf32>
    %63 = math.exp %62 : vector<16x16xf32>
    %cst_29 = arith.constant dense<0.000000e+00> : vector<16xf32>
    %64 = vector.multi_reduction <add>, %63, %cst_29 [1] : vector<16x16xf32> to vector<16xf32>
    %65 = vector.shape_cast %64 : vector<16xf32> to vector<16x1xf32>
    %66 = tpu.reciprocal %65 {approx = true} : vector<16x1xf32> -> vector<16x1xf32>
    %67 = vector.broadcast %66 : vector<16x1xf32> to vector<16x16xf32>
    %68 = arith.mulf %63, %67 : vector<16x16xf32>
    %69 = arith.truncf %68 : vector<16x16xf32> to vector<16x16xbf16>
    %cst_30 = arith.constant dense<0.000000e+00> : vector<16x32xf32>
    %70 = tpu.matmul %69, %53, %cst_30 {dimension_numbers = #tpu.dot_dimension_numbers<[1], [0], [0], [1], [0, 0, 1, 1], [], []>} : vector<16x16xbf16>, vector<16x32xbf16>, vector<16x32xf32> -> vector<16x32xf32>
    %71 = vector.extract_strided_slice %26 {offsets = [0, 64], sizes = [16, 32], strides = [1, 1]} : vector<16x128xf32> to vector<16x32xf32>
    %72 = vector.extract_strided_slice %27 {offsets = [0, 64], sizes = [16, 32], strides = [1, 1]} : vector<16x128xf32> to vector<16x32xf32>
    %73 = vector.extract_strided_slice %28 {offsets = [0, 64], sizes = [16, 32], strides = [1, 1]} : vector<16x128xbf16> to vector<16x32xbf16>
    %cst_31 = arith.constant dense<0.000000e+00> : vector<16x16xf32>
    %74 = tpu.matmul %71, %72, %cst_31 {dimension_numbers = #tpu.dot_dimension_numbers<[1], [1], [0], [0], [0, 0, 1, 0], [], []>} : vector<16x32xf32>, vector<16x32xf32>, vector<16x16xf32> -> vector<16x16xf32>
    %cst_32 = arith.constant 0.176776692 : f32
    %75 = vector.broadcast %cst_32 : f32 to vector<16x16xf32>
    %76 = arith.mulf %74, %75 : vector<16x16xf32>
    %77 = vector.broadcast %30 : vector<1x16xf32> to vector<16x16xf32>
    %78 = arith.addf %76, %77 : vector<16x16xf32>
    %cst_33 = arith.constant dense<0xFF800000> : vector<16xf32>
    %79 = vector.multi_reduction <maximumf>, %78, %cst_33 [1] : vector<16x16xf32> to vector<16xf32>
    %80 = vector.shape_cast %79 : vector<16xf32> to vector<16x1xf32>
    %81 = vector.broadcast %80 : vector<16x1xf32> to vector<16x16xf32>
    %82 = arith.subf %78, %81 : vector<16x16xf32>
    %83 = math.exp %82 : vector<16x16xf32>
    %cst_34 = arith.constant dense<0.000000e+00> : vector<16xf32>
    %84 = vector.multi_reduction <add>, %83, %cst_34 [1] : vector<16x16xf32> to vector<16xf32>
    %85 = vector.shape_cast %84 : vector<16xf32> to vector<16x1xf32>
    %86 = tpu.reciprocal %85 {approx = true} : vector<16x1xf32> -> vector<16x1xf32>
    %87 = vector.broadcast %86 : vector<16x1xf32> to vector<16x16xf32>
    %88 = arith.mulf %83, %87 : vector<16x16xf32>
    %89 = arith.truncf %88 : vector<16x16xf32> to vector<16x16xbf16>
    %cst_35 = arith.constant dense<0.000000e+00> : vector<16x32xf32>
    %90 = tpu.matmul %89, %73, %cst_35 {dimension_numbers = #tpu.dot_dimension_numbers<[1], [0], [0], [1], [0, 0, 1, 1], [], []>} : vector<16x16xbf16>, vector<16x32xbf16>, vector<16x32xf32> -> vector<16x32xf32>
    %91 = vector.extract_strided_slice %26 {offsets = [0, 96], sizes = [16, 32], strides = [1, 1]} : vector<16x128xf32> to vector<16x32xf32>
    %92 = vector.extract_strided_slice %27 {offsets = [0, 96], sizes = [16, 32], strides = [1, 1]} : vector<16x128xf32> to vector<16x32xf32>
    %93 = vector.extract_strided_slice %28 {offsets = [0, 96], sizes = [16, 32], strides = [1, 1]} : vector<16x128xbf16> to vector<16x32xbf16>
    %cst_36 = arith.constant dense<0.000000e+00> : vector<16x16xf32>
    %94 = tpu.matmul %91, %92, %cst_36 {dimension_numbers = #tpu.dot_dimension_numbers<[1], [1], [0], [0], [0, 0, 1, 0], [], []>} : vector<16x32xf32>, vector<16x32xf32>, vector<16x16xf32> -> vector<16x16xf32>
    %cst_37 = arith.constant 0.176776692 : f32
    %95 = vector.broadcast %cst_37 : f32 to vector<16x16xf32>
    %96 = arith.mulf %94, %95 : vector<16x16xf32>
    %97 = vector.broadcast %30 : vector<1x16xf32> to vector<16x16xf32>
    %98 = arith.addf %96, %97 : vector<16x16xf32>
    %cst_38 = arith.constant dense<0xFF800000> : vector<16xf32>
    %99 = vector.multi_reduction <maximumf>, %98, %cst_38 [1] : vector<16x16xf32> to vector<16xf32>
    %100 = vector.shape_cast %99 : vector<16xf32> to vector<16x1xf32>
    %101 = vector.broadcast %100 : vector<16x1xf32> to vector<16x16xf32>
    %102 = arith.subf %98, %101 : vector<16x16xf32>
    %103 = math.exp %102 : vector<16x16xf32>
    %cst_39 = arith.constant dense<0.000000e+00> : vector<16xf32>
    %104 = vector.multi_reduction <add>, %103, %cst_39 [1] : vector<16x16xf32> to vector<16xf32>
    %105 = vector.shape_cast %104 : vector<16xf32> to vector<16x1xf32>
    %106 = tpu.reciprocal %105 {approx = true} : vector<16x1xf32> -> vector<16x1xf32>
    %107 = vector.broadcast %106 : vector<16x1xf32> to vector<16x16xf32>
    %108 = arith.mulf %103, %107 : vector<16x16xf32>
    %109 = arith.truncf %108 : vector<16x16xf32> to vector<16x16xbf16>
    %cst_40 = arith.constant dense<0.000000e+00> : vector<16x32xf32>
    %110 = tpu.matmul %109, %93, %cst_40 {dimension_numbers = #tpu.dot_dimension_numbers<[1], [0], [0], [1], [0, 0, 1, 1], [], []>} : vector<16x16xbf16>, vector<16x32xbf16>, vector<16x32xf32> -> vector<16x32xf32>
    %111 = tpu.concatenate %50, %70, %90, %110 in 1 : vector<16x32xf32>, vector<16x32xf32>, vector<16x32xf32>, vector<16x32xf32> -> vector<16x128xf32>
    %112 = vector.extract_strided_slice %16 {offsets = [16, 0], sizes = [16, 128], strides = [1, 1]} : vector<32x128xf32> to vector<16x128xf32>
    %113 = vector.extract_strided_slice %17 {offsets = [16, 0], sizes = [16, 128], strides = [1, 1]} : vector<32x128xf32> to vector<16x128xf32>
    %114 = vector.extract_strided_slice %25 {offsets = [16, 0], sizes = [16, 128], strides = [1, 1]} : vector<32x128xbf16> to vector<16x128xbf16>
    %c1 = arith.constant 1 : index
    %c0_41 = arith.constant 0 : index
    %c0_42 = arith.constant 0 : index
    %115 = vector.load %arg4[%c1, %c0_41, %c0_42] : memref<2x1x16xf32, #tpu.memory_space<vmem>>, vector<1x1x16xf32>
    %116 = vector.shape_cast %115 : vector<1x1x16xf32> to vector<1x16xf32>
    %117 = vector.extract_strided_slice %112 {offsets = [0, 0], sizes = [16, 32], strides = [1, 1]} : vector<16x128xf32> to vector<16x32xf32>
    %118 = vector.extract_strided_slice %113 {offsets = [0, 0], sizes = [16, 32], strides = [1, 1]} : vector<16x128xf32> to vector<16x32xf32>
    %119 = vector.extract_strided_slice %114 {offsets = [0, 0], sizes = [16, 32], strides = [1, 1]} : vector<16x128xbf16> to vector<16x32xbf16>
    %cst_43 = arith.constant dense<0.000000e+00> : vector<16x16xf32>
    %120 = tpu.matmul %117, %118, %cst_43 {dimension_numbers = #tpu.dot_dimension_numbers<[1], [1], [0], [0], [0, 0, 1, 0], [], []>} : vector<16x32xf32>, vector<16x32xf32>, vector<16x16xf32> -> vector<16x16xf32>
    %cst_44 = arith.constant 0.176776692 : f32
    %121 = vector.broadcast %cst_44 : f32 to vector<16x16xf32>
    %122 = arith.mulf %120, %121 : vector<16x16xf32>
    %123 = vector.broadcast %116 : vector<1x16xf32> to vector<16x16xf32>
    %124 = arith.addf %122, %123 : vector<16x16xf32>
    %cst_45 = arith.constant dense<0xFF800000> : vector<16xf32>
    %125 = vector.multi_reduction <maximumf>, %124, %cst_45 [1] : vector<16x16xf32> to vector<16xf32>
    %126 = vector.shape_cast %125 : vector<16xf32> to vector<16x1xf32>
    %127 = vector.broadcast %126 : vector<16x1xf32> to vector<16x16xf32>
    %128 = arith.subf %124, %127 : vector<16x16xf32>
    %129 = math.exp %128 : vector<16x16xf32>
    %cst_46 = arith.constant dense<0.000000e+00> : vector<16xf32>
    %130 = vector.multi_reduction <add>, %129, %cst_46 [1] : vector<16x16xf32> to vector<16xf32>
    %131 = vector.shape_cast %130 : vector<16xf32> to vector<16x1xf32>
    %132 = tpu.reciprocal %131 {approx = true} : vector<16x1xf32> -> vector<16x1xf32>
    %133 = vector.broadcast %132 : vector<16x1xf32> to vector<16x16xf32>
    %134 = arith.mulf %129, %133 : vector<16x16xf32>
    %135 = arith.truncf %134 : vector<16x16xf32> to vector<16x16xbf16>
    %cst_47 = arith.constant dense<0.000000e+00> : vector<16x32xf32>
    %136 = tpu.matmul %135, %119, %cst_47 {dimension_numbers = #tpu.dot_dimension_numbers<[1], [0], [0], [1], [0, 0, 1, 1], [], []>} : vector<16x16xbf16>, vector<16x32xbf16>, vector<16x32xf32> -> vector<16x32xf32>
    %137 = vector.extract_strided_slice %112 {offsets = [0, 32], sizes = [16, 32], strides = [1, 1]} : vector<16x128xf32> to vector<16x32xf32>
    %138 = vector.extract_strided_slice %113 {offsets = [0, 32], sizes = [16, 32], strides = [1, 1]} : vector<16x128xf32> to vector<16x32xf32>
    %139 = vector.extract_strided_slice %114 {offsets = [0, 32], sizes = [16, 32], strides = [1, 1]} : vector<16x128xbf16> to vector<16x32xbf16>
    %cst_48 = arith.constant dense<0.000000e+00> : vector<16x16xf32>
    %140 = tpu.matmul %137, %138, %cst_48 {dimension_numbers = #tpu.dot_dimension_numbers<[1], [1], [0], [0], [0, 0, 1, 0], [], []>} : vector<16x32xf32>, vector<16x32xf32>, vector<16x16xf32> -> vector<16x16xf32>
    %cst_49 = arith.constant 0.176776692 : f32
    %141 = vector.broadcast %cst_49 : f32 to vector<16x16xf32>
    %142 = arith.mulf %140, %141 : vector<16x16xf32>
    %143 = vector.broadcast %116 : vector<1x16xf32> to vector<16x16xf32>
    %144 = arith.addf %142, %143 : vector<16x16xf32>
    %cst_50 = arith.constant dense<0xFF800000> : vector<16xf32>
    %145 = vector.multi_reduction <maximumf>, %144, %cst_50 [1] : vector<16x16xf32> to vector<16xf32>
    %146 = vector.shape_cast %145 : vector<16xf32> to vector<16x1xf32>
    %147 = vector.broadcast %146 : vector<16x1xf32> to vector<16x16xf32>
    %148 = arith.subf %144, %147 : vector<16x16xf32>
    %149 = math.exp %148 : vector<16x16xf32>
    %cst_51 = arith.constant dense<0.000000e+00> : vector<16xf32>
    %150 = vector.multi_reduction <add>, %149, %cst_51 [1] : vector<16x16xf32> to vector<16xf32>
    %151 = vector.shape_cast %150 : vector<16xf32> to vector<16x1xf32>
    %152 = tpu.reciprocal %151 {approx = true} : vector<16x1xf32> -> vector<16x1xf32>
    %153 = vector.broadcast %152 : vector<16x1xf32> to vector<16x16xf32>
    %154 = arith.mulf %149, %153 : vector<16x16xf32>
    %155 = arith.truncf %154 : vector<16x16xf32> to vector<16x16xbf16>
    %cst_52 = arith.constant dense<0.000000e+00> : vector<16x32xf32>
    %156 = tpu.matmul %155, %139, %cst_52 {dimension_numbers = #tpu.dot_dimension_numbers<[1], [0], [0], [1], [0, 0, 1, 1], [], []>} : vector<16x16xbf16>, vector<16x32xbf16>, vector<16x32xf32> -> vector<16x32xf32>
    %157 = vector.extract_strided_slice %112 {offsets = [0, 64], sizes = [16, 32], strides = [1, 1]} : vector<16x128xf32> to vector<16x32xf32>
    %158 = vector.extract_strided_slice %113 {offsets = [0, 64], sizes = [16, 32], strides = [1, 1]} : vector<16x128xf32> to vector<16x32xf32>
    %159 = vector.extract_strided_slice %114 {offsets = [0, 64], sizes = [16, 32], strides = [1, 1]} : vector<16x128xbf16> to vector<16x32xbf16>
    %cst_53 = arith.constant dense<0.000000e+00> : vector<16x16xf32>
    %160 = tpu.matmul %157, %158, %cst_53 {dimension_numbers = #tpu.dot_dimension_numbers<[1], [1], [0], [0], [0, 0, 1, 0], [], []>} : vector<16x32xf32>, vector<16x32xf32>, vector<16x16xf32> -> vector<16x16xf32>
    %cst_54 = arith.constant 0.176776692 : f32
    %161 = vector.broadcast %cst_54 : f32 to vector<16x16xf32>
    %162 = arith.mulf %160, %161 : vector<16x16xf32>
    %163 = vector.broadcast %116 : vector<1x16xf32> to vector<16x16xf32>
    %164 = arith.addf %162, %163 : vector<16x16xf32>
    %cst_55 = arith.constant dense<0xFF800000> : vector<16xf32>
    %165 = vector.multi_reduction <maximumf>, %164, %cst_55 [1] : vector<16x16xf32> to vector<16xf32>
    %166 = vector.shape_cast %165 : vector<16xf32> to vector<16x1xf32>
    %167 = vector.broadcast %166 : vector<16x1xf32> to vector<16x16xf32>
    %168 = arith.subf %164, %167 : vector<16x16xf32>
    %169 = math.exp %168 : vector<16x16xf32>
    %cst_56 = arith.constant dense<0.000000e+00> : vector<16xf32>
    %170 = vector.multi_reduction <add>, %169, %cst_56 [1] : vector<16x16xf32> to vector<16xf32>
    %171 = vector.shape_cast %170 : vector<16xf32> to vector<16x1xf32>
    %172 = tpu.reciprocal %171 {approx = true} : vector<16x1xf32> -> vector<16x1xf32>
    %173 = vector.broadcast %172 : vector<16x1xf32> to vector<16x16xf32>
    %174 = arith.mulf %169, %173 : vector<16x16xf32>
    %175 = arith.truncf %174 : vector<16x16xf32> to vector<16x16xbf16>
    %cst_57 = arith.constant dense<0.000000e+00> : vector<16x32xf32>
    %176 = tpu.matmul %175, %159, %cst_57 {dimension_numbers = #tpu.dot_dimension_numbers<[1], [0], [0], [1], [0, 0, 1, 1], [], []>} : vector<16x16xbf16>, vector<16x32xbf16>, vector<16x32xf32> -> vector<16x32xf32>
    %177 = vector.extract_strided_slice %112 {offsets = [0, 96], sizes = [16, 32], strides = [1, 1]} : vector<16x128xf32> to vector<16x32xf32>
    %178 = vector.extract_strided_slice %113 {offsets = [0, 96], sizes = [16, 32], strides = [1, 1]} : vector<16x128xf32> to vector<16x32xf32>
    %179 = vector.extract_strided_slice %114 {offsets = [0, 96], sizes = [16, 32], strides = [1, 1]} : vector<16x128xbf16> to vector<16x32xbf16>
    %cst_58 = arith.constant dense<0.000000e+00> : vector<16x16xf32>
    %180 = tpu.matmul %177, %178, %cst_58 {dimension_numbers = #tpu.dot_dimension_numbers<[1], [1], [0], [0], [0, 0, 1, 0], [], []>} : vector<16x32xf32>, vector<16x32xf32>, vector<16x16xf32> -> vector<16x16xf32>
    %cst_59 = arith.constant 0.176776692 : f32
    %181 = vector.broadcast %cst_59 : f32 to vector<16x16xf32>
    %182 = arith.mulf %180, %181 : vector<16x16xf32>
    %183 = vector.broadcast %116 : vector<1x16xf32> to vector<16x16xf32>
    %184 = arith.addf %182, %183 : vector<16x16xf32>
    %cst_60 = arith.constant dense<0xFF800000> : vector<16xf32>
    %185 = vector.multi_reduction <maximumf>, %184, %cst_60 [1] : vector<16x16xf32> to vector<16xf32>
    %186 = vector.shape_cast %185 : vector<16xf32> to vector<16x1xf32>
    %187 = vector.broadcast %186 : vector<16x1xf32> to vector<16x16xf32>
    %188 = arith.subf %184, %187 : vector<16x16xf32>
    %189 = math.exp %188 : vector<16x16xf32>
    %cst_61 = arith.constant dense<0.000000e+00> : vector<16xf32>
    %190 = vector.multi_reduction <add>, %189, %cst_61 [1] : vector<16x16xf32> to vector<16xf32>
    %191 = vector.shape_cast %190 : vector<16xf32> to vector<16x1xf32>
    %192 = tpu.reciprocal %191 {approx = true} : vector<16x1xf32> -> vector<16x1xf32>
    %193 = vector.broadcast %192 : vector<16x1xf32> to vector<16x16xf32>
    %194 = arith.mulf %189, %193 : vector<16x16xf32>
    %195 = arith.truncf %194 : vector<16x16xf32> to vector<16x16xbf16>
    %cst_62 = arith.constant dense<0.000000e+00> : vector<16x32xf32>
    %196 = tpu.matmul %195, %179, %cst_62 {dimension_numbers = #tpu.dot_dimension_numbers<[1], [0], [0], [1], [0, 0, 1, 1], [], []>} : vector<16x16xbf16>, vector<16x32xbf16>, vector<16x32xf32> -> vector<16x32xf32>
    %197 = tpu.concatenate %136, %156, %176, %196 in 1 : vector<16x32xf32>, vector<16x32xf32>, vector<16x32xf32>, vector<16x32xf32> -> vector<16x128xf32>
    %198 = tpu.concatenate %111, %197 in 0 : vector<16x128xf32>, vector<16x128xf32> -> vector<32x128xf32>
    %199 = arith.truncf %198 : vector<32x128xf32> to vector<32x128xbf16>
    %c0_63 = arith.constant 0 : index
    %c0_64 = arith.constant 0 : index
    %c0_65 = arith.constant 0 : index
    %200 = vector.load %arg9[%c0_63, %c0_64, %c0_65] : memref<1x128x128xbf16, #tpu.memory_space<vmem>>, vector<1x128x128xbf16>
    %201 = vector.shape_cast %200 : vector<1x128x128xbf16> to vector<128x128xbf16>
    %cst_66 = arith.constant dense<0.000000e+00> : vector<32x128xf32>
    %202 = tpu.matmul %199, %201, %cst_66 {dimension_numbers = #tpu.dot_dimension_numbers<[1], [0], [0], [1], [0, 0, 1, 1], [], []>} : vector<32x128xbf16>, vector<128x128xbf16>, vector<32x128xf32> -> vector<32x128xf32>
    %c0_67 = arith.constant 0 : index
    %c0_68 = arith.constant 0 : index
    %c0_69 = arith.constant 0 : index
    %203 = vector.load %arg10[%c0_67, %c0_68, %c0_69] : memref<1x1x128xf32, #tpu.memory_space<vmem>>, vector<1x1x128xf32>
    %204 = vector.shape_cast %203 : vector<1x1x128xf32> to vector<1x128xf32>
    %205 = vector.broadcast %204 : vector<1x128xf32> to vector<32x128xf32>
    %206 = arith.addf %202, %205 : vector<32x128xf32>
    %207 = arith.addf %3, %206 : vector<32x128xf32>
    %c0_70 = arith.constant 0 : index
    %c0_71 = arith.constant 0 : index
    %c0_72 = arith.constant 0 : index
    %208 = vector.load %arg11[%c0_70, %c0_71, %c0_72] : memref<1x1x128xf32, #tpu.memory_space<vmem>>, vector<1x1x128xf32>
    %209 = vector.shape_cast %208 : vector<1x1x128xf32> to vector<1x128xf32>
    %c0_73 = arith.constant 0 : index
    %c0_74 = arith.constant 0 : index
    %c0_75 = arith.constant 0 : index
    %210 = vector.load %arg12[%c0_73, %c0_74, %c0_75] : memref<1x1x128xf32, #tpu.memory_space<vmem>>, vector<1x1x128xf32>
    %211 = vector.shape_cast %210 : vector<1x1x128xf32> to vector<1x128xf32>
    %cst_76 = arith.constant dense<0.000000e+00> : vector<32xf32>
    %212 = vector.multi_reduction <add>, %207, %cst_76 [1] : vector<32x128xf32> to vector<32xf32>
    %213 = vector.shape_cast %212 : vector<32xf32> to vector<32x1xf32>
    %cst_77 = arith.constant 1.280000e+02 : f32
    %214 = vector.broadcast %cst_77 : f32 to vector<32x1xf32>
    %215 = arith.divf %213, %214 : vector<32x1xf32>
    %216 = vector.broadcast %215 : vector<32x1xf32> to vector<32x128xf32>
    %217 = arith.subf %207, %216 : vector<32x128xf32>
    %218 = arith.mulf %217, %217 : vector<32x128xf32>
    %cst_78 = arith.constant dense<0.000000e+00> : vector<32xf32>
    %219 = vector.multi_reduction <add>, %218, %cst_78 [1] : vector<32x128xf32> to vector<32xf32>
    %220 = vector.shape_cast %219 : vector<32xf32> to vector<32x1xf32>
    %cst_79 = arith.constant 1.280000e+02 : f32
    %221 = vector.broadcast %cst_79 : f32 to vector<32x1xf32>
    %222 = arith.divf %220, %221 : vector<32x1xf32>
    %cst_80 = arith.constant 9.99999974E-6 : f32
    %223 = vector.broadcast %cst_80 : f32 to vector<32x1xf32>
    %224 = arith.addf %222, %223 : vector<32x1xf32>
    %225 = math.rsqrt %224 : vector<32x1xf32>
    %226 = vector.broadcast %225 : vector<32x1xf32> to vector<32x128xf32>
    %227 = arith.mulf %217, %226 : vector<32x128xf32>
    %228 = vector.broadcast %209 : vector<1x128xf32> to vector<32x128xf32>
    %229 = arith.mulf %227, %228 : vector<32x128xf32>
    %230 = vector.broadcast %211 : vector<1x128xf32> to vector<32x128xf32>
    %231 = arith.addf %229, %230 : vector<32x128xf32>
    %232 = arith.truncf %231 : vector<32x128xf32> to vector<32x128xbf16>
    %c0_81 = arith.constant 0 : index
    %c0_82 = arith.constant 0 : index
    %c0_83 = arith.constant 0 : index
    %233 = vector.load %arg13[%c0_81, %c0_82, %c0_83] : memref<1x128x256xbf16, #tpu.memory_space<vmem>>, vector<1x128x256xbf16>
    %234 = vector.shape_cast %233 : vector<1x128x256xbf16> to vector<128x256xbf16>
    %cst_84 = arith.constant dense<0.000000e+00> : vector<32x256xf32>
    %235 = tpu.matmul %232, %234, %cst_84 {dimension_numbers = #tpu.dot_dimension_numbers<[1], [0], [0], [1], [0, 0, 1, 1], [], []>} : vector<32x128xbf16>, vector<128x256xbf16>, vector<32x256xf32> -> vector<32x256xf32>
    %c0_85 = arith.constant 0 : index
    %c0_86 = arith.constant 0 : index
    %c0_87 = arith.constant 0 : index
    %236 = vector.load %arg14[%c0_85, %c0_86, %c0_87] : memref<1x1x256xf32, #tpu.memory_space<vmem>>, vector<1x1x256xf32>
    %237 = vector.shape_cast %236 : vector<1x1x256xf32> to vector<1x256xf32>
    %238 = vector.broadcast %237 : vector<1x256xf32> to vector<32x256xf32>
    %239 = arith.addf %235, %238 : vector<32x256xf32>
    %cst_88 = arith.constant 0.000000e+00 : f32
    %240 = vector.broadcast %cst_88 : f32 to vector<32x256xf32>
    %241 = arith.maximumf %239, %240 : vector<32x256xf32>
    %242 = arith.truncf %241 : vector<32x256xf32> to vector<32x256xbf16>
    %c0_89 = arith.constant 0 : index
    %c0_90 = arith.constant 0 : index
    %c0_91 = arith.constant 0 : index
    %243 = vector.load %arg15[%c0_89, %c0_90, %c0_91] : memref<1x256x128xbf16, #tpu.memory_space<vmem>>, vector<1x256x128xbf16>
    %244 = vector.shape_cast %243 : vector<1x256x128xbf16> to vector<256x128xbf16>
    %cst_92 = arith.constant dense<0.000000e+00> : vector<32x128xf32>
    %245 = tpu.matmul %242, %244, %cst_92 {dimension_numbers = #tpu.dot_dimension_numbers<[1], [0], [0], [1], [0, 0, 1, 1], [], []>} : vector<32x256xbf16>, vector<256x128xbf16>, vector<32x128xf32> -> vector<32x128xf32>
    %c0_93 = arith.constant 0 : index
    %c0_94 = arith.constant 0 : index
    %c0_95 = arith.constant 0 : index
    %246 = vector.load %arg16[%c0_93, %c0_94, %c0_95] : memref<1x1x128xf32, #tpu.memory_space<vmem>>, vector<1x1x128xf32>
    %247 = vector.shape_cast %246 : vector<1x1x128xf32> to vector<1x128xf32>
    %248 = vector.broadcast %247 : vector<1x128xf32> to vector<32x128xf32>
    %249 = arith.addf %245, %248 : vector<32x128xf32>
    %250 = arith.addf %231, %249 : vector<32x128xf32>
    %c0_96 = arith.constant 0 : index
    %c0_97 = arith.constant 0 : index
    %c0_98 = arith.constant 0 : index
    %251 = vector.load %arg17[%c0_96, %c0_97, %c0_98] : memref<1x1x128xf32, #tpu.memory_space<vmem>>, vector<1x1x128xf32>
    %252 = vector.shape_cast %251 : vector<1x1x128xf32> to vector<1x128xf32>
    %c0_99 = arith.constant 0 : index
    %c0_100 = arith.constant 0 : index
    %c0_101 = arith.constant 0 : index
    %253 = vector.load %arg18[%c0_99, %c0_100, %c0_101] : memref<1x1x128xf32, #tpu.memory_space<vmem>>, vector<1x1x128xf32>
    %254 = vector.shape_cast %253 : vector<1x1x128xf32> to vector<1x128xf32>
    %cst_102 = arith.constant dense<0.000000e+00> : vector<32xf32>
    %255 = vector.multi_reduction <add>, %250, %cst_102 [1] : vector<32x128xf32> to vector<32xf32>
    %256 = vector.shape_cast %255 : vector<32xf32> to vector<32x1xf32>
    %cst_103 = arith.constant 1.280000e+02 : f32
    %257 = vector.broadcast %cst_103 : f32 to vector<32x1xf32>
    %258 = arith.divf %256, %257 : vector<32x1xf32>
    %259 = vector.broadcast %258 : vector<32x1xf32> to vector<32x128xf32>
    %260 = arith.subf %250, %259 : vector<32x128xf32>
    %261 = arith.mulf %260, %260 : vector<32x128xf32>
    %cst_104 = arith.constant dense<0.000000e+00> : vector<32xf32>
    %262 = vector.multi_reduction <add>, %261, %cst_104 [1] : vector<32x128xf32> to vector<32xf32>
    %263 = vector.shape_cast %262 : vector<32xf32> to vector<32x1xf32>
    %cst_105 = arith.constant 1.280000e+02 : f32
    %264 = vector.broadcast %cst_105 : f32 to vector<32x1xf32>
    %265 = arith.divf %263, %264 : vector<32x1xf32>
    %cst_106 = arith.constant 9.99999974E-6 : f32
    %266 = vector.broadcast %cst_106 : f32 to vector<32x1xf32>
    %267 = arith.addf %265, %266 : vector<32x1xf32>
    %268 = math.rsqrt %267 : vector<32x1xf32>
    %269 = vector.broadcast %268 : vector<32x1xf32> to vector<32x128xf32>
    %270 = arith.mulf %260, %269 : vector<32x128xf32>
    %271 = vector.broadcast %252 : vector<1x128xf32> to vector<32x128xf32>
    %272 = arith.mulf %270, %271 : vector<32x128xf32>
    %273 = vector.broadcast %254 : vector<1x128xf32> to vector<32x128xf32>
    %274 = arith.addf %272, %273 : vector<32x128xf32>
    %c0_107 = arith.constant 0 : index
    %c0_108 = arith.constant 0 : index
    %275 = vector.load %arg22[%c0_107, %c0_108] : memref<32x128xf32, #tpu.memory_space<vmem>>, vector<32x128xf32>
    tpu.vector_store %arg22[%c0_107, %c0_108], %274 {strides = array<i32>} : memref<32x128xf32, #tpu.memory_space<vmem>>, vector<32x128xf32>,
    %c1_i32 = arith.constant 1 : i32
    %276 = arith.cmpi eq, %arg1, %c1_i32 : i32
    %277 = arith.extui %276 : i1 to i32
    %c0_i32_109 = arith.constant 0 : i32
    %278 = arith.cmpi ne, %277, %c0_i32_109 : i32
    scf.if %278 {
      %c0_110 = arith.constant 0 : index
      %c0_111 = arith.constant 0 : index
      %279 = vector.load %arg19[%c0_110, %c0_111] : memref<1x128xf32, #tpu.memory_space<vmem>>, vector<1x128xf32>
      %c0_112 = arith.constant 0 : index
      %c0_113 = arith.constant 0 : index
      %280 = vector.load %arg20[%c0_112, %c0_113] : memref<1x128xf32, #tpu.memory_space<vmem>>, vector<1x128xf32>
      %cst_114 = arith.constant dense<0.000000e+00> : vector<32xf32>
      %281 = vector.multi_reduction <add>, %274, %cst_114 [1] : vector<32x128xf32> to vector<32xf32>
      %282 = vector.shape_cast %281 : vector<32xf32> to vector<32x1xf32>
      %cst_115 = arith.constant 1.280000e+02 : f32
      %283 = vector.broadcast %cst_115 : f32 to vector<32x1xf32>
      %284 = arith.divf %282, %283 : vector<32x1xf32>
      %285 = vector.broadcast %284 : vector<32x1xf32> to vector<32x128xf32>
      %286 = arith.subf %274, %285 : vector<32x128xf32>
      %287 = arith.mulf %286, %286 : vector<32x128xf32>
      %cst_116 = arith.constant dense<0.000000e+00> : vector<32xf32>
      %288 = vector.multi_reduction <add>, %287, %cst_116 [1] : vector<32x128xf32> to vector<32xf32>
      %289 = vector.shape_cast %288 : vector<32xf32> to vector<32x1xf32>
      %cst_117 = arith.constant 1.280000e+02 : f32
      %290 = vector.broadcast %cst_117 : f32 to vector<32x1xf32>
      %291 = arith.divf %289, %290 : vector<32x1xf32>
      %cst_118 = arith.constant 9.99999974E-6 : f32
      %292 = vector.broadcast %cst_118 : f32 to vector<32x1xf32>
      %293 = arith.addf %291, %292 : vector<32x1xf32>
      %294 = math.rsqrt %293 : vector<32x1xf32>
      %295 = vector.broadcast %294 : vector<32x1xf32> to vector<32x128xf32>
      %296 = arith.mulf %286, %295 : vector<32x128xf32>
      %297 = vector.broadcast %279 : vector<1x128xf32> to vector<32x128xf32>
      %298 = arith.mulf %296, %297 : vector<32x128xf32>
      %299 = vector.broadcast %280 : vector<1x128xf32> to vector<32x128xf32>
      %300 = arith.addf %298, %299 : vector<32x128xf32>
      %301 = vector.shape_cast %300 : vector<32x128xf32> to vector<2x16x128xf32>
      %c0_119 = arith.constant 0 : index
      %c0_120 = arith.constant 0 : index
      %c0_121 = arith.constant 0 : index
      %302 = vector.load %arg21[%c0_119, %c0_120, %c0_121] : memref<2x16x128xf32, #tpu.memory_space<vmem>>, vector<2x16x128xf32>
      tpu.vector_store %arg21[%c0_119, %c0_120, %c0_121], %301 {strides = array<i32>} : memref<2x16x128xf32, #tpu.memory_space<vmem>>, vector<2x16x128xf32>,
    } else {
    }
    return
  }
  func.func @transform_0(%arg0: i32, %arg1: i32) -> (i32, i32, i32) {
    %c0_i32 = arith.constant 0 : i32
    %c0_i32_0 = arith.constant 0 : i32
    %c0_i32_1 = arith.constant 0 : i32
    return %arg0, %c0_i32, %c0_i32_0 : i32, i32, i32
  }
  func.func @transform_1(%arg0: i32, %arg1: i32) -> (i32, i32, i32) {
    %c0_i32 = arith.constant 0 : i32
    %c0_i32_0 = arith.constant 0 : i32
    %c0_i32_1 = arith.constant 0 : i32
    return %arg0, %c0_i32, %c0_i32_0 : i32, i32, i32
  }
  func.func @transform_2(%arg0: i32, %arg1: i32) -> (i32, i32, i32) {
    %c0_i32 = arith.constant 0 : i32
    %c0_i32_0 = arith.constant 0 : i32
    %c0_i32_1 = arith.constant 0 : i32
    return %arg0, %c0_i32, %c0_i32_0 : i32, i32, i32
  }
  func.func @transform_3(%arg0: i32, %arg1: i32) -> (i32, i32, i32) {
    %c0_i32 = arith.constant 0 : i32
    %c0_i32_0 = arith.constant 0 : i32
    %c0_i32_1 = arith.constant 0 : i32
    return %arg1, %c0_i32, %c0_i32_0 : i32, i32, i32
  }
  func.func @transform_4(%arg0: i32, %arg1: i32) -> (i32, i32, i32) {
    %c0_i32 = arith.constant 0 : i32
    %c0_i32_0 = arith.constant 0 : i32
    %c0_i32_1 = arith.constant 0 : i32
    return %arg1, %c0_i32, %c0_i32_0 : i32, i32, i32
  }
  func.func @transform_5(%arg0: i32, %arg1: i32) -> (i32, i32, i32) {
    %c0_i32 = arith.constant 0 : i32
    %c0_i32_0 = arith.constant 0 : i32
    %c0_i32_1 = arith.constant 0 : i32
    return %arg1, %c0_i32, %c0_i32_0 : i32, i32, i32
  }
  func.func @transform_6(%arg0: i32, %arg1: i32) -> (i32, i32, i32) {
    %c0_i32 = arith.constant 0 : i32
    %c0_i32_0 = arith.constant 0 : i32
    %c0_i32_1 = arith.constant 0 : i32
    return %arg1, %c0_i32, %c0_i32_0 : i32, i32, i32
  }
  func.func @transform_7(%arg0: i32, %arg1: i32) -> (i32, i32, i32) {
    %c0_i32 = arith.constant 0 : i32
    %c0_i32_0 = arith.constant 0 : i32
    %c0_i32_1 = arith.constant 0 : i32
    return %arg1, %c0_i32, %c0_i32_0 : i32, i32, i32
  }
  func.func @transform_8(%arg0: i32, %arg1: i32) -> (i32, i32, i32) {
    %c0_i32 = arith.constant 0 : i32
    %c0_i32_0 = arith.constant 0 : i32
    %c0_i32_1 = arith.constant 0 : i32
    return %arg1, %c0_i32, %c0_i32_0 : i32, i32, i32
  }
  func.func @transform_9(%arg0: i32, %arg1: i32) -> (i32, i32, i32) {
    %c0_i32 = arith.constant 0 : i32
    %c0_i32_0 = arith.constant 0 : i32
    %c0_i32_1 = arith.constant 0 : i32
    return %arg1, %c0_i32, %c0_i32_0 : i32, i32, i32
  }
  func.func @transform_10(%arg0: i32, %arg1: i32) -> (i32, i32, i32) {
    %c0_i32 = arith.constant 0 : i32
    %c0_i32_0 = arith.constant 0 : i32
    %c0_i32_1 = arith.constant 0 : i32
    return %arg1, %c0_i32, %c0_i32_0 : i32, i32, i32
  }
  func.func @transform_11(%arg0: i32, %arg1: i32) -> (i32, i32, i32) {
    %c0_i32 = arith.constant 0 : i32
    %c0_i32_0 = arith.constant 0 : i32
    %c0_i32_1 = arith.constant 0 : i32
    return %arg1, %c0_i32, %c0_i32_0 : i32, i32, i32
  }
  func.func @transform_12(%arg0: i32, %arg1: i32) -> (i32, i32, i32) {
    %c0_i32 = arith.constant 0 : i32
    %c0_i32_0 = arith.constant 0 : i32
    %c0_i32_1 = arith.constant 0 : i32
    return %arg1, %c0_i32, %c0_i32_0 : i32, i32, i32
  }
  func.func @transform_13(%arg0: i32, %arg1: i32) -> (i32, i32, i32) {
    %c0_i32 = arith.constant 0 : i32
    %c0_i32_0 = arith.constant 0 : i32
    %c0_i32_1 = arith.constant 0 : i32
    return %arg1, %c0_i32, %c0_i32_0 : i32, i32, i32
  }
  func.func @transform_14(%arg0: i32, %arg1: i32) -> (i32, i32, i32) {
    %c0_i32 = arith.constant 0 : i32
    %c0_i32_0 = arith.constant 0 : i32
    %c0_i32_1 = arith.constant 0 : i32
    return %arg1, %c0_i32, %c0_i32_0 : i32, i32, i32
  }
  func.func @transform_15(%arg0: i32, %arg1: i32) -> (i32, i32, i32) {
    %c0_i32 = arith.constant 0 : i32
    %c0_i32_0 = arith.constant 0 : i32
    %c0_i32_1 = arith.constant 0 : i32
    return %arg1, %c0_i32, %c0_i32_0 : i32, i32, i32
  }
  func.func @transform_16(%arg0: i32, %arg1: i32) -> (i32, i32, i32) {
    %c0_i32 = arith.constant 0 : i32
    %c0_i32_0 = arith.constant 0 : i32
    %c0_i32_1 = arith.constant 0 : i32
    return %arg1, %c0_i32, %c0_i32_0 : i32, i32, i32
  }
  func.func @transform_17(%arg0: i32, %arg1: i32) -> (i32, i32) {
    %c0_i32 = arith.constant 0 : i32
    %c0_i32_0 = arith.constant 0 : i32
    %c0_i32_1 = arith.constant 0 : i32
    return %c0_i32, %c0_i32_0 : i32, i32
  }
  func.func @transform_18(%arg0: i32, %arg1: i32) -> (i32, i32) {
    %c0_i32 = arith.constant 0 : i32
    %c0_i32_0 = arith.constant 0 : i32
    %c0_i32_1 = arith.constant 0 : i32
    return %c0_i32, %c0_i32_0 : i32, i32
  }
  func.func @transform_19(%arg0: i32, %arg1: i32) -> (i32, i32, i32) {
    %c0_i32 = arith.constant 0 : i32
    %c0_i32_0 = arith.constant 0 : i32
    %c0_i32_1 = arith.constant 0 : i32
    return %arg0, %c0_i32, %c0_i32_0 : i32, i32, i32
  }
}

</mosaic_0001>

<llo_original>
// kernel: tpu_custom_call.1
$region0: #{tpu_custom_call.1}
  #allocation0 [shape = 'u32[]', space=smem, size = 0x4, offset = 0x4, fixed_abs, tag = 'smem constant byte address 0x4 - core index']
  #allocation1 [shape = 'u32[144,128]{1,0:T(1,128)}', space=vmem, size = 0x12000, scoped, tag = 'internal scratch']
  #allocation2 [shape = 'f32[32,128]{1,0:T(8,128)}', space=vmem, size = 0x4000, scoped, tag = 'scratch operand']
  %s0 = inlined_call_operand.hbm [shape: f32[4,16,128], index: 0, kind: input, shape index: {}]
  %s1 = inlined_call_operand.hbm [shape: f32[4,16,128], index: 1, kind: input, shape index: {}]
  %s2 = inlined_call_operand.vmem [shape: f32[4,1,16], index: 2, kind: input, shape index: {}]
  %s3 = inlined_call_operand.hbm [shape: bf16[2,128,256], index: 3, kind: input, shape index: {}]
  %s4 = inlined_call_operand.vmem [shape: f32[2,1,256], index: 4, kind: input, shape index: {}]
  %s5 = inlined_call_operand.hbm [shape: bf16[2,128,128], index: 5, kind: input, shape index: {}]
  %s6 = inlined_call_operand.vmem [shape: f32[2,1,128], index: 6, kind: input, shape index: {}]
  %s7 = inlined_call_operand.hbm [shape: bf16[2,128,128], index: 7, kind: input, shape index: {}]
  %s8 = inlined_call_operand.vmem [shape: f32[2,1,128], index: 8, kind: input, shape index: {}]
  %s9 = inlined_call_operand.vmem [shape: f32[2,1,128], index: 9, kind: input, shape index: {}]
  %s10 = inlined_call_operand.vmem [shape: f32[2,1,128], index: 10, kind: input, shape index: {}]
  %s11 = inlined_call_operand.hbm [shape: bf16[2,128,256], index: 11, kind: input, shape index: {}]
  %s12 = inlined_call_operand.vmem [shape: f32[2,1,256], index: 12, kind: input, shape index: {}]
  %s13 = inlined_call_operand.hbm [shape: bf16[2,256,128], index: 13, kind: input, shape index: {}]
  %s14 = inlined_call_operand.vmem [shape: f32[2,1,128], index: 14, kind: input, shape index: {}]
  %s15 = inlined_call_operand.vmem [shape: f32[2,1,128], index: 15, kind: input, shape index: {}]
  %s16 = inlined_call_operand.vmem [shape: f32[2,1,128], index: 16, kind: input, shape index: {}]
  %s17 = inlined_call_operand.vmem [shape: f32[1,128], index: 17, kind: input, shape index: {}]
  %s18 = inlined_call_operand.vmem [shape: f32[1,128], index: 18, kind: input, shape index: {}]
  %s19 = inlined_call_operand.hbm [shape: f32[4,16,128], index: 19, kind: output, shape index: {}]
  %s20 = sld [smem:[#allocation0]]
  $region145: #{tpu_custom_call.1} parent=0
    _
  %s22 = ssub.s32 1, %s20
  %s23 = scalar_select 0, %s22, %s20
  $region1: #{tpu_custom_call.1} parent=0
    #allocation3 [shape = 'u8[32768]{0}', space=vmem, size = 0x8000, scoped, tag = 'input window, operand 0']
    #allocation4 [shape = 's32[2]{0}', space=sflag, size = 0x8, scoped, tag = 'scoped memory for tpu_custom_call.1']
    #allocation5 [shape = 's32[2]{0}', space=sflag, size = 0x8, scoped, tag = 'scoped memory for tpu_custom_call.1']
    #allocation6 [shape = 'u8[32768]{0}', space=vmem, size = 0x8000, scoped, tag = 'input window, operand 1']
    #allocation7 [shape = 's32[2]{0}', space=sflag, size = 0x8, scoped, tag = 'scoped memory for tpu_custom_call.1']
    #allocation8 [shape = 'u8[131072]{0}', space=vmem, size = 0x20000, scoped, tag = 'input window, operand 3']
    #allocation9 [shape = 'u8[65536]{0}', space=vmem, size = 0x10000, scoped, tag = 'input window, operand 5']
    #allocation10 [shape = 's32[2]{0}', space=sflag, size = 0x8, scoped, tag = 'scoped memory for tpu_custom_call.1']
    #allocation11 [shape = 'u8[65536]{0}', space=vmem, size = 0x10000, scoped, tag = 'input window, operand 7']
    #allocation12 [shape = 'u8[131072]{0}', space=vmem, size = 0x20000, scoped, tag = 'input window, operand 11']
    #allocation13 [shape = 's32[2]{0}', space=sflag, size = 0x8, scoped, tag = 'scoped memory for tpu_custom_call.1']
    #allocation14 [shape = 'u8[131072]{0}', space=vmem, size = 0x20000, scoped, tag = 'input window, operand 13']
    #allocation15 [shape = 'u8[32768]{0}', space=vmem, size = 0x8000, scoped, tag = 'output window, operand 0']
    %24 = vsyncpa [#allocation4], 0
    %s25 = scalar_lea.sflag [#allocation4], 1
    %26 = vsyncpa %s25, 0
    %27 = vsyncpa [#allocation7], 0
    %s28 = scalar_lea.sflag [#allocation7], 1
    %29 = vsyncpa %s28, 0
    %30 = vsyncpa [#allocation10], 0
    %s31 = scalar_lea.sflag [#allocation10], 1
    %32 = vsyncpa %s31, 0
    %33 = vsyncpa [#allocation13], 0
    %s34 = scalar_lea.sflag [#allocation13], 1
    %35 = vsyncpa %s34, 0
    %36 = vsyncpa [#allocation5], 0
    %s37 = scalar_lea.sflag [#allocation5], 1
    %38 = vsyncpa %s37, 0
    loop: start=0, step=1, limit=6
    $region2: #{tpu_custom_call.1} parent=1 // loop_pre_header
      _
    $region3: #{tpu_custom_call.1} parent=1 // loop_header
      %s40 = sphi 0, %s44
      %p41 = scmp.ge.s32.totalorder %s40, 6
      %s47 = sphi 0, %s59
      %s48 = sphi 0, %s55
      %s49 = sphi 0, %s47
      %s50 = sphi 0, %s48
      %s51 = sphi 0, %s49
      %s52 = sphi 0, %s50
      %s62 = sphi 0, %s64
      %s65 = sphi 0, %s62
      %s66 = sphi 0, %s65
      %s82 = sphi 0, %s66
      %s88 = sphi 0, %s90
      %s91 = sphi 0, %s88
      %s92 = sphi 0, %s91
      %s108 = sphi 0, %s92
      %s114 = sphi 0, %s116
      %s117 = sphi 0, %s114
      %s118 = sphi 0, %s117
      %s134 = sphi 0, %s118
      %s140 = sphi 0, %s142
      %s143 = sphi 0, %s140
      %s144 = sphi 0, %s143
      %s160 = sphi 0, %s144
      %s166 = sphi 0, %s168
      %s169 = sphi 0, %s166
      %s170 = sphi 0, %s169
      %s186 = sphi 0, %s170
      %s192 = sphi 0, %s194
      %s195 = sphi 0, %s192
      %s196 = sphi 0, %s195
      %s212 = sphi 0, %s196
      %s218 = sphi 0, %s220
      %s221 = sphi 0, %s218
      %s222 = sphi 0, %s221
      %s238 = sphi 0, %s222
      %s244 = sphi 0, %s246
      %s247 = sphi 0, %s244
      %s248 = sphi 0, %s247
      %s264 = sphi 0, %s248
      %s270 = sphi 0, %s272
      %s273 = sphi 0, %s270
      %s274 = sphi 0, %s273
      %s290 = sphi 0, %s274
      %s296 = sphi 0, %s298
      %s299 = sphi 0, %s296
      %s300 = sphi 0, %s299
      %s316 = sphi 0, %s300
      %s322 = sphi 0, %s324
      %s325 = sphi 0, %s322
      %s326 = sphi 0, %s325
      %s342 = sphi 0, %s326
      %s348 = sphi 0, %s350
      %s351 = sphi 0, %s348
      %s352 = sphi 0, %s351
      %s368 = sphi 0, %s352
      %s374 = sphi 0, %s376
      %s377 = sphi 0, %s374
      %s378 = sphi 0, %s377
      %s394 = sphi 0, %s378
      %s400 = sphi 0, %s402
      %s403 = sphi 0, %s400
      %s404 = sphi 0, %s403
      %s420 = sphi 0, %s404
      %s426 = sphi 0, %s428
      %s429 = sphi 0, %s426
      %s430 = sphi 0, %s429
      %s446 = sphi 0, %s430
      %s452 = sphi 0, %s454
      %s455 = sphi 0, %s452
      %s456 = sphi 0, %s455
      %s472 = sphi 0, %s456
      %s478 = sphi 0, %s480
      %s481 = sphi 0, %s478
      %s482 = sphi 0, %s481
      %s498 = sphi 0, %s482
      %s502 = sphi 0, %s502
      %s504 = sphi 0, %s502
      %s505 = sphi 0, %s504
      %s519 = sphi 0, %s505
      %s523 = sphi 0, %s523
      %s525 = sphi 0, %s523
      %s526 = sphi 0, %s525
      %s540 = sphi 0, %s526
      %s546 = sphi 0, %s548
      %s549 = sphi 0, %s546
      %s550 = sphi 0, %s549
      %s566 = sphi 0, %s550
    $region4: #{tpu_custom_call.1} parent=1 // loop_header_branch
      %43 = sbr.rel (%p41) target = $region8
    $region5: #{tpu_custom_call.1} parent=1 // loop_body
      %s45 = ssub.s32 %s40, 1
      %s46 = ssub.s32 %s40, 2
      %s53 = sadd.s32 1, %s48
      %p54 = scmp.ge.s32.totalorder %s53, 2
      %s55 = scalar_select %p54, 0, %s53
      %s56 = sadd.s32 1, %s47
      %s57 = scalar_select %p54, %s56, %s47
      %p58 = scmp.ge.s32.totalorder %s57, 2
      %s59 = scalar_select %p58, 0, %s57
      %s60 = ssub.s32 %s47, %s59
      %p61 = scmp.eq.s32.totalorder %s60, 0
      %s63 = sadd.s32 %s62, 1
      %s64 = scalar_select %p61, %s62, %s63
      %p67 = pneg %p61
      %p68 = scmp.eq.s32.totalorder %s40, 3
      %p69 = por %p67, %p68
      %p70 = scmp.ne.s32.totalorder %s62, %s65
      %p71 = scmp.eq.s32.totalorder %s40, 0
      %p72 = por %p70, %p71
      %p73 = scmp.ne.s32.totalorder %s62, %s65
      %p74 = scmp.eq.s32.totalorder %s45, 3
      %p75 = por %p73, %p74
      %p76 = scmp.ne.s32.totalorder %s65, %s66
      %p77 = scmp.eq.s32.totalorder %s45, 0
      %p78 = por %p76, %p77
      %p79 = scmp.ne.s32.totalorder %s65, %s66
      %p80 = scmp.eq.s32.totalorder %s46, 3
      %p81 = por %p79, %p80
      %p83 = scmp.ne.s32.totalorder %s66, %s82
      %p84 = scmp.eq.s32.totalorder %s46, 0
      %p85 = por %p83, %p84
      %s86 = ssub.s32 %s47, %s59
      %p87 = scmp.eq.s32.totalorder %s86, 0
      %s89 = sadd.s32 %s88, 1
      %s90 = scalar_select %p87, %s88, %s89
      %p93 = pneg %p87
      %p94 = scmp.eq.s32.totalorder %s40, 3
      %p95 = por %p93, %p94
      %p96 = scmp.ne.s32.totalorder %s88, %s91
      %p97 = scmp.eq.s32.totalorder %s40, 0
      %p98 = por %p96, %p97
      %p99 = scmp.ne.s32.totalorder %s88, %s91
      %p100 = scmp.eq.s32.totalorder %s45, 3
      %p101 = por %p99, %p100
      %p102 = scmp.ne.s32.totalorder %s91, %s92
      %p103 = scmp.eq.s32.totalorder %s45, 0
      %p104 = por %p102, %p103
      %p105 = scmp.ne.s32.totalorder %s91, %s92
      %p106 = scmp.eq.s32.totalorder %s46, 3
      %p107 = por %p105, %p106
      %p109 = scmp.ne.s32.totalorder %s92, %s108
      %p110 = scmp.eq.s32.totalorder %s46, 0
      %p111 = por %p109, %p110
      %s112 = ssub.s32 %s47, %s59
      %p113 = scmp.eq.s32.totalorder %s112, 0
      %s115 = sadd.s32 %s114, 1
      %s116 = scalar_select %p113, %s114, %s115
      %p119 = pneg %p113
      %p120 = scmp.eq.s32.totalorder %s40, 3
      %p121 = por %p119, %p120
      %p122 = scmp.ne.s32.totalorder %s114, %s117
      %p123 = scmp.eq.s32.totalorder %s40, 0
      %p124 = por %p122, %p123
      %p125 = scmp.ne.s32.totalorder %s114, %s117
      %p126 = scmp.eq.s32.totalorder %s45, 3
      %p127 = por %p125, %p126
      %p128 = scmp.ne.s32.totalorder %s117, %s118
      %p129 = scmp.eq.s32.totalorder %s45, 0
      %p130 = por %p128, %p129
      %p131 = scmp.ne.s32.totalorder %s117, %s118
      %p132 = scmp.eq.s32.totalorder %s46, 3
      %p133 = por %p131, %p132
      %p135 = scmp.ne.s32.totalorder %s118, %s134
      %p136 = scmp.eq.s32.totalorder %s46, 0
      %p137 = por %p135, %p136
      %s138 = ssub.s32 %s48, %s55
      %p139 = scmp.eq.s32.totalorder %s138, 0
      %s141 = sadd.s32 %s140, 1
      %s142 = scalar_select %p139, %s140, %s141
      %p145 = pneg %p139
      %p146 = scmp.eq.s32.totalorder %s40, 3
      %p147 = por %p145, %p146
      %p148 = scmp.ne.s32.totalorder %s140, %s143
      %p149 = scmp.eq.s32.totalorder %s40, 0
      %p150 = por %p148, %p149
      %p151 = scmp.ne.s32.totalorder %s140, %s143
      %p152 = scmp.eq.s32.totalorder %s45, 3
      %p153 = por %p151, %p152
      %p154 = scmp.ne.s32.totalorder %s143, %s144
      %p155 = scmp.eq.s32.totalorder %s45, 0
      %p156 = por %p154, %p155
      %p157 = scmp.ne.s32.totalorder %s143, %s144
      %p158 = scmp.eq.s32.totalorder %s46, 3
      %p159 = por %p157, %p158
      %p161 = scmp.ne.s32.totalorder %s144, %s160
      %p162 = scmp.eq.s32.totalorder %s46, 0
      %p163 = por %p161, %p162
      %s164 = ssub.s32 %s48, %s55
      %p165 = scmp.eq.s32.totalorder %s164, 0
      %s167 = sadd.s32 %s166, 1
      %s168 = scalar_select %p165, %s166, %s167
      %p171 = pneg %p165
      %p172 = scmp.eq.s32.totalorder %s40, 3
      %p173 = por %p171, %p172
      %p174 = scmp.ne.s32.totalorder %s166, %s169
      %p175 = scmp.eq.s32.totalorder %s40, 0
      %p176 = por %p174, %p175
      %p177 = scmp.ne.s32.totalorder %s166, %s169
      %p178 = scmp.eq.s32.totalorder %s45, 3
      %p179 = por %p177, %p178
      %p180 = scmp.ne.s32.totalorder %s169, %s170
      %p181 = scmp.eq.s32.totalorder %s45, 0
      %p182 = por %p180, %p181
      %p183 = scmp.ne.s32.totalorder %s169, %s170
      %p184 = scmp.eq.s32.totalorder %s46, 3
      %p185 = por %p183, %p184
      %p187 = scmp.ne.s32.totalorder %s170, %s186
      %p188 = scmp.eq.s32.totalorder %s46, 0
      %p189 = por %p187, %p188
      %s190 = ssub.s32 %s48, %s55
      %p191 = scmp.eq.s32.totalorder %s190, 0
      %s193 = sadd.s32 %s192, 1
      %s194 = scalar_select %p191, %s192, %s193
      %p197 = pneg %p191
      %p198 = scmp.eq.s32.totalorder %s40, 3
      %p199 = por %p197, %p198
      %p200 = scmp.ne.s32.totalorder %s192, %s195
      %p201 = scmp.eq.s32.totalorder %s40, 0
      %p202 = por %p200, %p201
      %p203 = scmp.ne.s32.totalorder %s192, %s195
      %p204 = scmp.eq.s32.totalorder %s45, 3
      %p205 = por %p203, %p204
      %p206 = scmp.ne.s32.totalorder %s195, %s196
      %p207 = scmp.eq.s32.totalorder %s45, 0
      %p208 = por %p206, %p207
      %p209 = scmp.ne.s32.totalorder %s195, %s196
      %p210 = scmp.eq.s32.totalorder %s46, 3
      %p211 = por %p209, %p210
      %p213 = scmp.ne.s32.totalorder %s196, %s212
      %p214 = scmp.eq.s32.totalorder %s46, 0
      %p215 = por %p213, %p214
      %s216 = ssub.s32 %s48, %s55
      %p217 = scmp.eq.s32.totalorder %s216, 0
      %s219 = sadd.s32 %s218, 1
      %s220 = scalar_select %p217, %s218, %s219
      %p223 = pneg %p217
      %p224 = scmp.eq.s32.totalorder %s40, 3
      %p225 = por %p223, %p224
      %p226 = scmp.ne.s32.totalorder %s218, %s221
      %p227 = scmp.eq.s32.totalorder %s40, 0
      %p228 = por %p226, %p227
      %p229 = scmp.ne.s32.totalorder %s218, %s221
      %p230 = scmp.eq.s32.totalorder %s45, 3
      %p231 = por %p229, %p230
      %p232 = scmp.ne.s32.totalorder %s221, %s222
      %p233 = scmp.eq.s32.totalorder %s45, 0
      %p234 = por %p232, %p233
      %p235 = scmp.ne.s32.totalorder %s221, %s222
      %p236 = scmp.eq.s32.totalorder %s46, 3
      %p237 = por %p235, %p236
      %p239 = scmp.ne.s32.totalorder %s222, %s238
      %p240 = scmp.eq.s32.totalorder %s46, 0
      %p241 = por %p239, %p240
      %s242 = ssub.s32 %s48, %s55
      %p243 = scmp.eq.s32.totalorder %s242, 0
      %s245 = sadd.s32 %s244, 1
      %s246 = scalar_select %p243, %s244, %s245
      %p249 = pneg %p243
      %p250 = scmp.eq.s32.totalorder %s40, 3
      %p251 = por %p249, %p250
      %p252 = scmp.ne.s32.totalorder %s244, %s247
      %p253 = scmp.eq.s32.totalorder %s40, 0
      %p254 = por %p252, %p253
      %p255 = scmp.ne.s32.totalorder %s244, %s247
      %p256 = scmp.eq.s32.totalorder %s45, 3
      %p257 = por %p255, %p256
      %p258 = scmp.ne.s32.totalorder %s247, %s248
      %p259 = scmp.eq.s32.totalorder %s45, 0
      %p260 = por %p258, %p259
      %p261 = scmp.ne.s32.totalorder %s247, %s248
      %p262 = scmp.eq.s32.totalorder %s46, 3
      %p263 = por %p261, %p262
      %p265 = scmp.ne.s32.totalorder %s248, %s264
      %p266 = scmp.eq.s32.totalorder %s46, 0
      %p267 = por %p265, %p266
      %s268 = ssub.s32 %s48, %s55
      %p269 = scmp.eq.s32.totalorder %s268, 0
      %s271 = sadd.s32 %s270, 1
      %s272 = scalar_select %p269, %s270, %s271
      %p275 = pneg %p269
      %p276 = scmp.eq.s32.totalorder %s40, 3
      %p277 = por %p275, %p276
      %p278 = scmp.ne.s32.totalorder %s270, %s273
      %p279 = scmp.eq.s32.totalorder %s40, 0
      %p280 = por %p278, %p279
      %p281 = scmp.ne.s32.totalorder %s270, %s273
      %p282 = scmp.eq.s32.totalorder %s45, 3
      %p283 = por %p281, %p282
      %p284 = scmp.ne.s32.totalorder %s273, %s274
      %p285 = scmp.eq.s32.totalorder %s45, 0
      %p286 = por %p284, %p285
      %p287 = scmp.ne.s32.totalorder %s273, %s274
      %p288 = scmp.eq.s32.totalorder %s46, 3
      %p289 = por %p287, %p288
      %p291 = scmp.ne.s32.totalorder %s274, %s290
      %p292 = scmp.eq.s32.totalorder %s46, 0
      %p293 = por %p291, %p292
      %s294 = ssub.s32 %s48, %s55
      %p295 = scmp.eq.s32.totalorder %s294, 0
      %s297 = sadd.s32 %s296, 1
      %s298 = scalar_select %p295, %s296, %s297
      %p301 = pneg %p295
      %p302 = scmp.eq.s32.totalorder %s40, 3
      %p303 = por %p301, %p302
      %p304 = scmp.ne.s32.totalorder %s296, %s299
      %p305 = scmp.eq.s32.totalorder %s40, 0
      %p306 = por %p304, %p305
      %p307 = scmp.ne.s32.totalorder %s296, %s299
      %p308 = scmp.eq.s32.totalorder %s45, 3
      %p309 = por %p307, %p308
      %p310 = scmp.ne.s32.totalorder %s299, %s300
      %p311 = scmp.eq.s32.totalorder %s45, 0
      %p312 = por %p310, %p311
      %p313 = scmp.ne.s32.totalorder %s299, %s300
      %p314 = scmp.eq.s32.totalorder %s46, 3
      %p315 = por %p313, %p314
      %p317 = scmp.ne.s32.totalorder %s300, %s316
      %p318 = scmp.eq.s32.totalorder %s46, 0
      %p319 = por %p317, %p318
      %s320 = ssub.s32 %s48, %s55
      %p321 = scmp.eq.s32.totalorder %s320, 0
      %s323 = sadd.s32 %s322, 1
      %s324 = scalar_select %p321, %s322, %s323
      %p327 = pneg %p321
      %p328 = scmp.eq.s32.totalorder %s40, 3
      %p329 = por %p327, %p328
      %p330 = scmp.ne.s32.totalorder %s322, %s325
      %p331 = scmp.eq.s32.totalorder %s40, 0
      %p332 = por %p330, %p331
      %p333 = scmp.ne.s32.totalorder %s322, %s325
      %p334 = scmp.eq.s32.totalorder %s45, 3
      %p335 = por %p333, %p334
      %p336 = scmp.ne.s32.totalorder %s325, %s326
      %p337 = scmp.eq.s32.totalorder %s45, 0
      %p338 = por %p336, %p337
      %p339 = scmp.ne.s32.totalorder %s325, %s326
      %p340 = scmp.eq.s32.totalorder %s46, 3
      %p341 = por %p339, %p340
      %p343 = scmp.ne.s32.totalorder %s326, %s342
      %p344 = scmp.eq.s32.totalorder %s46, 0
      %p345 = por %p343, %p344
      %s346 = ssub.s32 %s48, %s55
      %p347 = scmp.eq.s32.totalorder %s346, 0
      %s349 = sadd.s32 %s348, 1
      %s350 = scalar_select %p347, %s348, %s349
      %p353 = pneg %p347
      %p354 = scmp.eq.s32.totalorder %s40, 3
      %p355 = por %p353, %p354
      %p356 = scmp.ne.s32.totalorder %s348, %s351
      %p357 = scmp.eq.s32.totalorder %s40, 0
      %p358 = por %p356, %p357
      %p359 = scmp.ne.s32.totalorder %s348, %s351
      %p360 = scmp.eq.s32.totalorder %s45, 3
      %p361 = por %p359, %p360
      %p362 = scmp.ne.s32.totalorder %s351, %s352
      %p363 = scmp.eq.s32.totalorder %s45, 0
      %p364 = por %p362, %p363
      %p365 = scmp.ne.s32.totalorder %s351, %s352
      %p366 = scmp.eq.s32.totalorder %s46, 3
      %p367 = por %p365, %p366
      %p369 = scmp.ne.s32.totalorder %s352, %s368
      %p370 = scmp.eq.s32.totalorder %s46, 0
      %p371 = por %p369, %p370
      %s372 = ssub.s32 %s48, %s55
      %p373 = scmp.eq.s32.totalorder %s372, 0
      %s375 = sadd.s32 %s374, 1
      %s376 = scalar_select %p373, %s374, %s375
      %p379 = pneg %p373
      %p380 = scmp.eq.s32.totalorder %s40, 3
      %p381 = por %p379, %p380
      %p382 = scmp.ne.s32.totalorder %s374, %s377
      %p383 = scmp.eq.s32.totalorder %s40, 0
      %p384 = por %p382, %p383
      %p385 = scmp.ne.s32.totalorder %s374, %s377
      %p386 = scmp.eq.s32.totalorder %s45, 3
      %p387 = por %p385, %p386
      %p388 = scmp.ne.s32.totalorder %s377, %s378
      %p389 = scmp.eq.s32.totalorder %s45, 0
      %p390 = por %p388, %p389
      %p391 = scmp.ne.s32.totalorder %s377, %s378
      %p392 = scmp.eq.s32.totalorder %s46, 3
      %p393 = por %p391, %p392
      %p395 = scmp.ne.s32.totalorder %s378, %s394
      %p396 = scmp.eq.s32.totalorder %s46, 0
      %p397 = por %p395, %p396
      %s398 = ssub.s32 %s48, %s55
      %p399 = scmp.eq.s32.totalorder %s398, 0
      %s401 = sadd.s32 %s400, 1
      %s402 = scalar_select %p399, %s400, %s401
      %p405 = pneg %p399
      %p406 = scmp.eq.s32.totalorder %s40, 3
      %p407 = por %p405, %p406
      %p408 = scmp.ne.s32.totalorder %s400, %s403
      %p409 = scmp.eq.s32.totalorder %s40, 0
      %p410 = por %p408, %p409
      %p411 = scmp.ne.s32.totalorder %s400, %s403
      %p412 = scmp.eq.s32.totalorder %s45, 3
      %p413 = por %p411, %p412
      %p414 = scmp.ne.s32.totalorder %s403, %s404
      %p415 = scmp.eq.s32.totalorder %s45, 0
      %p416 = por %p414, %p415
      %p417 = scmp.ne.s32.totalorder %s403, %s404
      %p418 = scmp.eq.s32.totalorder %s46, 3
      %p419 = por %p417, %p418
      %p421 = scmp.ne.s32.totalorder %s404, %s420
      %p422 = scmp.eq.s32.totalorder %s46, 0
      %p423 = por %p421, %p422
      %s424 = ssub.s32 %s48, %s55
      %p425 = scmp.eq.s32.totalorder %s424, 0
      %s427 = sadd.s32 %s426, 1
      %s428 = scalar_select %p425, %s426, %s427
      %p431 = pneg %p425
      %p432 = scmp.eq.s32.totalorder %s40, 3
      %p433 = por %p431, %p432
      %p434 = scmp.ne.s32.totalorder %s426, %s429
      %p435 = scmp.eq.s32.totalorder %s40, 0
      %p436 = por %p434, %p435
      %p437 = scmp.ne.s32.totalorder %s426, %s429
      %p438 = scmp.eq.s32.totalorder %s45, 3
      %p439 = por %p437, %p438
      %p440 = scmp.ne.s32.totalorder %s429, %s430
      %p441 = scmp.eq.s32.totalorder %s45, 0
      %p442 = por %p440, %p441
      %p443 = scmp.ne.s32.totalorder %s429, %s430
      %p444 = scmp.eq.s32.totalorder %s46, 3
      %p445 = por %p443, %p444
      %p447 = scmp.ne.s32.totalorder %s430, %s446
      %p448 = scmp.eq.s32.totalorder %s46, 0
      %p449 = por %p447, %p448
      %s450 = ssub.s32 %s48, %s55
      %p451 = scmp.eq.s32.totalorder %s450, 0
      %s453 = sadd.s32 %s452, 1
      %s454 = scalar_select %p451, %s452, %s453
      %p457 = pneg %p451
      %p458 = scmp.eq.s32.totalorder %s40, 3
      %p459 = por %p457, %p458
      %p460 = scmp.ne.s32.totalorder %s452, %s455
      %p461 = scmp.eq.s32.totalorder %s40, 0
      %p462 = por %p460, %p461
      %p463 = scmp.ne.s32.totalorder %s452, %s455
      %p464 = scmp.eq.s32.totalorder %s45, 3
      %p465 = por %p463, %p464
      %p466 = scmp.ne.s32.totalorder %s455, %s456
      %p467 = scmp.eq.s32.totalorder %s45, 0
      %p468 = por %p466, %p467
      %p469 = scmp.ne.s32.totalorder %s455, %s456
      %p470 = scmp.eq.s32.totalorder %s46, 3
      %p471 = por %p469, %p470
      %p473 = scmp.ne.s32.totalorder %s456, %s472
      %p474 = scmp.eq.s32.totalorder %s46, 0
      %p475 = por %p473, %p474
      %s476 = ssub.s32 %s48, %s55
      %p477 = scmp.eq.s32.totalorder %s476, 0
      %s479 = sadd.s32 %s478, 1
      %s480 = scalar_select %p477, %s478, %s479
      %p483 = pneg %p477
      %p484 = scmp.eq.s32.totalorder %s40, 3
      %p485 = por %p483, %p484
      %p486 = scmp.ne.s32.totalorder %s478, %s481
      %p487 = scmp.eq.s32.totalorder %s40, 0
      %p488 = por %p486, %p487
      %p489 = scmp.ne.s32.totalorder %s478, %s481
      %p490 = scmp.eq.s32.totalorder %s45, 3
      %p491 = por %p489, %p490
      %p492 = scmp.ne.s32.totalorder %s481, %s482
      %p493 = scmp.eq.s32.totalorder %s45, 0
      %p494 = por %p492, %p493
      %p495 = scmp.ne.s32.totalorder %s481, %s482
      %p496 = scmp.eq.s32.totalorder %s46, 3
      %p497 = por %p495, %p496
      %p499 = scmp.ne.s32.totalorder %s482, %s498
      %p500 = scmp.eq.s32.totalorder %s46, 0
      %p501 = por %p499, %p500
      %s503 = sadd.s32 %s502, 1
      %p506 = scmp.eq.s32.totalorder %s40, 3
      %p507 = scmp.ne.s32.totalorder %s502, %s504
      %p508 = scmp.eq.s32.totalorder %s40, 0
      %p509 = por %p507, %p508
      %p510 = scmp.ne.s32.totalorder %s502, %s504
      %p511 = scmp.eq.s32.totalorder %s45, 3
      %p512 = por %p510, %p511
      %p513 = scmp.ne.s32.totalorder %s504, %s505
      %p514 = scmp.eq.s32.totalorder %s45, 0
      %p515 = por %p513, %p514
      %p516 = scmp.ne.s32.totalorder %s504, %s505
      %p517 = scmp.eq.s32.totalorder %s46, 3
      %p518 = por %p516, %p517
      %p520 = scmp.ne.s32.totalorder %s505, %s519
      %p521 = scmp.eq.s32.totalorder %s46, 0
      %p522 = por %p520, %p521
      %s524 = sadd.s32 %s523, 1
      %p527 = scmp.eq.s32.totalorder %s40, 3
      %p528 = scmp.ne.s32.totalorder %s523, %s525
      %p529 = scmp.eq.s32.totalorder %s40, 0
      %p530 = por %p528, %p529
      %p531 = scmp.ne.s32.totalorder %s523, %s525
      %p532 = scmp.eq.s32.totalorder %s45, 3
      %p533 = por %p531, %p532
      %p534 = scmp.ne.s32.totalorder %s525, %s526
      %p535 = scmp.eq.s32.totalorder %s45, 0
      %p536 = por %p534, %p535
      %p537 = scmp.ne.s32.totalorder %s525, %s526
      %p538 = scmp.eq.s32.totalorder %s46, 3
      %p539 = por %p537, %p538
      %p541 = scmp.ne.s32.totalorder %s526, %s540
      %p542 = scmp.eq.s32.totalorder %s46, 0
      %p543 = por %p541, %p542
      %s544 = ssub.s32 %s47, %s59
      %p545 = scmp.eq.s32.totalorder %s544, 0
      %s547 = sadd.s32 %s546, 1
      %s548 = scalar_select %p545, %s546, %s547
      %p551 = pneg %p545
      %p552 = scmp.eq.s32.totalorder %s40, 3
      %p553 = por %p551, %p552
      %p554 = scmp.ne.s32.totalorder %s546, %s549
      %p555 = scmp.eq.s32.totalorder %s40, 0
      %p556 = por %p554, %p555
      %p557 = scmp.ne.s32.totalorder %s546, %s549
      %p558 = scmp.eq.s32.totalorder %s45, 3
      %p559 = por %p557, %p558
      %p560 = scmp.ne.s32.totalorder %s549, %s550
      %p561 = scmp.eq.s32.totalorder %s45, 0
      %p562 = por %p560, %p561
      %p563 = scmp.ne.s32.totalorder %s549, %s550
      %p564 = scmp.eq.s32.totalorder %s46, 3
      %p565 = por %p563, %p564
      %p567 = scmp.ne.s32.totalorder %s550, %s566
      %p568 = scmp.eq.s32.totalorder %s46, 0
      %p569 = por %p567, %p568
      %p570 = scmp.le.s32.totalorder 1, %s40
      %p571 = scmp.lt.s32.totalorder %s40, 5
      %p572 = pnand %p570, %p571
      %p573 = pneg %p572
      // Predicated region
      $region9: #{tpu_custom_call.1} parent=5 // pred_check
        _
      $region10: #{tpu_custom_call.1} parent=5 // pred_check_branch
        %575 = sbr.rel (%p572) target = $region12
      $region11: #{tpu_custom_call.1} parent=5 // pred_region
        %s576 = ssub.s32 %s40, 1
        // Predicated region
        $region13: #{tpu_custom_call.1} parent=11 // pred_check
          %p577 = pneg %p515
        $region14: #{tpu_custom_call.1} parent=11 // pred_check_branch
          %579 = sbr.rel (%p577) target = $region16
        $region15: #{tpu_custom_call.1} parent=11 // pred_region
          _
        $region16: #{tpu_custom_call.1} parent=11 // pred_fallthru
          _
        // Predicated region
        $region17: #{tpu_custom_call.1} parent=11 // pred_check
          %p580 = pneg %p536
        $region18: #{tpu_custom_call.1} parent=11 // pred_check_branch
          %582 = sbr.rel (%p580) target = $region20
        $region19: #{tpu_custom_call.1} parent=11 // pred_region
          _
        $region20: #{tpu_custom_call.1} parent=11 // pred_fallthru
          _
      $region12: #{tpu_custom_call.1} parent=5 // pred_fallthru
        _
      %p583 = scmp.lt.s32.totalorder %s40, 4
      // Predicated region
      $region21: #{tpu_custom_call.1} parent=5 // pred_check
        %p584 = pneg %p583
      $region22: #{tpu_custom_call.1} parent=5 // pred_check_branch
        %586 = sbr.rel (%p584) target = $region24
      $region23: #{tpu_custom_call.1} parent=5 // pred_region
        // Predicated region
        $region25: #{tpu_custom_call.1} parent=23 // pred_check
          %p587 = pneg %p72
        $region26: #{tpu_custom_call.1} parent=23 // pred_check_branch
          %589 = sbr.rel (%p587) target = $region28
        $region27: #{tpu_custom_call.1} parent=23 // pred_region
          %s590 = sand.u32 %s62, 1
          %s591 = scalar_lea.sflag [#allocation4], %s590
          %s592 = sand.u32 %s62, 1
          %s593 = smul.addr %s592, 32
          %s594 = scalar_lea.vmem [#allocation3], %s593
          %s595 = smul.u32 2, %s47
          %s597 = ssub.s32 512, 512
          %598 = vsyncadd %s591, %s597
          %s599 = smul.addr %s595, 2
          %s600 = smul.addr %s599, 128
          %s601 = scalar_lea.hbm %s0, %s600
          %s602 = sshll.u32 %s594, 4
          %s603 = int_to_ptr.vmem [resolvable:$true] %s602
          %608 = dma.hbm_to_vmem [thread:$0]  %s601, 512, %s603, %s591, 128, 128, 8
        $region28: #{tpu_custom_call.1} parent=23 // pred_fallthru
          _
        // Predicated region
        $region29: #{tpu_custom_call.1} parent=23 // pred_check
          %p609 = pneg %p98
        $region30: #{tpu_custom_call.1} parent=23 // pred_check_branch
          %611 = sbr.rel (%p609) target = $region32
        $region31: #{tpu_custom_call.1} parent=23 // pred_region
          %s612 = sand.u32 %s40, 1
          %s613 = scalar_lea.sflag [#allocation7], %s612
          %s614 = sand.u32 %s88, 1
          %s615 = smul.addr %s614, 32
          %s616 = scalar_lea.vmem [#allocation6], %s615
          %s617 = smul.u32 2, %s47
          %s619 = ssub.s32 512, 512
          %620 = vsyncadd %s613, %s619
          %s621 = smul.addr %s617, 2
          %s622 = smul.addr %s621, 128
          %s623 = scalar_lea.hbm %s1, %s622
          %s624 = sshll.u32 %s616, 4
          %s625 = int_to_ptr.vmem [resolvable:$true] %s624
          %630 = dma.hbm_to_vmem [thread:$0]  %s623, 512, %s625, %s613, 128, 128, 8
        $region32: #{tpu_custom_call.1} parent=23 // pred_fallthru
          _
        // Predicated region
        $region33: #{tpu_custom_call.1} parent=23 // pred_check
          %p631 = pneg %p124
        $region34: #{tpu_custom_call.1} parent=23 // pred_check_branch
          %633 = sbr.rel (%p631) target = $region36
        $region35: #{tpu_custom_call.1} parent=23 // pred_region
          %s634 = smul.u32 2, %s47
          %p635 = scmp.lt.s32.totalorder %s634, 3
          %s636 = scalar_select %p635, %s634, 3
          %s637 = scalar_lea.vmem %s2, %s636
          %s638 = smul.u32 2, %s47
        $region36: #{tpu_custom_call.1} parent=23 // pred_fallthru
          _
        // Predicated region
        $region37: #{tpu_custom_call.1} parent=23 // pred_check
          %p639 = pneg %p150
        $region38: #{tpu_custom_call.1} parent=23 // pred_check_branch
          %641 = sbr.rel (%p639) target = $region40
        $region39: #{tpu_custom_call.1} parent=23 // pred_region
          %s642 = sand.u32 %s40, 1
          %s643 = scalar_lea.sflag [#allocation7], %s642
          %s644 = sand.u32 %s140, 1
          %s645 = smul.addr %s644, 128
          %s646 = scalar_lea.vmem [#allocation8], %s645
          %s648 = ssub.s32 2048, 2048
          %649 = vsyncadd %s643, %s648
          %s650 = smul.addr %s48, 32
          %s651 = smul.addr %s650, 64
          %s652 = scalar_lea.hbm %s3, %s651
          %s653 = sshll.u32 %s646, 4
          %s654 = int_to_ptr.vmem [resolvable:$true] %s653
          %659 = dma.hbm_to_vmem [thread:$0]  %s652, 2048, %s654, %s643, 128, 128, 8
        $region40: #{tpu_custom_call.1} parent=23 // pred_fallthru
          _
        // Predicated region
        $region41: #{tpu_custom_call.1} parent=23 // pred_check
          %p660 = pneg %p176
        $region42: #{tpu_custom_call.1} parent=23 // pred_check_branch
          %662 = sbr.rel (%p660) target = $region44
        $region43: #{tpu_custom_call.1} parent=23 // pred_region
          %p663 = scmp.lt.s32.totalorder %s48, 1
          %s664 = scalar_select %p663, %s48, 1
          %s665 = smul.addr %s664, 2
          %s666 = scalar_lea.vmem %s4, %s665
        $region44: #{tpu_custom_call.1} parent=23 // pred_fallthru
          _
        // Predicated region
        $region45: #{tpu_custom_call.1} parent=23 // pred_check
          %p667 = pneg %p202
        $region46: #{tpu_custom_call.1} parent=23 // pred_check_branch
          %669 = sbr.rel (%p667) target = $region48
        $region47: #{tpu_custom_call.1} parent=23 // pred_region
          %s670 = sand.u32 %s40, 1
          %s671 = scalar_lea.sflag [#allocation10], %s670
          %s672 = sand.u32 %s192, 1
          %s673 = smul.addr %s672, 64
          %s674 = scalar_lea.vmem [#allocation9], %s673
          %s676 = ssub.s32 1024, 1024
          %677 = vsyncadd %s671, %s676
          %s678 = smul.addr %s48, 16
          %s679 = smul.addr %s678, 64
          %s680 = scalar_lea.hbm %s5, %s679
          %s681 = sshll.u32 %s674, 4
          %s682 = int_to_ptr.vmem [resolvable:$true] %s681
          %687 = dma.hbm_to_vmem [thread:$0]  %s680, 1024, %s682, %s671, 64, 64, 4
        $region48: #{tpu_custom_call.1} parent=23 // pred_fallthru
          _
        // Predicated region
        $region49: #{tpu_custom_call.1} parent=23 // pred_check
          %p688 = pneg %p228
        $region50: #{tpu_custom_call.1} parent=23 // pred_check_branch
          %690 = sbr.rel (%p688) target = $region52
        $region51: #{tpu_custom_call.1} parent=23 // pred_region
          %p691 = scmp.lt.s32.totalorder %s48, 1
          %s692 = scalar_select %p691, %s48, 1
          %s693 = scalar_lea.vmem %s6, %s692
        $region52: #{tpu_custom_call.1} parent=23 // pred_fallthru
          _
        // Predicated region
        $region53: #{tpu_custom_call.1} parent=23 // pred_check
          %p694 = pneg %p254
        $region54: #{tpu_custom_call.1} parent=23 // pred_check_branch
          %696 = sbr.rel (%p694) target = $region56
        $region55: #{tpu_custom_call.1} parent=23 // pred_region
          %s697 = sand.u32 %s40, 1
          %s698 = scalar_lea.sflag [#allocation10], %s697
          %s699 = sand.u32 %s244, 1
          %s700 = smul.addr %s699, 64
          %s701 = scalar_lea.vmem [#allocation11], %s700
          %s703 = ssub.s32 1024, 1024
          %704 = vsyncadd %s698, %s703
          %s705 = smul.addr %s48, 16
          %s706 = smul.addr %s705, 64
          %s707 = scalar_lea.hbm %s7, %s706
          %s708 = sshll.u32 %s701, 4
          %s709 = int_to_ptr.vmem [resolvable:$true] %s708
          %714 = dma.hbm_to_vmem [thread:$0]  %s707, 1024, %s709, %s698, 64, 64, 4
        $region56: #{tpu_custom_call.1} parent=23 // pred_fallthru
          _
        // Predicated region
        $region57: #{tpu_custom_call.1} parent=23 // pred_check
          %p715 = pneg %p280
        $region58: #{tpu_custom_call.1} parent=23 // pred_check_branch
          %717 = sbr.rel (%p715) target = $region60
        $region59: #{tpu_custom_call.1} parent=23 // pred_region
          %p718 = scmp.lt.s32.totalorder %s48, 1
          %s719 = scalar_select %p718, %s48, 1
          %s720 = scalar_lea.vmem %s8, %s719
        $region60: #{tpu_custom_call.1} parent=23 // pred_fallthru
          _
        // Predicated region
        $region61: #{tpu_custom_call.1} parent=23 // pred_check
          %p721 = pneg %p306
        $region62: #{tpu_custom_call.1} parent=23 // pred_check_branch
          %723 = sbr.rel (%p721) target = $region64
        $region63: #{tpu_custom_call.1} parent=23 // pred_region
          %p724 = scmp.lt.s32.totalorder %s48, 1
          %s725 = scalar_select %p724, %s48, 1
          %s726 = scalar_lea.vmem %s9, %s725
        $region64: #{tpu_custom_call.1} parent=23 // pred_fallthru
          _
        // Predicated region
        $region65: #{tpu_custom_call.1} parent=23 // pred_check
          %p727 = pneg %p332
        $region66: #{tpu_custom_call.1} parent=23 // pred_check_branch
          %729 = sbr.rel (%p727) target = $region68
        $region67: #{tpu_custom_call.1} parent=23 // pred_region
          %p730 = scmp.lt.s32.totalorder %s48, 1
          %s731 = scalar_select %p730, %s48, 1
          %s732 = scalar_lea.vmem %s10, %s731
        $region68: #{tpu_custom_call.1} parent=23 // pred_fallthru
          _
        // Predicated region
        $region69: #{tpu_custom_call.1} parent=23 // pred_check
          %p733 = pneg %p358
        $region70: #{tpu_custom_call.1} parent=23 // pred_check_branch
          %735 = sbr.rel (%p733) target = $region72
        $region71: #{tpu_custom_call.1} parent=23 // pred_region
          %s736 = sand.u32 %s40, 1
          %s737 = scalar_lea.sflag [#allocation13], %s736
          %s738 = sand.u32 %s348, 1
          %s739 = smul.addr %s738, 128
          %s740 = scalar_lea.vmem [#allocation12], %s739
          %s742 = ssub.s32 2048, 2048
          %743 = vsyncadd %s737, %s742
          %s744 = smul.addr %s48, 32
          %s745 = smul.addr %s744, 64
          %s746 = scalar_lea.hbm %s11, %s745
          %s747 = sshll.u32 %s740, 4
          %s748 = int_to_ptr.vmem [resolvable:$true] %s747
          %753 = dma.hbm_to_vmem [thread:$0]  %s746, 2048, %s748, %s737, 128, 128, 8
        $region72: #{tpu_custom_call.1} parent=23 // pred_fallthru
          _
        // Predicated region
        $region73: #{tpu_custom_call.1} parent=23 // pred_check
          %p754 = pneg %p384
        $region74: #{tpu_custom_call.1} parent=23 // pred_check_branch
          %756 = sbr.rel (%p754) target = $region76
        $region75: #{tpu_custom_call.1} parent=23 // pred_region
          %p757 = scmp.lt.s32.totalorder %s48, 1
          %s758 = scalar_select %p757, %s48, 1
          %s759 = smul.addr %s758, 2
          %s760 = scalar_lea.vmem %s12, %s759
        $region76: #{tpu_custom_call.1} parent=23 // pred_fallthru
          _
        // Predicated region
        $region77: #{tpu_custom_call.1} parent=23 // pred_check
          %p761 = pneg %p410
        $region78: #{tpu_custom_call.1} parent=23 // pred_check_branch
          %763 = sbr.rel (%p761) target = $region80
        $region79: #{tpu_custom_call.1} parent=23 // pred_region
          %s764 = sand.u32 %s40, 1
          %s765 = scalar_lea.sflag [#allocation13], %s764
          %s766 = sand.u32 %s400, 1
          %s767 = smul.addr %s766, 128
          %s768 = scalar_lea.vmem [#allocation14], %s767
          %s770 = ssub.s32 2048, 2048
          %771 = vsyncadd %s765, %s770
          %s772 = smul.addr %s48, 32
          %s773 = smul.addr %s772, 64
          %s774 = scalar_lea.hbm %s13, %s773
          %s775 = sshll.u32 %s768, 4
          %s776 = int_to_ptr.vmem [resolvable:$true] %s775
          %781 = dma.hbm_to_vmem [thread:$0]  %s774, 2048, %s776, %s765, 64, 64, 4
        $region80: #{tpu_custom_call.1} parent=23 // pred_fallthru
          _
        // Predicated region
        $region81: #{tpu_custom_call.1} parent=23 // pred_check
          %p782 = pneg %p436
        $region82: #{tpu_custom_call.1} parent=23 // pred_check_branch
          %784 = sbr.rel (%p782) target = $region84
        $region83: #{tpu_custom_call.1} parent=23 // pred_region
          %p785 = scmp.lt.s32.totalorder %s48, 1
          %s786 = scalar_select %p785, %s48, 1
          %s787 = scalar_lea.vmem %s14, %s786
        $region84: #{tpu_custom_call.1} parent=23 // pred_fallthru
          _
        // Predicated region
        $region85: #{tpu_custom_call.1} parent=23 // pred_check
          %p788 = pneg %p462
        $region86: #{tpu_custom_call.1} parent=23 // pred_check_branch
          %790 = sbr.rel (%p788) target = $region88
        $region87: #{tpu_custom_call.1} parent=23 // pred_region
          %p791 = scmp.lt.s32.totalorder %s48, 1
          %s792 = scalar_select %p791, %s48, 1
          %s793 = scalar_lea.vmem %s15, %s792
        $region88: #{tpu_custom_call.1} parent=23 // pred_fallthru
          _
        // Predicated region
        $region89: #{tpu_custom_call.1} parent=23 // pred_check
          %p794 = pneg %p488
        $region90: #{tpu_custom_call.1} parent=23 // pred_check_branch
          %796 = sbr.rel (%p794) target = $region92
        $region91: #{tpu_custom_call.1} parent=23 // pred_region
          %p797 = scmp.lt.s32.totalorder %s48, 1
          %s798 = scalar_select %p797, %s48, 1
          %s799 = scalar_lea.vmem %s16, %s798
        $region92: #{tpu_custom_call.1} parent=23 // pred_fallthru
          _
      $region24: #{tpu_custom_call.1} parent=5 // pred_fallthru
        _
      %p800 = scmp.le.s32.totalorder 1, %s40
      %p801 = scmp.lt.s32.totalorder %s40, 5
      %p802 = pnand %p800, %p801
      %p803 = pneg %p802
      // Predicated region
      $region93: #{tpu_custom_call.1} parent=5 // pred_check
        _
      $region94: #{tpu_custom_call.1} parent=5 // pred_check_branch
        %805 = sbr.rel (%p802) target = $region96
      $region95: #{tpu_custom_call.1} parent=5 // pred_region
        %s806 = ssub.s32 %s40, 1
        %s807 = sand.u32 %s65, 1
        %s808 = scalar_lea.sflag [#allocation4], %s807
        %s809 = sand.u32 %s65, 1
        %s810 = smul.addr %s809, 32
        %s811 = scalar_lea.vmem [#allocation3], %s810
        // Predicated region
        $region97: #{tpu_custom_call.1} parent=95 // pred_check
          %p812 = pneg %p78
        $region98: #{tpu_custom_call.1} parent=95 // pred_check_branch
          %814 = sbr.rel (%p812) target = $region100
        $region99: #{tpu_custom_call.1} parent=95 // pred_region
          %815 = dma.done %s808, 512
        $region100: #{tpu_custom_call.1} parent=95 // pred_fallthru
          _
        %s816 = sand.u32 %s45, 1
        %s817 = scalar_lea.sflag [#allocation7], %s816
        %s818 = sand.u32 %s91, 1
        %s819 = smul.addr %s818, 32
        %s820 = scalar_lea.vmem [#allocation6], %s819
        // Predicated region
        $region101: #{tpu_custom_call.1} parent=95 // pred_check
          %p821 = pneg %p104
        $region102: #{tpu_custom_call.1} parent=95 // pred_check_branch
          %823 = sbr.rel (%p821) target = $region104
        $region103: #{tpu_custom_call.1} parent=95 // pred_region
          %824 = dma.done %s817, 512
        $region104: #{tpu_custom_call.1} parent=95 // pred_fallthru
          _
        %s825 = sand.u32 %s45, 1
        %s826 = scalar_lea.sflag [#allocation7], %s825
        %s827 = sand.u32 %s143, 1
        %s828 = smul.addr %s827, 128
        %s829 = scalar_lea.vmem [#allocation8], %s828
        // Predicated region
        $region105: #{tpu_custom_call.1} parent=95 // pred_check
          %p830 = pneg %p156
        $region106: #{tpu_custom_call.1} parent=95 // pred_check_branch
          %832 = sbr.rel (%p830) target = $region108
        $region107: #{tpu_custom_call.1} parent=95 // pred_region
          %833 = dma.done %s826, 2048
        $region108: #{tpu_custom_call.1} parent=95 // pred_fallthru
          _
        %s834 = sand.u32 %s45, 1
        %s835 = scalar_lea.sflag [#allocation10], %s834
        %s836 = sand.u32 %s195, 1
        %s837 = smul.addr %s836, 64
        %s838 = scalar_lea.vmem [#allocation9], %s837
        // Predicated region
        $region109: #{tpu_custom_call.1} parent=95 // pred_check
          %p839 = pneg %p208
        $region110: #{tpu_custom_call.1} parent=95 // pred_check_branch
          %841 = sbr.rel (%p839) target = $region112
        $region111: #{tpu_custom_call.1} parent=95 // pred_region
          %842 = dma.done %s835, 1024
        $region112: #{tpu_custom_call.1} parent=95 // pred_fallthru
          _
        %s843 = sand.u32 %s45, 1
        %s844 = scalar_lea.sflag [#allocation10], %s843
        %s845 = sand.u32 %s247, 1
        %s846 = smul.addr %s845, 64
        %s847 = scalar_lea.vmem [#allocation11], %s846
        // Predicated region
        $region113: #{tpu_custom_call.1} parent=95 // pred_check
          %p848 = pneg %p260
        $region114: #{tpu_custom_call.1} parent=95 // pred_check_branch
          %850 = sbr.rel (%p848) target = $region116
        $region115: #{tpu_custom_call.1} parent=95 // pred_region
          %851 = dma.done %s844, 1024
        $region116: #{tpu_custom_call.1} parent=95 // pred_fallthru
          _
        %s852 = sand.u32 %s45, 1
        %s853 = scalar_lea.sflag [#allocation13], %s852
        %s854 = sand.u32 %s351, 1
        %s855 = smul.addr %s854, 128
        %s856 = scalar_lea.vmem [#allocation12], %s855
        // Predicated region
        $region117: #{tpu_custom_call.1} parent=95 // pred_check
          %p857 = pneg %p364
        $region118: #{tpu_custom_call.1} parent=95 // pred_check_branch
          %859 = sbr.rel (%p857) target = $region120
        $region119: #{tpu_custom_call.1} parent=95 // pred_region
          %860 = dma.done %s853, 2048
        $region120: #{tpu_custom_call.1} parent=95 // pred_fallthru
          _
        %s861 = sand.u32 %s45, 1
        %s862 = scalar_lea.sflag [#allocation13], %s861
        %s863 = sand.u32 %s403, 1
        %s864 = smul.addr %s863, 128
        %s865 = scalar_lea.vmem [#allocation14], %s864
        // Predicated region
        $region121: #{tpu_custom_call.1} parent=95 // pred_check
          %p866 = pneg %p416
        $region122: #{tpu_custom_call.1} parent=95 // pred_check_branch
          %868 = sbr.rel (%p866) target = $region124
        $region123: #{tpu_custom_call.1} parent=95 // pred_region
          %869 = dma.done %s862, 2048
        $region124: #{tpu_custom_call.1} parent=95 // pred_fallthru
          _
        %s870 = sand.u32 %s65, 1
        %s871 = scalar_lea.sflag [#allocation4], %s870
        %s872 = sand.u32 %s65, 1
        %s873 = smul.addr %s872, 32
        %s874 = scalar_lea.vmem [#allocation3], %s873
        %p875 = pneg %p78
        %p876 = pneg %p75
        %s877 = sand.u32 %s45, 1
        %s878 = scalar_lea.sflag [#allocation7], %s877
        %s879 = sand.u32 %s91, 1
        %s880 = smul.addr %s879, 32
        %s881 = scalar_lea.vmem [#allocation6], %s880
        %p882 = pneg %p104
        %p883 = pneg %p101
        %s884 = smul.u32 2, %s49
        %p885 = scmp.lt.s32.totalorder %s884, 3
        %s886 = scalar_select %p885, %s884, 3
        %s887 = scalar_lea.vmem %s2, %s886
        %p888 = pneg %p130
        %p889 = pneg %p127
        %s890 = sand.u32 %s45, 1
        %s891 = scalar_lea.sflag [#allocation7], %s890
        %s892 = sand.u32 %s143, 1
        %s893 = smul.addr %s892, 128
        %s894 = scalar_lea.vmem [#allocation8], %s893
        %p895 = pneg %p156
        %p896 = pneg %p153
        %p897 = scmp.lt.s32.totalorder %s50, 1
        %s898 = scalar_select %p897, %s50, 1
        %s899 = smul.addr %s898, 2
        %s900 = scalar_lea.vmem %s4, %s899
        %p901 = pneg %p182
        %p902 = pneg %p179
        %s903 = sand.u32 %s45, 1
        %s904 = scalar_lea.sflag [#allocation10], %s903
        %s905 = sand.u32 %s195, 1
        %s906 = smul.addr %s905, 64
        %s907 = scalar_lea.vmem [#allocation9], %s906
        %p908 = pneg %p208
        %p909 = pneg %p205
        %p910 = scmp.lt.s32.totalorder %s50, 1
        %s911 = scalar_select %p910, %s50, 1
        %s912 = scalar_lea.vmem %s6, %s911
        %p913 = pneg %p234
        %p914 = pneg %p231
        %s915 = sand.u32 %s45, 1
        %s916 = scalar_lea.sflag [#allocation10], %s915
        %s917 = sand.u32 %s247, 1
        %s918 = smul.addr %s917, 64
        %s919 = scalar_lea.vmem [#allocation11], %s918
        %p920 = pneg %p260
        %p921 = pneg %p257
        %p922 = scmp.lt.s32.totalorder %s50, 1
        %s923 = scalar_select %p922, %s50, 1
        %s924 = scalar_lea.vmem %s8, %s923
        %p925 = pneg %p286
        %p926 = pneg %p283
        %p927 = scmp.lt.s32.totalorder %s50, 1
        %s928 = scalar_select %p927, %s50, 1
        %s929 = scalar_lea.vmem %s9, %s928
        %p930 = pneg %p312
        %p931 = pneg %p309
        %p932 = scmp.lt.s32.totalorder %s50, 1
        %s933 = scalar_select %p932, %s50, 1
        %s934 = scalar_lea.vmem %s10, %s933
        %p935 = pneg %p338
        %p936 = pneg %p335
        %s937 = sand.u32 %s45, 1
        %s938 = scalar_lea.sflag [#allocation13], %s937
        %s939 = sand.u32 %s351, 1
        %s940 = smul.addr %s939, 128
        %s941 = scalar_lea.vmem [#allocation12], %s940
        %p942 = pneg %p364
        %p943 = pneg %p361
        %p944 = scmp.lt.s32.totalorder %s50, 1
        %s945 = scalar_select %p944, %s50, 1
        %s946 = smul.addr %s945, 2
        %s947 = scalar_lea.vmem %s12, %s946
        %p948 = pneg %p390
        %p949 = pneg %p387
        %s950 = sand.u32 %s45, 1
        %s951 = scalar_lea.sflag [#allocation13], %s950
        %s952 = sand.u32 %s403, 1
        %s953 = smul.addr %s952, 128
        %s954 = scalar_lea.vmem [#allocation14], %s953
        %p955 = pneg %p416
        %p956 = pneg %p413
        %p957 = scmp.lt.s32.totalorder %s50, 1
        %s958 = scalar_select %p957, %s50, 1
        %s959 = scalar_lea.vmem %s14, %s958
        %p960 = pneg %p442
        %p961 = pneg %p439
        %p962 = scmp.lt.s32.totalorder %s50, 1
        %s963 = scalar_select %p962, %s50, 1
        %s964 = scalar_lea.vmem %s15, %s963
        %p965 = pneg %p468
        %p966 = pneg %p465
        %p967 = scmp.lt.s32.totalorder %s50, 1
        %s968 = scalar_select %p967, %s50, 1
        %s969 = scalar_lea.vmem %s16, %s968
        %p970 = pneg %p494
        %p971 = pneg %p491
        %p972 = pneg %p515
        %p973 = pneg %p512
        %p974 = pneg %p536
        %p975 = pneg %p533
        %p976 = pneg %p562
        %p977 = pneg %p559
        %s978 = sand.u32 %s549, 1
        %s979 = scalar_lea.sflag [#allocation5], %s978
        %s980 = sand.u32 %s549, 1
        %s981 = smul.addr %s980, 32
        %s982 = scalar_lea.vmem [#allocation15], %s981
        %s983 = smul.u32 2, %s49
        %s984 = smul.u32 2, %s49
        %s985 = smul.u32 2, %s49
        %p986 = scmp.lt.s32.totalorder %s985, 3
        %s987 = scalar_select %p986, %s985, 3
        %s988 = scalar_lea.vmem %s2, %s987
        %s989 = smul.u32 2, %s49
        %p990 = scmp.lt.s32.totalorder %s50, 1
        %s991 = scalar_select %p990, %s50, 1
        %s992 = smul.addr %s991, 2
        %s993 = scalar_lea.vmem %s4, %s992
        %p994 = scmp.lt.s32.totalorder %s50, 1
        %s995 = scalar_select %p994, %s50, 1
        %s996 = scalar_lea.vmem %s6, %s995
        %p997 = scmp.lt.s32.totalorder %s50, 1
        %s998 = scalar_select %p997, %s50, 1
        %s999 = scalar_lea.vmem %s8, %s998
        %p1000 = scmp.lt.s32.totalorder %s50, 1
        %s1001 = scalar_select %p1000, %s50, 1
        %s1002 = scalar_lea.vmem %s9, %s1001
        %p1003 = scmp.lt.s32.totalorder %s50, 1
        %s1004 = scalar_select %p1003, %s50, 1
        %s1005 = scalar_lea.vmem %s10, %s1004
        %p1006 = scmp.lt.s32.totalorder %s50, 1
        %s1007 = scalar_select %p1006, %s50, 1
        %s1008 = smul.addr %s1007, 2
        %s1009 = scalar_lea.vmem %s12, %s1008
        %p1010 = scmp.lt.s32.totalorder %s50, 1
        %s1011 = scalar_select %p1010, %s50, 1
        %s1012 = scalar_lea.vmem %s14, %s1011
        %p1013 = scmp.lt.s32.totalorder %s50, 1
        %s1014 = scalar_select %p1013, %s50, 1
        %s1015 = scalar_lea.vmem %s15, %s1014
        %p1016 = scmp.lt.s32.totalorder %s50, 1
        %s1017 = scalar_select %p1016, %s50, 1
        %s1018 = scalar_lea.vmem %s16, %s1017
        %s1019 = smul.u32 2, %s49
        %p1021 = scmp.eq.s32.totalorder %s50, 0
        // Predicated region
        $region125: #{tpu_custom_call.1} parent=95 // pred_check
          %p1022 = pneg %p1021
        $region126: #{tpu_custom_call.1} parent=95 // pred_check_branch
          %1024 = sbr.rel (%p1022) target = $region128
        $region127: #{tpu_custom_call.1} parent=95 // pred_region
          %v1025 = vld [vmem:[%s811] sm:$0xff]
          %v1026 = vld [vmem:[%s811 + $0x8] sm:$0xff]
          %v1027 = vld [vmem:[%s811 + $0x10] sm:$0xff]
          %v1028 = vld [vmem:[%s811 + $0x18] sm:$0xff]
          %1029 = vst [vmem:[#allocation2] sm:$0xff] %v1025
          %1030 = vst [vmem:[#allocation2 + $0x8] sm:$0xff] %v1026
          %1031 = vst [vmem:[#allocation2 + $0x10] sm:$0xff] %v1027
          %1032 = vst [vmem:[#allocation2 + $0x18] sm:$0xff] %v1028
        $region128: #{tpu_custom_call.1} parent=95 // pred_fallthru
          _
        %v1033 = vld [vmem:[#allocation2] sm:$0xff]
        %v1034 = vld [vmem:[#allocation2 + $0x8] sm:$0xff]
        %v1035 = vld [vmem:[#allocation2 + $0x10] sm:$0xff]
        %v1036 = vld [vmem:[#allocation2 + $0x18] sm:$0xff]
        %v1037 = vld [vmem:[%s820] sm:$0xff]
        %v1038 = vld [vmem:[%s820 + $0x8] sm:$0xff]
        %v1039 = vld [vmem:[%s820 + $0x10] sm:$0xff]
        %v1040 = vld [vmem:[%s820 + $0x18] sm:$0xff]
        %v1041 = vadd.f32 %v1033, %v1037
        %v1042 = vadd.f32 %v1034, %v1038
        %v1043 = vadd.f32 %v1035, %v1039
        %v1044 = vadd.f32 %v1036, %v1040
        %v1045 = vpack.c.bf16 %v1042, %v1041
        %v1046 = vpack.c.bf16 %v1044, %v1043
        %v1047 = vpack.c.bf16 %v1034, %v1033
        %v1048 = vpack.c.bf16 %v1036, %v1035
        %v1049 = vld [vmem:[%s829] sm:$0xff]
        %v1050 = vld [vmem:[%s829 + $0x8] sm:$0xff]
        %v1051 = vld [vmem:[%s829 + $0x10] sm:$0xff]
        %v1052 = vld [vmem:[%s829 + $0x18] sm:$0xff]
        %v1053 = vld [vmem:[%s829 + $0x20] sm:$0xff]
        %v1054 = vld [vmem:[%s829 + $0x28] sm:$0xff]
        %v1055 = vld [vmem:[%s829 + $0x30] sm:$0xff]
        %v1056 = vld [vmem:[%s829 + $0x38] sm:$0xff]
        %v1057 = vld [vmem:[%s829 + $0x40] sm:$0xff]
        %v1058 = vld [vmem:[%s829 + $0x48] sm:$0xff]
        %v1059 = vld [vmem:[%s829 + $0x50] sm:$0xff]
        %v1060 = vld [vmem:[%s829 + $0x58] sm:$0xff]
        %v1061 = vld [vmem:[%s829 + $0x60] sm:$0xff]
        %v1062 = vld [vmem:[%s829 + $0x68] sm:$0xff]
        %v1063 = vld [vmem:[%s829 + $0x70] sm:$0xff]
        %v1064 = vld [vmem:[%s829 + $0x78] sm:$0xff]
        %v1065 = vld [vmem:[%s993] sm:$0x3]
        %v1067 = vlaneseq
        %v1068 = vshrl.u32 %v1067, 7
        %v1069 = vsub.s32 0, %v1068
        %v1070 = vrot.slane %v1065, %v1069
        %v1071 = vlaneseq
        %v1072 = vshrl.u32 %v1071, 7
        %v1073 = vsub.s32 1, %v1072
        %v1074 = vrot.slane %v1065, %v1073
        %v1093 = vunpack.c.l.b16 %v1049
        %v1094 = vunpack.c.h.b16 %v1049
        %v1095 = vunpack.c.l.b16 %v1050
        %v1096 = vunpack.c.h.b16 %v1050
        %v1097 = vunpack.c.l.b16 %v1051
        %v1098 = vunpack.c.h.b16 %v1051
        %v1099 = vunpack.c.l.b16 %v1052
        %v1100 = vunpack.c.h.b16 %v1052
        %v1101 = vunpack.c.l.b16 %v1053
        %v1102 = vunpack.c.h.b16 %v1053
        %v1103 = vunpack.c.l.b16 %v1054
        %v1104 = vunpack.c.h.b16 %v1054
        %v1105 = vunpack.c.l.b16 %v1055
        %v1106 = vunpack.c.h.b16 %v1055
        %v1107 = vunpack.c.l.b16 %v1056
        %v1108 = vunpack.c.h.b16 %v1056
        %v1109 = vunpack.c.l.b16 %v1057
        %v1110 = vunpack.c.h.b16 %v1057
        %v1111 = vunpack.c.l.b16 %v1058
        %v1112 = vunpack.c.h.b16 %v1058
        %v1113 = vunpack.c.l.b16 %v1059
        %v1114 = vunpack.c.h.b16 %v1059
        %v1115 = vunpack.c.l.b16 %v1060
        %v1116 = vunpack.c.h.b16 %v1060
        %v1117 = vunpack.c.l.b16 %v1061
        %v1118 = vunpack.c.h.b16 %v1061
        %v1119 = vunpack.c.l.b16 %v1062
        %v1120 = vunpack.c.h.b16 %v1062
        %v1121 = vunpack.c.l.b16 %v1063
        %v1122 = vunpack.c.h.b16 %v1063
        %v1123 = vunpack.c.l.b16 %v1064
        %v1124 = vunpack.c.h.b16 %v1064
        %v1125 = vpack.c.b16 %v1095, %v1093
        %v1126 = vpack.c.b16 %v1096, %v1094
        %v1127 = vpack.c.b16 %v1099, %v1097
        %v1128 = vpack.c.b16 %v1100, %v1098
        %v1129 = vpack.c.b16 %v1103, %v1101
        %v1130 = vpack.c.b16 %v1104, %v1102
        %v1131 = vpack.c.b16 %v1107, %v1105
        %v1132 = vpack.c.b16 %v1108, %v1106
        %v1133 = vpack.c.b16 %v1111, %v1109
        %v1134 = vpack.c.b16 %v1112, %v1110
        %v1135 = vpack.c.b16 %v1115, %v1113
        %v1136 = vpack.c.b16 %v1116, %v1114
        %v1137 = vpack.c.b16 %v1119, %v1117
        %v1138 = vpack.c.b16 %v1120, %v1118
        %v1139 = vpack.c.b16 %v1123, %v1121
        %v1140 = vpack.c.b16 %v1124, %v1122
        %1157 = vmatprep.subr.bf16.mxu0 %v1126
        %1158 = vmatpush1.bf16.msra.mxu0 %v1125
        %1159 = vmatprep.subr.bf16.mxu0 %v1128
        %1160 = vmatpush1.bf16.msra.mxu0 %v1127
        %1161 = vmatprep.subr.bf16.mxu0 %v1130
        %1162 = vmatpush1.bf16.msra.mxu0 %v1129
        %1163 = vmatprep.subr.bf16.mxu0 %v1132
        %1164 = vmatpush1.bf16.msra.mxu0 %v1131
        %1165 = vmatprep.subr.bf16.mxu0 %v1134
        %1166 = vmatpush1.bf16.msra.mxu0 %v1133
        %1167 = vmatprep.subr.bf16.mxu0 %v1136
        %1168 = vmatpush1.bf16.msra.mxu0 %v1135
        %1169 = vmatprep.subr.bf16.mxu0 %v1138
        %1170 = vmatpush1.bf16.msra.mxu0 %v1137
        %1171 = vmatprep.subr.bf16.mxu0 %v1140
        %1172 = vmatpush1.bf16.msra.mxu0 %v1139
        %1173 = vmatprep.subr.bf16.mxu0 0
        %1174 = vmatpush1.bf16.msra.mxu0 0
        %1175 = vmatprep.subr.bf16.mxu0 0
        %1176 = vmatpush1.bf16.msra.mxu0 0
        %1177 = vmatprep.subr.bf16.mxu0 0
        %1178 = vmatpush1.bf16.msra.mxu0 0
        %1179 = vmatprep.subr.bf16.mxu0 0
        %1180 = vmatpush1.bf16.msra.mxu0 0
        %1181 = vmatprep.subr.bf16.mxu0 0
        %1182 = vmatpush1.bf16.msra.mxu0 0
        %1183 = vmatprep.subr.bf16.mxu0 0
        %1184 = vmatpush1.bf16.msra.mxu0 0
        %1185 = vmatprep.subr.bf16.mxu0 0
        %1186 = vmatpush1.bf16.msra.mxu0 0
        %1187 = vmatprep.subr.bf16.mxu0 0
        %1188 = vmatpush1.bf16.msra.mxu0 0
        %1189 = vmatprep.mubr.bf16.mxu0 0
        %1190 = vmatmul.mubr.bf16.gmra.mrb[0].mxu0 %v1045
        %v1191 = vpop.f32.mrb[0].mxu0
        %v1192 = vadd.f32 %v1070, %v1191
        %v1193 = vpop.f32.mrb[0].mxu0
        %v1194 = vadd.f32 %v1074, %v1193
        %v1195 = vpop.f32.mrb[0].mxu0
        %v1196 = vadd.f32 %v1070, %v1195
        %v1197 = vpop.f32.mrb[0].mxu0
        %v1198 = vadd.f32 %v1074, %v1197
        %1199 = vmatprep.mubr.bf16.mxu0 0
        %1200 = vmatmul.mubr.bf16.gmra.mrb[0].mxu0 %v1046
        %v1201 = vpop.f32.mrb[0].mxu0
        %v1202 = vadd.f32 %v1070, %v1201
        %v1203 = vpop.f32.mrb[0].mxu0
        %v1204 = vadd.f32 %v1074, %v1203
        %v1205 = vpop.f32.mrb[0].mxu0
        %v1206 = vadd.f32 %v1070, %v1205
        %v1207 = vpop.f32.mrb[0].mxu0
        %v1208 = vadd.f32 %v1074, %v1207
        %1209 = vdwg.mxu0
        %v1210 = vld [vmem:[%s838] sm:$0xf]
        %v1211 = vld [vmem:[%s838 + $0x4] sm:$0xf]
        %v1212 = vld [vmem:[%s838 + $0x8] sm:$0xf]
        %v1213 = vld [vmem:[%s838 + $0xc] sm:$0xf]
        %v1214 = vld [vmem:[%s838 + $0x10] sm:$0xf]
        %v1215 = vld [vmem:[%s838 + $0x14] sm:$0xf]
        %v1216 = vld [vmem:[%s838 + $0x18] sm:$0xf]
        %v1217 = vld [vmem:[%s838 + $0x1c] sm:$0xf]
        %v1218 = vld [vmem:[%s838 + $0x20] sm:$0xf]
        %v1219 = vld [vmem:[%s838 + $0x24] sm:$0xf]
        %v1220 = vld [vmem:[%s838 + $0x28] sm:$0xf]
        %v1221 = vld [vmem:[%s838 + $0x2c] sm:$0xf]
        %v1222 = vld [vmem:[%s838 + $0x30] sm:$0xf]
        %v1223 = vld [vmem:[%s838 + $0x34] sm:$0xf]
        %v1224 = vld [vmem:[%s838 + $0x38] sm:$0xf]
        %v1225 = vld [vmem:[%s838 + $0x3c] sm:$0xf]
        %v1226 = vld [vmem:[%s996] sm:$0x1]
        %v1228 = vlaneseq
        %v1229 = vshrl.u32 %v1228, 7
        %v1230 = vsub.s32 0, %v1229
        %v1231 = vrot.slane %v1226, %v1230
        %v1249 = vunpack.c.l.b16 %v1210
        %v1250 = vunpack.c.l.b16 %v1211
        %v1251 = vunpack.c.l.b16 %v1212
        %v1252 = vunpack.c.l.b16 %v1213
        %v1253 = vunpack.c.l.b16 %v1214
        %v1254 = vunpack.c.l.b16 %v1215
        %v1255 = vunpack.c.l.b16 %v1216
        %v1256 = vunpack.c.l.b16 %v1217
        %v1257 = vunpack.c.l.b16 %v1218
        %v1258 = vunpack.c.l.b16 %v1219
        %v1259 = vunpack.c.l.b16 %v1220
        %v1260 = vunpack.c.l.b16 %v1221
        %v1261 = vunpack.c.l.b16 %v1222
        %v1262 = vunpack.c.l.b16 %v1223
        %v1263 = vunpack.c.l.b16 %v1224
        %v1264 = vunpack.c.l.b16 %v1225
        %v1265 = vpack.c.b16 %v1250, %v1249
        %v1266 = vpack.c.b16 %v1252, %v1251
        %v1267 = vpack.c.b16 %v1254, %v1253
        %v1268 = vpack.c.b16 %v1256, %v1255
        %v1269 = vpack.c.b16 %v1258, %v1257
        %v1270 = vpack.c.b16 %v1260, %v1259
        %v1271 = vpack.c.b16 %v1262, %v1261
        %v1272 = vpack.c.b16 %v1264, %v1263
        %1281 = vmatprep.subr.bf16.mxu0 0
        %1282 = vmatpush1.bf16.msra.mxu0 %v1265
        %1283 = vmatprep.subr.bf16.mxu0 0
        %1284 = vmatpush1.bf16.msra.mxu0 %v1266
        %1285 = vmatprep.subr.bf16.mxu0 0
        %1286 = vmatpush1.bf16.msra.mxu0 %v1267
        %1287 = vmatprep.subr.bf16.mxu0 0
        %1288 = vmatpush1.bf16.msra.mxu0 %v1268
        %1289 = vmatprep.subr.bf16.mxu0 0
        %1290 = vmatpush1.bf16.msra.mxu0 %v1269
        %1291 = vmatprep.subr.bf16.mxu0 0
        %1292 = vmatpush1.bf16.msra.mxu0 %v1270
        %1293 = vmatprep.subr.bf16.mxu0 0
        %1294 = vmatpush1.bf16.msra.mxu0 %v1271
        %1295 = vmatprep.subr.bf16.mxu0 0
        %1296 = vmatpush1.bf16.msra.mxu0 %v1272
        %1297 = vmatprep.subr.bf16.mxu0 0
        %1298 = vmatpush1.bf16.msra.mxu0 0
        %1299 = vmatprep.subr.bf16.mxu0 0
        %1300 = vmatpush1.bf16.msra.mxu0 0
        %1301 = vmatprep.subr.bf16.mxu0 0
        %1302 = vmatpush1.bf16.msra.mxu0 0
        %1303 = vmatprep.subr.bf16.mxu0 0
        %1304 = vmatpush1.bf16.msra.mxu0 0
        %1305 = vmatprep.subr.bf16.mxu0 0
        %1306 = vmatpush1.bf16.msra.mxu0 0
        %1307 = vmatprep.subr.bf16.mxu0 0
        %1308 = vmatpush1.bf16.msra.mxu0 0
        %1309 = vmatprep.subr.bf16.mxu0 0
        %1310 = vmatpush1.bf16.msra.mxu0 0
        %1311 = vmatprep.subr.bf16.mxu0 0
        %1312 = vmatpush1.bf16.msra.mxu0 0
        %1313 = vmatprep.mubr.bf16.mxu0 0
        %1314 = vmatmul.mubr.bf16.gmra.mrb[0].mxu0 %v1047
        %v1315 = vpop.f32.mrb[0].mxu0
        %v1316 = vadd.f32 %v1231, %v1315
        %v1317 = vpop.f32.mrb[0].mxu0
        %v1318 = vpop.f32.mrb[0].mxu0
        %v1319 = vadd.f32 %v1231, %v1318
        %v1320 = vpop.f32.mrb[0].mxu0
        %1321 = vmatprep.mubr.bf16.mxu0 0
        %1322 = vmatmul.mubr.bf16.gmra.mrb[0].mxu0 %v1048
        %v1323 = vpop.f32.mrb[0].mxu0
        %v1324 = vadd.f32 %v1231, %v1323
        %v1325 = vpop.f32.mrb[0].mxu0
        %v1326 = vpop.f32.mrb[0].mxu0
        %v1327 = vadd.f32 %v1231, %v1326
        %v1328 = vpop.f32.mrb[0].mxu0
        %1329 = vdwg.mxu0
        %v1330 = vpack.c.bf16 %v1319, %v1316
        %v1331 = vpack.c.bf16 %v1327, %v1324
        %v1332 = vld [vmem:[%s988] sm:$0x1]
        %vm1333 = vcmask 261120
        %v1335 = vsel %vm1333, %v1192, 0
        %v1338 = vsel %vm1333, %v1196, 0
        %v1341 = vsel %vm1333, %v1194, 0
        %v1344 = vsel %vm1333, %v1198, 0
        %1346 = vmatprep.subr.mxu0 0.0
        %1347 = vmatpush1.xpose.msra.mxu0 %v1341
        %1348 = vmatprep.subr.mxu0 0.0
        %1349 = vmatpush1.xpose.msra.mxu0 %v1344
        %1350 = vmatprep.subr.mxu0 0.0
        %1351 = vmatpush1.xpose.msra.mxu0 0.0
        %1352 = vmatprep.subr.mxu0 0.0
        %1353 = vmatpush1.xpose.msra.mxu0 0.0
        %1354 = vmatprep.subr.mxu0 0.0
        %1355 = vmatpush1.xpose.msra.mxu0 0.0
        %1356 = vmatprep.subr.mxu0 0.0
        %1357 = vmatpush1.xpose.msra.mxu0 0.0
        %1358 = vmatprep.subr.mxu0 0.0
        %1359 = vmatpush1.xpose.msra.mxu0 0.0
        %1360 = vmatprep.subr.mxu0 0.0
        %1361 = vmatpush1.xpose.msra.mxu0 0.0
        %1362 = vmatprep.subr.mxu0 0.0
        %1363 = vmatpush1.xpose.msra.mxu0 0.0
        %1364 = vmatprep.subr.mxu0 0.0
        %1365 = vmatpush1.xpose.msra.mxu0 0.0
        %1366 = vmatprep.subr.mxu0 0.0
        %1367 = vmatpush1.xpose.msra.mxu0 0.0
        %1368 = vmatprep.subr.mxu0 0.0
        %1369 = vmatpush1.xpose.msra.mxu0 0.0
        %1370 = vmatprep.subr.mxu0 0.0
        %1371 = vmatpush1.xpose.msra.mxu0 0.0
        %1372 = vmatprep.subr.mxu0 0.0
        %1373 = vmatpush1.xpose.msra.mxu0 0.0
        %1374 = vmatprep.subr.mxu0 0.0
        %1375 = vmatpush1.xpose.msra.mxu0 0.0
        %1376 = vmatprep.subr.mxu0 0.0
        %1377 = vmatpush1.xpose.msra.mxu0 0.0
        %1378 = vmatprep.subr.mxu0 0.0
        %1379 = vmatpush1.xpose.msra.mxu0 0.0
        %1380 = vmatprep.subr.mxu0 0.0
        %1381 = vmatpush1.xpose.msra.mxu0 0.0
        %1382 = vmatprep.subr.mxu0 0.0
        %1383 = vmatpush1.xpose.msra.mxu0 0.0
        %1384 = vmatprep.subr.mxu0 0.0
        %1385 = vmatpush1.xpose.msra.mxu0 0.0
        %1386 = vmatprep.subr.mxu0 0.0
        %1387 = vmatpush1.xpose.msra.mxu0 0.0
        %1388 = vmatprep.subr.mxu0 0.0
        %1389 = vmatpush1.xpose.msra.mxu0 0.0
        %1390 = vmatprep.subr.mxu0 0.0
        %1391 = vmatpush1.xpose.msra.mxu0 0.0
        %1392 = vmatprep.subr.mxu0 0.0
        %1393 = vmatpush1.xpose.msra.mxu0 0.0
        %1394 = vmatprep.subr.mxu0 0.0
        %1395 = vmatpush1.xpose.msra.mxu0 0.0
        %1396 = vmatprep.subr.mxu0 0.0
        %1397 = vmatpush1.xpose.msra.mxu0 0.0
        %1398 = vmatprep.subr.mxu0 0.0
        %1399 = vmatpush1.xpose.msra.mxu0 0.0
        %1400 = vmatprep.subr.mxu0 0.0
        %1401 = vmatpush1.xpose.msra.mxu0 0.0
        %1402 = vmatprep.subr.mxu0 0.0
        %1403 = vmatpush1.xpose.msra.mxu0 0.0
        %1404 = vmatprep.subr.mxu0 0.0
        %1405 = vmatpush1.xpose.msra.mxu0 0.0
        %1406 = vmatprep.subr.mxu0 0.0
        %1407 = vmatpush1.xpose.msra.mxu0 0.0
        %1408 = vmatprep.subr.mxu0 0.0
        %1409 = vmatpush1.xpose.msra.mxu0 0.0
        %1410 = vmatprep.mubr.f32.mxu0 0.0
        %1411 = vmatmul.mubr.f32.gmra.mrb[0].mxu0 %v1335
        %v1412 = vpop.f32.mrb[0].mxu0
        %v1413 = vadd.f32 0.0, %v1412
        %v1414 = vpop.f32.mrb[0].mxu0
        %1415 = vmatprep.mubr.f32.mxu0 0.0
        %1416 = vmatmul.mubr.f32.gmra.mrb[0].mxu0 %v1338
        %v1417 = vpop.f32.mrb[0].mxu0
        %v1418 = vadd.f32 0.0, %v1417
        %v1419 = vpop.f32.mrb[0].mxu0
        %1420 = vdwg.mxu0
        %v1421 = vmul.f32 %v1413, 0.17677669
        %v1422 = vmul.f32 %v1418, 0.17677669
        %v1424 = vlaneseq
        %v1425 = vshrl.u32 %v1424, 7
        %v1426 = vsub.s32 0, %v1425
        %v1427 = vrot.slane %v1332, %v1426
        %v1429 = vadd.f32 %v1421, %v1427
        %v1430 = vadd.f32 %v1422, %v1427
        %vm1431 = vcmask 130048
        %v1432 = vsel %vm1431, %v1429, -inf
        %1433 = vmax.xlane.f32.xlu0 %v1432
        %v1434 = vpop.xlane.xlu0 %1433
        %v1435 = vsel %vm1431, %v1430, -inf
        %1436 = vmax.xlane.f32.xlu0 %v1435
        %v1437 = vpop.xlane.xlu0 %1436
        %v1438 = vsub.f32 %v1429, %v1434
        %v1439 = vsub.f32 %v1430, %v1437
        %v1440 = vmul.f32 %v1438, 1.442695
        %v1441 = vpow.pop %v1440
        %v1442 = vmul.f32 %v1439, 1.442695
        %v1443 = vpow.pop %v1442
        %v1444 = vsel %vm1431, %v1441, 0.0
        %1445 = vadd.xlane.f32.xlu0 %v1444
        %v1446 = vpop.xlane.xlu0 %1445
        %v1447 = vsel %vm1431, %v1443, 0.0
        %1448 = vadd.xlane.f32.xlu0 %v1447
        %v1449 = vpop.xlane.xlu0 %1448
        %v1450 = vrcp.pop %v1446
        %v1451 = vrcp.pop %v1449
        %v1452 = vmul.f32 %v1441, %v1450
        %v1453 = vmul.f32 %v1443, %v1451
        %v1454 = vpack.c.bf16 %v1453, %v1452
        %v1456 = vsel %vm1431, %v1454, 0
        %1458 = vmatprep.subr.bf16.mxu0 0
        %1459 = vmatpush1.bf16.msra.mxu0 %v1330
        %1460 = vmatprep.subr.bf16.mxu0 0
        %1461 = vmatpush1.bf16.msra.mxu0 0
        %1462 = vmatprep.subr.bf16.mxu0 0
        %1463 = vmatpush1.bf16.msra.mxu0 0
        %1464 = vmatprep.subr.bf16.mxu0 0
        %1465 = vmatpush1.bf16.msra.mxu0 0
        %1466 = vmatprep.subr.bf16.mxu0 0
        %1467 = vmatpush1.bf16.msra.mxu0 0
        %1468 = vmatprep.subr.bf16.mxu0 0
        %1469 = vmatpush1.bf16.msra.mxu0 0
        %1470 = vmatprep.subr.bf16.mxu0 0
        %1471 = vmatpush1.bf16.msra.mxu0 0
        %1472 = vmatprep.subr.bf16.mxu0 0
        %1473 = vmatpush1.bf16.msra.mxu0 0
        %1474 = vmatprep.subr.bf16.mxu0 0
        %1475 = vmatpush1.bf16.msra.mxu0 0
        %1476 = vmatprep.subr.bf16.mxu0 0
        %1477 = vmatpush1.bf16.msra.mxu0 0
        %1478 = vmatprep.subr.bf16.mxu0 0
        %1479 = vmatpush1.bf16.msra.mxu0 0
        %1480 = vmatprep.subr.bf16.mxu0 0
        %1481 = vmatpush1.bf16.msra.mxu0 0
        %1482 = vmatprep.subr.bf16.mxu0 0
        %1483 = vmatpush1.bf16.msra.mxu0 0
        %1484 = vmatprep.subr.bf16.mxu0 0
        %1485 = vmatpush1.bf16.msra.mxu0 0
        %1486 = vmatprep.subr.bf16.mxu0 0
        %1487 = vmatpush1.bf16.msra.mxu0 0
        %1488 = vmatprep.subr.bf16.mxu0 0
        %1489 = vmatpush1.bf16.msra.mxu0 0
        %1490 = vmatprep.mubr.bf16.mxu0 0
        %1491 = vmatmul.mubr.bf16.gmra.mrb[0].mxu0 %v1456
        %v1492 = vpop.f32.mrb[0].mxu0
        %v1493 = vadd.f32 0.0, %v1492
        %v1494 = vpop.f32.mrb[0].mxu0
        %v1495 = vpop.f32.mrb[0].mxu0
        %v1496 = vadd.f32 0.0, %v1495
        %v1497 = vpop.f32.mrb[0].mxu0
        %1498 = vdwg.mxu0
        %1499 = vrot.lane.b32.xlu0 %v1192, 96
        %v1500 = vpop.permute.xlu0 %1499
        %1501 = vrot.lane.b32.xlu0 %v1196, 96
        %v1502 = vpop.permute.xlu0 %1501
        %1503 = vrot.lane.b32.xlu0 %v1194, 96
        %v1504 = vpop.permute.xlu0 %1503
        %1505 = vrot.lane.b32.xlu0 %v1198, 96
        %v1506 = vpop.permute.xlu0 %1505
        %v1507 = vsel %vm1333, %v1500, 0
        %v1509 = vsel %vm1333, %v1502, 0
        %v1511 = vsel %vm1333, %v1504, 0
        %v1513 = vsel %vm1333, %v1506, 0
        %1515 = vmatprep.subr.mxu0 0.0
        %1516 = vmatpush1.xpose.msra.mxu0 %v1511
        %1517 = vmatprep.subr.mxu0 0.0
        %1518 = vmatpush1.xpose.msra.mxu0 %v1513
        %1519 = vmatprep.subr.mxu0 0.0
        %1520 = vmatpush1.xpose.msra.mxu0 0.0
        %1521 = vmatprep.subr.mxu0 0.0
        %1522 = vmatpush1.xpose.msra.mxu0 0.0
        %1523 = vmatprep.subr.mxu0 0.0
        %1524 = vmatpush1.xpose.msra.mxu0 0.0
        %1525 = vmatprep.subr.mxu0 0.0
        %1526 = vmatpush1.xpose.msra.mxu0 0.0
        %1527 = vmatprep.subr.mxu0 0.0
        %1528 = vmatpush1.xpose.msra.mxu0 0.0
        %1529 = vmatprep.subr.mxu0 0.0
        %1530 = vmatpush1.xpose.msra.mxu0 0.0
        %1531 = vmatprep.subr.mxu0 0.0
        %1532 = vmatpush1.xpose.msra.mxu0 0.0
        %1533 = vmatprep.subr.mxu0 0.0
        %1534 = vmatpush1.xpose.msra.mxu0 0.0
        %1535 = vmatprep.subr.mxu0 0.0
        %1536 = vmatpush1.xpose.msra.mxu0 0.0
        %1537 = vmatprep.subr.mxu0 0.0
        %1538 = vmatpush1.xpose.msra.mxu0 0.0
        %1539 = vmatprep.subr.mxu0 0.0
        %1540 = vmatpush1.xpose.msra.mxu0 0.0
        %1541 = vmatprep.subr.mxu0 0.0
        %1542 = vmatpush1.xpose.msra.mxu0 0.0
        %1543 = vmatprep.subr.mxu0 0.0
        %1544 = vmatpush1.xpose.msra.mxu0 0.0
        %1545 = vmatprep.subr.mxu0 0.0
        %1546 = vmatpush1.xpose.msra.mxu0 0.0
        %1547 = vmatprep.subr.mxu0 0.0
        %1548 = vmatpush1.xpose.msra.mxu0 0.0
        %1549 = vmatprep.subr.mxu0 0.0
        %1550 = vmatpush1.xpose.msra.mxu0 0.0
        %1551 = vmatprep.subr.mxu0 0.0
        %1552 = vmatpush1.xpose.msra.mxu0 0.0
        %1553 = vmatprep.subr.mxu0 0.0
        %1554 = vmatpush1.xpose.msra.mxu0 0.0
        %1555 = vmatprep.subr.mxu0 0.0
        %1556 = vmatpush1.xpose.msra.mxu0 0.0
        %1557 = vmatprep.subr.mxu0 0.0
        %1558 = vmatpush1.xpose.msra.mxu0 0.0
        %1559 = vmatprep.subr.mxu0 0.0
        %1560 = vmatpush1.xpose.msra.mxu0 0.0
        %1561 = vmatprep.subr.mxu0 0.0
        %1562 = vmatpush1.xpose.msra.mxu0 0.0
        %1563 = vmatprep.subr.mxu0 0.0
        %1564 = vmatpush1.xpose.msra.mxu0 0.0
        %1565 = vmatprep.subr.mxu0 0.0
        %1566 = vmatpush1.xpose.msra.mxu0 0.0
        %1567 = vmatprep.subr.mxu0 0.0
        %1568 = vmatpush1.xpose.msra.mxu0 0.0
        %1569 = vmatprep.subr.mxu0 0.0
        %1570 = vmatpush1.xpose.msra.mxu0 0.0
        %1571 = vmatprep.subr.mxu0 0.0
        %1572 = vmatpush1.xpose.msra.mxu0 0.0
        %1573 = vmatprep.subr.mxu0 0.0
        %1574 = vmatpush1.xpose.msra.mxu0 0.0
        %1575 = vmatprep.subr.mxu0 0.0
        %1576 = vmatpush1.xpose.msra.mxu0 0.0
        %1577 = vmatprep.subr.mxu0 0.0
        %1578 = vmatpush1.xpose.msra.mxu0 0.0
        %1579 = vmatprep.mubr.f32.mxu0 0.0
        %1580 = vmatmul.mubr.f32.gmra.mrb[0].mxu0 %v1507
        %v1581 = vpop.f32.mrb[0].mxu0
        %v1582 = vadd.f32 0.0, %v1581
        %v1583 = vpop.f32.mrb[0].mxu0
        %1584 = vmatprep.mubr.f32.mxu0 0.0
        %1585 = vmatmul.mubr.f32.gmra.mrb[0].mxu0 %v1509
        %v1586 = vpop.f32.mrb[0].mxu0
        %v1587 = vadd.f32 0.0, %v1586
        %v1588 = vpop.f32.mrb[0].mxu0
        %1589 = vdwg.mxu0
        %v1590 = vmul.f32 %v1582, 0.17677669
        %v1591 = vmul.f32 %v1587, 0.17677669
        %v1592 = vadd.f32 %v1590, %v1427
        %v1593 = vadd.f32 %v1591, %v1427
        %v1594 = vsel %vm1431, %v1592, -inf
        %1595 = vmax.xlane.f32.xlu0 %v1594
        %v1596 = vpop.xlane.xlu0 %1595
        %v1597 = vsel %vm1431, %v1593, -inf
        %1598 = vmax.xlane.f32.xlu0 %v1597
        %v1599 = vpop.xlane.xlu0 %1598
        %v1600 = vsub.f32 %v1592, %v1596
        %v1601 = vsub.f32 %v1593, %v1599
        %v1602 = vmul.f32 %v1600, 1.442695
        %v1603 = vpow.pop %v1602
        %v1604 = vmul.f32 %v1601, 1.442695
        %v1605 = vpow.pop %v1604
        %v1606 = vsel %vm1431, %v1603, 0.0
        %1607 = vadd.xlane.f32.xlu0 %v1606
        %v1608 = vpop.xlane.xlu0 %1607
        %v1609 = vsel %vm1431, %v1605, 0.0
        %1610 = vadd.xlane.f32.xlu0 %v1609
        %v1611 = vpop.xlane.xlu0 %1610
        %v1612 = vrcp.pop %v1608
        %v1613 = vrcp.pop %v1611
        %v1614 = vmul.f32 %v1603, %v1612
        %v1615 = vmul.f32 %v1605, %v1613
        %v1616 = vpack.c.bf16 %v1615, %v1614
        %1618 = vrot.lane.b32.xlu0 %v1330, 96
        %v1619 = vpop.permute.xlu0 %1618
        %v1622 = vsel %vm1431, %v1616, 0
        %1624 = vmatprep.subr.bf16.mxu0 0
        %1625 = vmatpush1.bf16.msra.mxu0 %v1619
        %1626 = vmatprep.subr.bf16.mxu0 0
        %1627 = vmatpush1.bf16.msra.mxu0 0
        %1628 = vmatprep.subr.bf16.mxu0 0
        %1629 = vmatpush1.bf16.msra.mxu0 0
        %1630 = vmatprep.subr.bf16.mxu0 0
        %1631 = vmatpush1.bf16.msra.mxu0 0
        %1632 = vmatprep.subr.bf16.mxu0 0
        %1633 = vmatpush1.bf16.msra.mxu0 0
        %1634 = vmatprep.subr.bf16.mxu0 0
        %1635 = vmatpush1.bf16.msra.mxu0 0
        %1636 = vmatprep.subr.bf16.mxu0 0
        %1637 = vmatpush1.bf16.msra.mxu0 0
        %1638 = vmatprep.subr.bf16.mxu0 0
        %1639 = vmatpush1.bf16.msra.mxu0 0
        %1640 = vmatprep.subr.bf16.mxu0 0
        %1641 = vmatpush1.bf16.msra.mxu0 0
        %1642 = vmatprep.subr.bf16.mxu0 0
        %1643 = vmatpush1.bf16.msra.mxu0 0
        %1644 = vmatprep.subr.bf16.mxu0 0
        %1645 = vmatpush1.bf16.msra.mxu0 0
        %1646 = vmatprep.subr.bf16.mxu0 0
        %1647 = vmatpush1.bf16.msra.mxu0 0
        %1648 = vmatprep.subr.bf16.mxu0 0
        %1649 = vmatpush1.bf16.msra.mxu0 0
        %1650 = vmatprep.subr.bf16.mxu0 0
        %1651 = vmatpush1.bf16.msra.mxu0 0
        %1652 = vmatprep.subr.bf16.mxu0 0
        %1653 = vmatpush1.bf16.msra.mxu0 0
        %1654 = vmatprep.subr.bf16.mxu0 0
        %1655 = vmatpush1.bf16.msra.mxu0 0
        %1656 = vmatprep.mubr.bf16.mxu0 0
        %1657 = vmatmul.mubr.bf16.gmra.mrb[0].mxu0 %v1622
        %v1658 = vpop.f32.mrb[0].mxu0
        %v1659 = vadd.f32 0.0, %v1658
        %v1660 = vpop.f32.mrb[0].mxu0
        %v1661 = vpop.f32.mrb[0].mxu0
        %v1662 = vadd.f32 0.0, %v1661
        %v1663 = vpop.f32.mrb[0].mxu0
        %1664 = vdwg.mxu0
        %1665 = vrot.lane.b32.xlu0 %v1192, 64
        %v1666 = vpop.permute.xlu0 %1665
        %1667 = vrot.lane.b32.xlu0 %v1196, 64
        %v1668 = vpop.permute.xlu0 %1667
        %1669 = vrot.lane.b32.xlu0 %v1194, 64
        %v1670 = vpop.permute.xlu0 %1669
        %1671 = vrot.lane.b32.xlu0 %v1198, 64
        %v1672 = vpop.permute.xlu0 %1671
        %v1673 = vsel %vm1333, %v1666, 0
        %v1675 = vsel %vm1333, %v1668, 0
        %v1677 = vsel %vm1333, %v1670, 0
        %v1679 = vsel %vm1333, %v1672, 0
        %1681 = vmatprep.subr.mxu0 0.0
        %1682 = vmatpush1.xpose.msra.mxu0 %v1677
        %1683 = vmatprep.subr.mxu0 0.0
        %1684 = vmatpush1.xpose.msra.mxu0 %v1679
        %1685 = vmatprep.subr.mxu0 0.0
        %1686 = vmatpush1.xpose.msra.mxu0 0.0
        %1687 = vmatprep.subr.mxu0 0.0
        %1688 = vmatpush1.xpose.msra.mxu0 0.0
        %1689 = vmatprep.subr.mxu0 0.0
        %1690 = vmatpush1.xpose.msra.mxu0 0.0
        %1691 = vmatprep.subr.mxu0 0.0
        %1692 = vmatpush1.xpose.msra.mxu0 0.0
        %1693 = vmatprep.subr.mxu0 0.0
        %1694 = vmatpush1.xpose.msra.mxu0 0.0
        %1695 = vmatprep.subr.mxu0 0.0
        %1696 = vmatpush1.xpose.msra.mxu0 0.0
        %1697 = vmatprep.subr.mxu0 0.0
        %1698 = vmatpush1.xpose.msra.mxu0 0.0
        %1699 = vmatprep.subr.mxu0 0.0
        %1700 = vmatpush1.xpose.msra.mxu0 0.0
        %1701 = vmatprep.subr.mxu0 0.0
        %1702 = vmatpush1.xpose.msra.mxu0 0.0
        %1703 = vmatprep.subr.mxu0 0.0
        %1704 = vmatpush1.xpose.msra.mxu0 0.0
        %1705 = vmatprep.subr.mxu0 0.0
        %1706 = vmatpush1.xpose.msra.mxu0 0.0
        %1707 = vmatprep.subr.mxu0 0.0
        %1708 = vmatpush1.xpose.msra.mxu0 0.0
        %1709 = vmatprep.subr.mxu0 0.0
        %1710 = vmatpush1.xpose.msra.mxu0 0.0
        %1711 = vmatprep.subr.mxu0 0.0
        %1712 = vmatpush1.xpose.msra.mxu0 0.0
        %1713 = vmatprep.subr.mxu0 0.0
        %1714 = vmatpush1.xpose.msra.mxu0 0.0
        %1715 = vmatprep.subr.mxu0 0.0
        %1716 = vmatpush1.xpose.msra.mxu0 0.0
        %1717 = vmatprep.subr.mxu0 0.0
        %1718 = vmatpush1.xpose.msra.mxu0 0.0
        %1719 = vmatprep.subr.mxu0 0.0
        %1720 = vmatpush1.xpose.msra.mxu0 0.0
        %1721 = vmatprep.subr.mxu0 0.0
        %1722 = vmatpush1.xpose.msra.mxu0 0.0
        %1723 = vmatprep.subr.mxu0 0.0
        %1724 = vmatpush1.xpose.msra.mxu0 0.0
        %1725 = vmatprep.subr.mxu0 0.0
        %1726 = vmatpush1.xpose.msra.mxu0 0.0
        %1727 = vmatprep.subr.mxu0 0.0
        %1728 = vmatpush1.xpose.msra.mxu0 0.0
        %1729 = vmatprep.subr.mxu0 0.0
        %1730 = vmatpush1.xpose.msra.mxu0 0.0
        %1731 = vmatprep.subr.mxu0 0.0
        %1732 = vmatpush1.xpose.msra.mxu0 0.0
        %1733 = vmatprep.subr.mxu0 0.0
        %1734 = vmatpush1.xpose.msra.mxu0 0.0
        %1735 = vmatprep.subr.mxu0 0.0
        %1736 = vmatpush1.xpose.msra.mxu0 0.0
        %1737 = vmatprep.subr.mxu0 0.0
        %1738 = vmatpush1.xpose.msra.mxu0 0.0
        %1739 = vmatprep.subr.mxu0 0.0
        %1740 = vmatpush1.xpose.msra.mxu0 0.0
        %1741 = vmatprep.subr.mxu0 0.0
        %1742 = vmatpush1.xpose.msra.mxu0 0.0
        %1743 = vmatprep.subr.mxu0 0.0
        %1744 = vmatpush1.xpose.msra.mxu0 0.0
        %1745 = vmatprep.mubr.f32.mxu0 0.0
        %1746 = vmatmul.mubr.f32.gmra.mrb[0].mxu0 %v1673
        %v1747 = vpop.f32.mrb[0].mxu0
        %v1748 = vadd.f32 0.0, %v1747
        %v1749 = vpop.f32.mrb[0].mxu0
        %1750 = vmatprep.mubr.f32.mxu0 0.0
        %1751 = vmatmul.mubr.f32.gmra.mrb[0].mxu0 %v1675
        %v1752 = vpop.f32.mrb[0].mxu0
        %v1753 = vadd.f32 0.0, %v1752
        %v1754 = vpop.f32.mrb[0].mxu0
        %1755 = vdwg.mxu0
        %v1756 = vmul.f32 %v1748, 0.17677669
        %v1757 = vmul.f32 %v1753, 0.17677669
        %v1758 = vadd.f32 %v1756, %v1427
        %v1759 = vadd.f32 %v1757, %v1427
        %v1760 = vsel %vm1431, %v1758, -inf
        %1761 = vmax.xlane.f32.xlu0 %v1760
        %v1762 = vpop.xlane.xlu0 %1761
        %v1763 = vsel %vm1431, %v1759, -inf
        %1764 = vmax.xlane.f32.xlu0 %v1763
        %v1765 = vpop.xlane.xlu0 %1764
        %v1766 = vsub.f32 %v1758, %v1762
        %v1767 = vsub.f32 %v1759, %v1765
        %v1768 = vmul.f32 %v1766, 1.442695
        %v1769 = vpow.pop %v1768
        %v1770 = vmul.f32 %v1767, 1.442695
        %v1771 = vpow.pop %v1770
        %v1772 = vsel %vm1431, %v1769, 0.0
        %1773 = vadd.xlane.f32.xlu0 %v1772
        %v1774 = vpop.xlane.xlu0 %1773
        %v1775 = vsel %vm1431, %v1771, 0.0
        %1776 = vadd.xlane.f32.xlu0 %v1775
        %v1777 = vpop.xlane.xlu0 %1776
        %v1778 = vrcp.pop %v1774
        %v1779 = vrcp.pop %v1777
        %v1780 = vmul.f32 %v1769, %v1778
        %v1781 = vmul.f32 %v1771, %v1779
        %v1782 = vpack.c.bf16 %v1781, %v1780
        %1783 = vrot.lane.b32.xlu0 %v1330, 64
        %v1784 = vpop.permute.xlu0 %1783
        %v1787 = vsel %vm1431, %v1782, 0
        %1789 = vmatprep.subr.bf16.mxu0 0
        %1790 = vmatpush1.bf16.msra.mxu0 %v1784
        %1791 = vmatprep.subr.bf16.mxu0 0
        %1792 = vmatpush1.bf16.msra.mxu0 0
        %1793 = vmatprep.subr.bf16.mxu0 0
        %1794 = vmatpush1.bf16.msra.mxu0 0
        %1795 = vmatprep.subr.bf16.mxu0 0
        %1796 = vmatpush1.bf16.msra.mxu0 0
        %1797 = vmatprep.subr.bf16.mxu0 0
        %1798 = vmatpush1.bf16.msra.mxu0 0
        %1799 = vmatprep.subr.bf16.mxu0 0
        %1800 = vmatpush1.bf16.msra.mxu0 0
        %1801 = vmatprep.subr.bf16.mxu0 0
        %1802 = vmatpush1.bf16.msra.mxu0 0
        %1803 = vmatprep.subr.bf16.mxu0 0
        %1804 = vmatpush1.bf16.msra.mxu0 0
        %1805 = vmatprep.subr.bf16.mxu0 0
        %1806 = vmatpush1.bf16.msra.mxu0 0
        %1807 = vmatprep.subr.bf16.mxu0 0
        %1808 = vmatpush1.bf16.msra.mxu0 0
        %1809 = vmatprep.subr.bf16.mxu0 0
        %1810 = vmatpush1.bf16.msra.mxu0 0
        %1811 = vmatprep.subr.bf16.mxu0 0
        %1812 = vmatpush1.bf16.msra.mxu0 0
        %1813 = vmatprep.subr.bf16.mxu0 0
        %1814 = vmatpush1.bf16.msra.mxu0 0
        %1815 = vmatprep.subr.bf16.mxu0 0
        %1816 = vmatpush1.bf16.msra.mxu0 0
        %1817 = vmatprep.subr.bf16.mxu0 0
        %1818 = vmatpush1.bf16.msra.mxu0 0
        %1819 = vmatprep.subr.bf16.mxu0 0
        %1820 = vmatpush1.bf16.msra.mxu0 0
        %1821 = vmatprep.mubr.bf16.mxu0 0
        %1822 = vmatmul.mubr.bf16.gmra.mrb[0].mxu0 %v1787
        %v1823 = vpop.f32.mrb[0].mxu0
        %v1824 = vadd.f32 0.0, %v1823
        %v1825 = vpop.f32.mrb[0].mxu0
        %v1826 = vpop.f32.mrb[0].mxu0
        %v1827 = vadd.f32 0.0, %v1826
        %v1828 = vpop.f32.mrb[0].mxu0
        %1829 = vdwg.mxu0
        %1830 = vrot.lane.b32.xlu0 %v1192, 32
        %v1831 = vpop.permute.xlu0 %1830
        %1832 = vrot.lane.b32.xlu0 %v1196, 32
        %v1833 = vpop.permute.xlu0 %1832
        %1834 = vrot.lane.b32.xlu0 %v1194, 32
        %v1835 = vpop.permute.xlu0 %1834
        %1836 = vrot.lane.b32.xlu0 %v1198, 32
        %v1837 = vpop.permute.xlu0 %1836
        %v1838 = vsel %vm1333, %v1831, 0
        %v1840 = vsel %vm1333, %v1833, 0
        %v1842 = vsel %vm1333, %v1835, 0
        %v1844 = vsel %vm1333, %v1837, 0
        %1846 = vmatprep.subr.mxu0 0.0
        %1847 = vmatpush1.xpose.msra.mxu0 %v1842
        %1848 = vmatprep.subr.mxu0 0.0
        %1849 = vmatpush1.xpose.msra.mxu0 %v1844
        %1850 = vmatprep.subr.mxu0 0.0
        %1851 = vmatpush1.xpose.msra.mxu0 0.0
        %1852 = vmatprep.subr.mxu0 0.0
        %1853 = vmatpush1.xpose.msra.mxu0 0.0
        %1854 = vmatprep.subr.mxu0 0.0
        %1855 = vmatpush1.xpose.msra.mxu0 0.0
        %1856 = vmatprep.subr.mxu0 0.0
        %1857 = vmatpush1.xpose.msra.mxu0 0.0
        %1858 = vmatprep.subr.mxu0 0.0
        %1859 = vmatpush1.xpose.msra.mxu0 0.0
        %1860 = vmatprep.subr.mxu0 0.0
        %1861 = vmatpush1.xpose.msra.mxu0 0.0
        %1862 = vmatprep.subr.mxu0 0.0
        %1863 = vmatpush1.xpose.msra.mxu0 0.0
        %1864 = vmatprep.subr.mxu0 0.0
        %1865 = vmatpush1.xpose.msra.mxu0 0.0
        %1866 = vmatprep.subr.mxu0 0.0
        %1867 = vmatpush1.xpose.msra.mxu0 0.0
        %1868 = vmatprep.subr.mxu0 0.0
        %1869 = vmatpush1.xpose.msra.mxu0 0.0
        %1870 = vmatprep.subr.mxu0 0.0
        %1871 = vmatpush1.xpose.msra.mxu0 0.0
        %1872 = vmatprep.subr.mxu0 0.0
        %1873 = vmatpush1.xpose.msra.mxu0 0.0
        %1874 = vmatprep.subr.mxu0 0.0
        %1875 = vmatpush1.xpose.msra.mxu0 0.0
        %1876 = vmatprep.subr.mxu0 0.0
        %1877 = vmatpush1.xpose.msra.mxu0 0.0
        %1878 = vmatprep.subr.mxu0 0.0
        %1879 = vmatpush1.xpose.msra.mxu0 0.0
        %1880 = vmatprep.subr.mxu0 0.0
        %1881 = vmatpush1.xpose.msra.mxu0 0.0
        %1882 = vmatprep.subr.mxu0 0.0
        %1883 = vmatpush1.xpose.msra.mxu0 0.0
        %1884 = vmatprep.subr.mxu0 0.0
        %1885 = vmatpush1.xpose.msra.mxu0 0.0
        %1886 = vmatprep.subr.mxu0 0.0
        %1887 = vmatpush1.xpose.msra.mxu0 0.0
        %1888 = vmatprep.subr.mxu0 0.0
        %1889 = vmatpush1.xpose.msra.mxu0 0.0
        %1890 = vmatprep.subr.mxu0 0.0
        %1891 = vmatpush1.xpose.msra.mxu0 0.0
        %1892 = vmatprep.subr.mxu0 0.0
        %1893 = vmatpush1.xpose.msra.mxu0 0.0
        %1894 = vmatprep.subr.mxu0 0.0
        %1895 = vmatpush1.xpose.msra.mxu0 0.0
        %1896 = vmatprep.subr.mxu0 0.0
        %1897 = vmatpush1.xpose.msra.mxu0 0.0
        %1898 = vmatprep.subr.mxu0 0.0
        %1899 = vmatpush1.xpose.msra.mxu0 0.0
        %1900 = vmatprep.subr.mxu0 0.0
        %1901 = vmatpush1.xpose.msra.mxu0 0.0
        %1902 = vmatprep.subr.mxu0 0.0
        %1903 = vmatpush1.xpose.msra.mxu0 0.0
        %1904 = vmatprep.subr.mxu0 0.0
        %1905 = vmatpush1.xpose.msra.mxu0 0.0
        %1906 = vmatprep.subr.mxu0 0.0
        %1907 = vmatpush1.xpose.msra.mxu0 0.0
        %1908 = vmatprep.subr.mxu0 0.0
        %1909 = vmatpush1.xpose.msra.mxu0 0.0
        %1910 = vmatprep.mubr.f32.mxu0 0.0
        %1911 = vmatmul.mubr.f32.gmra.mrb[0].mxu0 %v1838
        %v1912 = vpop.f32.mrb[0].mxu0
        %v1913 = vadd.f32 0.0, %v1912
        %v1914 = vpop.f32.mrb[0].mxu0
        %1915 = vmatprep.mubr.f32.mxu0 0.0
        %1916 = vmatmul.mubr.f32.gmra.mrb[0].mxu0 %v1840
        %v1917 = vpop.f32.mrb[0].mxu0
        %v1918 = vadd.f32 0.0, %v1917
        %v1919 = vpop.f32.mrb[0].mxu0
        %1920 = vdwg.mxu0
        %v1921 = vmul.f32 %v1913, 0.17677669
        %v1922 = vmul.f32 %v1918, 0.17677669
        %v1923 = vadd.f32 %v1921, %v1427
        %v1924 = vadd.f32 %v1922, %v1427
        %v1925 = vsel %vm1431, %v1923, -inf
        %1926 = vmax.xlane.f32.xlu0 %v1925
        %v1927 = vpop.xlane.xlu0 %1926
        %v1928 = vsel %vm1431, %v1924, -inf
        %1929 = vmax.xlane.f32.xlu0 %v1928
        %v1930 = vpop.xlane.xlu0 %1929
        %v1931 = vsub.f32 %v1923, %v1927
        %v1932 = vsub.f32 %v1924, %v1930
        %v1933 = vmul.f32 %v1931, 1.442695
        %v1934 = vpow.pop %v1933
        %v1935 = vmul.f32 %v1932, 1.442695
        %v1936 = vpow.pop %v1935
        %v1937 = vsel %vm1431, %v1934, 0.0
        %1938 = vadd.xlane.f32.xlu0 %v1937
        %v1939 = vpop.xlane.xlu0 %1938
        %v1940 = vsel %vm1431, %v1936, 0.0
        %1941 = vadd.xlane.f32.xlu0 %v1940
        %v1942 = vpop.xlane.xlu0 %1941
        %v1943 = vrcp.pop %v1939
        %v1944 = vrcp.pop %v1942
        %v1945 = vmul.f32 %v1934, %v1943
        %v1946 = vmul.f32 %v1936, %v1944
        %v1947 = vpack.c.bf16 %v1946, %v1945
        %1948 = vrot.lane.b32.xlu0 %v1330, 32
        %v1949 = vpop.permute.xlu0 %1948
        %v1952 = vsel %vm1431, %v1947, 0
        %1954 = vmatprep.subr.bf16.mxu0 0
        %1955 = vmatpush1.bf16.msra.mxu0 %v1949
        %1956 = vmatprep.subr.bf16.mxu0 0
        %1957 = vmatpush1.bf16.msra.mxu0 0
        %1958 = vmatprep.subr.bf16.mxu0 0
        %1959 = vmatpush1.bf16.msra.mxu0 0
        %1960 = vmatprep.subr.bf16.mxu0 0
        %1961 = vmatpush1.bf16.msra.mxu0 0
        %1962 = vmatprep.subr.bf16.mxu0 0
        %1963 = vmatpush1.bf16.msra.mxu0 0
        %1964 = vmatprep.subr.bf16.mxu0 0
        %1965 = vmatpush1.bf16.msra.mxu0 0
        %1966 = vmatprep.subr.bf16.mxu0 0
        %1967 = vmatpush1.bf16.msra.mxu0 0
        %1968 = vmatprep.subr.bf16.mxu0 0
        %1969 = vmatpush1.bf16.msra.mxu0 0
        %1970 = vmatprep.subr.bf16.mxu0 0
        %1971 = vmatpush1.bf16.msra.mxu0 0
        %1972 = vmatprep.subr.bf16.mxu0 0
        %1973 = vmatpush1.bf16.msra.mxu0 0
        %1974 = vmatprep.subr.bf16.mxu0 0
        %1975 = vmatpush1.bf16.msra.mxu0 0
        %1976 = vmatprep.subr.bf16.mxu0 0
        %1977 = vmatpush1.bf16.msra.mxu0 0
        %1978 = vmatprep.subr.bf16.mxu0 0
        %1979 = vmatpush1.bf16.msra.mxu0 0
        %1980 = vmatprep.subr.bf16.mxu0 0
        %1981 = vmatpush1.bf16.msra.mxu0 0
        %1982 = vmatprep.subr.bf16.mxu0 0
        %1983 = vmatpush1.bf16.msra.mxu0 0
        %1984 = vmatprep.subr.bf16.mxu0 0
        %1985 = vmatpush1.bf16.msra.mxu0 0
        %1986 = vmatprep.mubr.bf16.mxu0 0
        %1987 = vmatmul.mubr.bf16.gmra.mrb[0].mxu0 %v1952
        %v1988 = vpop.f32.mrb[0].mxu0
        %v1989 = vadd.f32 0.0, %v1988
        %v1990 = vpop.f32.mrb[0].mxu0
        %v1991 = vpop.f32.mrb[0].mxu0
        %v1992 = vadd.f32 0.0, %v1991
        %v1993 = vpop.f32.mrb[0].mxu0
        %1994 = vdwg.mxu0
        %1997 = vrot.lane.b32.xlu0 %v1659, 32
        %v1998 = vpop.permute.xlu0 %1997
        %1999 = vrot.lane.b32.xlu0 %v1662, 32
        %v2000 = vpop.permute.xlu0 %1999
        %2005 = vrot.lane.b32.xlu0 %v1824, 64
        %v2006 = vpop.permute.xlu0 %2005
        %2007 = vrot.lane.b32.xlu0 %v1827, 64
        %v2008 = vpop.permute.xlu0 %2007
        %2013 = vrot.lane.b32.xlu0 %v1989, 96
        %v2014 = vpop.permute.xlu0 %2013
        %2015 = vrot.lane.b32.xlu0 %v1992, 96
        %v2016 = vpop.permute.xlu0 %2015
        %v2019 = vsel %vm1333, %v1493, %v1998
        %v2020 = vsel %vm1333, %v1496, %v2000
        %vm2021 = vcmask 523264
        %v2022 = vsel %vm2021, %v2019, %v2006
        %v2023 = vsel %vm2021, %v2020, %v2008
        %vm2024 = vcmask 785408
        %v2025 = vsel %vm2024, %v2022, %v2014
        %v2026 = vsel %vm2024, %v2023, %v2016
        %s2027 = scalar_lea.vmem %s988, 1
        %v2028 = vld [vmem:[%s2027] sm:$0x1]
        %v2030 = vsel %vm1333, %v1202, 0
        %v2033 = vsel %vm1333, %v1206, 0
        %v2036 = vsel %vm1333, %v1204, 0
        %v2039 = vsel %vm1333, %v1208, 0
        %2041 = vmatprep.subr.mxu0 0.0
        %2042 = vmatpush1.xpose.msra.mxu0 %v2036
        %2043 = vmatprep.subr.mxu0 0.0
        %2044 = vmatpush1.xpose.msra.mxu0 %v2039
        %2045 = vmatprep.subr.mxu0 0.0
        %2046 = vmatpush1.xpose.msra.mxu0 0.0
        %2047 = vmatprep.subr.mxu0 0.0
        %2048 = vmatpush1.xpose.msra.mxu0 0.0
        %2049 = vmatprep.subr.mxu0 0.0
        %2050 = vmatpush1.xpose.msra.mxu0 0.0
        %2051 = vmatprep.subr.mxu0 0.0
        %2052 = vmatpush1.xpose.msra.mxu0 0.0
        %2053 = vmatprep.subr.mxu0 0.0
        %2054 = vmatpush1.xpose.msra.mxu0 0.0
        %2055 = vmatprep.subr.mxu0 0.0
        %2056 = vmatpush1.xpose.msra.mxu0 0.0
        %2057 = vmatprep.subr.mxu0 0.0
        %2058 = vmatpush1.xpose.msra.mxu0 0.0
        %2059 = vmatprep.subr.mxu0 0.0
        %2060 = vmatpush1.xpose.msra.mxu0 0.0
        %2061 = vmatprep.subr.mxu0 0.0
        %2062 = vmatpush1.xpose.msra.mxu0 0.0
        %2063 = vmatprep.subr.mxu0 0.0
        %2064 = vmatpush1.xpose.msra.mxu0 0.0
        %2065 = vmatprep.subr.mxu0 0.0
        %2066 = vmatpush1.xpose.msra.mxu0 0.0
        %2067 = vmatprep.subr.mxu0 0.0
        %2068 = vmatpush1.xpose.msra.mxu0 0.0
        %2069 = vmatprep.subr.mxu0 0.0
        %2070 = vmatpush1.xpose.msra.mxu0 0.0
        %2071 = vmatprep.subr.mxu0 0.0
        %2072 = vmatpush1.xpose.msra.mxu0 0.0
        %2073 = vmatprep.subr.mxu0 0.0
        %2074 = vmatpush1.xpose.msra.mxu0 0.0
        %2075 = vmatprep.subr.mxu0 0.0
        %2076 = vmatpush1.xpose.msra.mxu0 0.0
        %2077 = vmatprep.subr.mxu0 0.0
        %2078 = vmatpush1.xpose.msra.mxu0 0.0
        %2079 = vmatprep.subr.mxu0 0.0
        %2080 = vmatpush1.xpose.msra.mxu0 0.0
        %2081 = vmatprep.subr.mxu0 0.0
        %2082 = vmatpush1.xpose.msra.mxu0 0.0
        %2083 = vmatprep.subr.mxu0 0.0
        %2084 = vmatpush1.xpose.msra.mxu0 0.0
        %2085 = vmatprep.subr.mxu0 0.0
        %2086 = vmatpush1.xpose.msra.mxu0 0.0
        %2087 = vmatprep.subr.mxu0 0.0
        %2088 = vmatpush1.xpose.msra.mxu0 0.0
        %2089 = vmatprep.subr.mxu0 0.0
        %2090 = vmatpush1.xpose.msra.mxu0 0.0
        %2091 = vmatprep.subr.mxu0 0.0
        %2092 = vmatpush1.xpose.msra.mxu0 0.0
        %2093 = vmatprep.subr.mxu0 0.0
        %2094 = vmatpush1.xpose.msra.mxu0 0.0
        %2095 = vmatprep.subr.mxu0 0.0
        %2096 = vmatpush1.xpose.msra.mxu0 0.0
        %2097 = vmatprep.subr.mxu0 0.0
        %2098 = vmatpush1.xpose.msra.mxu0 0.0
        %2099 = vmatprep.subr.mxu0 0.0
        %2100 = vmatpush1.xpose.msra.mxu0 0.0
        %2101 = vmatprep.subr.mxu0 0.0
        %2102 = vmatpush1.xpose.msra.mxu0 0.0
        %2103 = vmatprep.subr.mxu0 0.0
        %2104 = vmatpush1.xpose.msra.mxu0 0.0
        %2105 = vmatprep.mubr.f32.mxu0 0.0
        %2106 = vmatmul.mubr.f32.gmra.mrb[0].mxu0 %v2030
        %v2107 = vpop.f32.mrb[0].mxu0
        %v2108 = vadd.f32 0.0, %v2107
        %v2109 = vpop.f32.mrb[0].mxu0
        %2110 = vmatprep.mubr.f32.mxu0 0.0
        %2111 = vmatmul.mubr.f32.gmra.mrb[0].mxu0 %v2033
        %v2112 = vpop.f32.mrb[0].mxu0
        %v2113 = vadd.f32 0.0, %v2112
        %v2114 = vpop.f32.mrb[0].mxu0
        %2115 = vdwg.mxu0
        %v2116 = vmul.f32 %v2108, 0.17677669
        %v2117 = vmul.f32 %v2113, 0.17677669
        %v2119 = vlaneseq
        %v2120 = vshrl.u32 %v2119, 7
        %v2121 = vsub.s32 0, %v2120
        %v2122 = vrot.slane %v2028, %v2121
        %v2124 = vadd.f32 %v2116, %v2122
        %v2125 = vadd.f32 %v2117, %v2122
        %v2126 = vsel %vm1431, %v2124, -inf
        %2127 = vmax.xlane.f32.xlu0 %v2126
        %v2128 = vpop.xlane.xlu0 %2127
        %v2129 = vsel %vm1431, %v2125, -inf
        %2130 = vmax.xlane.f32.xlu0 %v2129
        %v2131 = vpop.xlane.xlu0 %2130
        %v2132 = vsub.f32 %v2124, %v2128
        %v2133 = vsub.f32 %v2125, %v2131
        %v2134 = vmul.f32 %v2132, 1.442695
        %v2135 = vpow.pop %v2134
        %v2136 = vmul.f32 %v2133, 1.442695
        %v2137 = vpow.pop %v2136
        %v2138 = vsel %vm1431, %v2135, 0.0
        %2139 = vadd.xlane.f32.xlu0 %v2138
        %v2140 = vpop.xlane.xlu0 %2139
        %v2141 = vsel %vm1431, %v2137, 0.0
        %2142 = vadd.xlane.f32.xlu0 %v2141
        %v2143 = vpop.xlane.xlu0 %2142
        %v2144 = vrcp.pop %v2140
        %v2145 = vrcp.pop %v2143
        %v2146 = vmul.f32 %v2135, %v2144
        %v2147 = vmul.f32 %v2137, %v2145
        %v2148 = vpack.c.bf16 %v2147, %v2146
        %v2150 = vsel %vm1431, %v2148, 0
        %2152 = vmatprep.subr.bf16.mxu0 0
        %2153 = vmatpush1.bf16.msra.mxu0 %v1331
        %2154 = vmatprep.subr.bf16.mxu0 0
        %2155 = vmatpush1.bf16.msra.mxu0 0
        %2156 = vmatprep.subr.bf16.mxu0 0
        %2157 = vmatpush1.bf16.msra.mxu0 0
        %2158 = vmatprep.subr.bf16.mxu0 0
        %2159 = vmatpush1.bf16.msra.mxu0 0
        %2160 = vmatprep.subr.bf16.mxu0 0
        %2161 = vmatpush1.bf16.msra.mxu0 0
        %2162 = vmatprep.subr.bf16.mxu0 0
        %2163 = vmatpush1.bf16.msra.mxu0 0
        %2164 = vmatprep.subr.bf16.mxu0 0
        %2165 = vmatpush1.bf16.msra.mxu0 0
        %2166 = vmatprep.subr.bf16.mxu0 0
        %2167 = vmatpush1.bf16.msra.mxu0 0
        %2168 = vmatprep.subr.bf16.mxu0 0
        %2169 = vmatpush1.bf16.msra.mxu0 0
        %2170 = vmatprep.subr.bf16.mxu0 0
        %2171 = vmatpush1.bf16.msra.mxu0 0
        %2172 = vmatprep.subr.bf16.mxu0 0
        %2173 = vmatpush1.bf16.msra.mxu0 0
        %2174 = vmatprep.subr.bf16.mxu0 0
        %2175 = vmatpush1.bf16.msra.mxu0 0
        %2176 = vmatprep.subr.bf16.mxu0 0
        %2177 = vmatpush1.bf16.msra.mxu0 0
        %2178 = vmatprep.subr.bf16.mxu0 0
        %2179 = vmatpush1.bf16.msra.mxu0 0
        %2180 = vmatprep.subr.bf16.mxu0 0
        %2181 = vmatpush1.bf16.msra.mxu0 0
        %2182 = vmatprep.subr.bf16.mxu0 0
        %2183 = vmatpush1.bf16.msra.mxu0 0
        %2184 = vmatprep.mubr.bf16.mxu0 0
        %2185 = vmatmul.mubr.bf16.gmra.mrb[0].mxu0 %v2150
        %v2186 = vpop.f32.mrb[0].mxu0
        %v2187 = vadd.f32 0.0, %v2186
        %v2188 = vpop.f32.mrb[0].mxu0
        %v2189 = vpop.f32.mrb[0].mxu0
        %v2190 = vadd.f32 0.0, %v2189
        %v2191 = vpop.f32.mrb[0].mxu0
        %2192 = vdwg.mxu0
        %2193 = vrot.lane.b32.xlu0 %v1202, 96
        %v2194 = vpop.permute.xlu0 %2193
        %2195 = vrot.lane.b32.xlu0 %v1206, 96
        %v2196 = vpop.permute.xlu0 %2195
        %2197 = vrot.lane.b32.xlu0 %v1204, 96
        %v2198 = vpop.permute.xlu0 %2197
        %2199 = vrot.lane.b32.xlu0 %v1208, 96
        %v2200 = vpop.permute.xlu0 %2199
        %v2201 = vsel %vm1333, %v2194, 0
        %v2203 = vsel %vm1333, %v2196, 0
        %v2205 = vsel %vm1333, %v2198, 0
        %v2207 = vsel %vm1333, %v2200, 0
        %2209 = vmatprep.subr.mxu0 0.0
        %2210 = vmatpush1.xpose.msra.mxu0 %v2205
        %2211 = vmatprep.subr.mxu0 0.0
        %2212 = vmatpush1.xpose.msra.mxu0 %v2207
        %2213 = vmatprep.subr.mxu0 0.0
        %2214 = vmatpush1.xpose.msra.mxu0 0.0
        %2215 = vmatprep.subr.mxu0 0.0
        %2216 = vmatpush1.xpose.msra.mxu0 0.0
        %2217 = vmatprep.subr.mxu0 0.0
        %2218 = vmatpush1.xpose.msra.mxu0 0.0
        %2219 = vmatprep.subr.mxu0 0.0
        %2220 = vmatpush1.xpose.msra.mxu0 0.0
        %2221 = vmatprep.subr.mxu0 0.0
        %2222 = vmatpush1.xpose.msra.mxu0 0.0
        %2223 = vmatprep.subr.mxu0 0.0
        %2224 = vmatpush1.xpose.msra.mxu0 0.0
        %2225 = vmatprep.subr.mxu0 0.0
        %2226 = vmatpush1.xpose.msra.mxu0 0.0
        %2227 = vmatprep.subr.mxu0 0.0
        %2228 = vmatpush1.xpose.msra.mxu0 0.0
        %2229 = vmatprep.subr.mxu0 0.0
        %2230 = vmatpush1.xpose.msra.mxu0 0.0
        %2231 = vmatprep.subr.mxu0 0.0
        %2232 = vmatpush1.xpose.msra.mxu0 0.0
        %2233 = vmatprep.subr.mxu0 0.0
        %2234 = vmatpush1.xpose.msra.mxu0 0.0
        %2235 = vmatprep.subr.mxu0 0.0
        %2236 = vmatpush1.xpose.msra.mxu0 0.0
        %2237 = vmatprep.subr.mxu0 0.0
        %2238 = vmatpush1.xpose.msra.mxu0 0.0
        %2239 = vmatprep.subr.mxu0 0.0
        %2240 = vmatpush1.xpose.msra.mxu0 0.0
        %2241 = vmatprep.subr.mxu0 0.0
        %2242 = vmatpush1.xpose.msra.mxu0 0.0
        %2243 = vmatprep.subr.mxu0 0.0
        %2244 = vmatpush1.xpose.msra.mxu0 0.0
        %2245 = vmatprep.subr.mxu0 0.0
        %2246 = vmatpush1.xpose.msra.mxu0 0.0
        %2247 = vmatprep.subr.mxu0 0.0
        %2248 = vmatpush1.xpose.msra.mxu0 0.0
        %2249 = vmatprep.subr.mxu0 0.0
        %2250 = vmatpush1.xpose.msra.mxu0 0.0
        %2251 = vmatprep.subr.mxu0 0.0
        %2252 = vmatpush1.xpose.msra.mxu0 0.0
        %2253 = vmatprep.subr.mxu0 0.0
        %2254 = vmatpush1.xpose.msra.mxu0 0.0
        %2255 = vmatprep.subr.mxu0 0.0
        %2256 = vmatpush1.xpose.msra.mxu0 0.0
        %2257 = vmatprep.subr.mxu0 0.0
        %2258 = vmatpush1.xpose.msra.mxu0 0.0
        %2259 = vmatprep.subr.mxu0 0.0
        %2260 = vmatpush1.xpose.msra.mxu0 0.0
        %2261 = vmatprep.subr.mxu0 0.0
        %2262 = vmatpush1.xpose.msra.mxu0 0.0
        %2263 = vmatprep.subr.mxu0 0.0
        %2264 = vmatpush1.xpose.msra.mxu0 0.0
        %2265 = vmatprep.subr.mxu0 0.0
        %2266 = vmatpush1.xpose.msra.mxu0 0.0
        %2267 = vmatprep.subr.mxu0 0.0
        %2268 = vmatpush1.xpose.msra.mxu0 0.0
        %2269 = vmatprep.subr.mxu0 0.0
        %2270 = vmatpush1.xpose.msra.mxu0 0.0
        %2271 = vmatprep.subr.mxu0 0.0
        %2272 = vmatpush1.xpose.msra.mxu0 0.0
        %2273 = vmatprep.mubr.f32.mxu0 0.0
        %2274 = vmatmul.mubr.f32.gmra.mrb[0].mxu0 %v2201
        %v2275 = vpop.f32.mrb[0].mxu0
        %v2276 = vadd.f32 0.0, %v2275
        %v2277 = vpop.f32.mrb[0].mxu0
        %2278 = vmatprep.mubr.f32.mxu0 0.0
        %2279 = vmatmul.mubr.f32.gmra.mrb[0].mxu0 %v2203
        %v2280 = vpop.f32.mrb[0].mxu0
        %v2281 = vadd.f32 0.0, %v2280
        %v2282 = vpop.f32.mrb[0].mxu0
        %2283 = vdwg.mxu0
        %v2284 = vmul.f32 %v2276, 0.17677669
        %v2285 = vmul.f32 %v2281, 0.17677669
        %v2286 = vadd.f32 %v2284, %v2122
        %v2287 = vadd.f32 %v2285, %v2122
        %v2288 = vsel %vm1431, %v2286, -inf
        %2289 = vmax.xlane.f32.xlu0 %v2288
        %v2290 = vpop.xlane.xlu0 %2289
        %v2291 = vsel %vm1431, %v2287, -inf
        %2292 = vmax.xlane.f32.xlu0 %v2291
        %v2293 = vpop.xlane.xlu0 %2292
        %v2294 = vsub.f32 %v2286, %v2290
        %v2295 = vsub.f32 %v2287, %v2293
        %v2296 = vmul.f32 %v2294, 1.442695
        %v2297 = vpow.pop %v2296
        %v2298 = vmul.f32 %v2295, 1.442695
        %v2299 = vpow.pop %v2298
        %v2300 = vsel %vm1431, %v2297, 0.0
        %2301 = vadd.xlane.f32.xlu0 %v2300
        %v2302 = vpop.xlane.xlu0 %2301
        %v2303 = vsel %vm1431, %v2299, 0.0
        %2304 = vadd.xlane.f32.xlu0 %v2303
        %v2305 = vpop.xlane.xlu0 %2304
        %v2306 = vrcp.pop %v2302
        %v2307 = vrcp.pop %v2305
        %v2308 = vmul.f32 %v2297, %v2306
        %v2309 = vmul.f32 %v2299, %v2307
        %v2310 = vpack.c.bf16 %v2309, %v2308
        %2312 = vrot.lane.b32.xlu0 %v1331, 96
        %v2313 = vpop.permute.xlu0 %2312
        %v2316 = vsel %vm1431, %v2310, 0
        %2318 = vmatprep.subr.bf16.mxu0 0
        %2319 = vmatpush1.bf16.msra.mxu0 %v2313
        %2320 = vmatprep.subr.bf16.mxu0 0
        %2321 = vmatpush1.bf16.msra.mxu0 0
        %2322 = vmatprep.subr.bf16.mxu0 0
        %2323 = vmatpush1.bf16.msra.mxu0 0
        %2324 = vmatprep.subr.bf16.mxu0 0
        %2325 = vmatpush1.bf16.msra.mxu0 0
        %2326 = vmatprep.subr.bf16.mxu0 0
        %2327 = vmatpush1.bf16.msra.mxu0 0
        %2328 = vmatprep.subr.bf16.mxu0 0
        %2329 = vmatpush1.bf16.msra.mxu0 0
        %2330 = vmatprep.subr.bf16.mxu0 0
        %2331 = vmatpush1.bf16.msra.mxu0 0
        %2332 = vmatprep.subr.bf16.mxu0 0
        %2333 = vmatpush1.bf16.msra.mxu0 0
        %2334 = vmatprep.subr.bf16.mxu0 0
        %2335 = vmatpush1.bf16.msra.mxu0 0
        %2336 = vmatprep.subr.bf16.mxu0 0
        %2337 = vmatpush1.bf16.msra.mxu0 0
        %2338 = vmatprep.subr.bf16.mxu0 0
        %2339 = vmatpush1.bf16.msra.mxu0 0
        %2340 = vmatprep.subr.bf16.mxu0 0
        %2341 = vmatpush1.bf16.msra.mxu0 0
        %2342 = vmatprep.subr.bf16.mxu0 0
        %2343 = vmatpush1.bf16.msra.mxu0 0
        %2344 = vmatprep.subr.bf16.mxu0 0
        %2345 = vmatpush1.bf16.msra.mxu0 0
        %2346 = vmatprep.subr.bf16.mxu0 0
        %2347 = vmatpush1.bf16.msra.mxu0 0
        %2348 = vmatprep.subr.bf16.mxu0 0
        %2349 = vmatpush1.bf16.msra.mxu0 0
        %2350 = vmatprep.mubr.bf16.mxu0 0
        %2351 = vmatmul.mubr.bf16.gmra.mrb[0].mxu0 %v2316
        %v2352 = vpop.f32.mrb[0].mxu0
        %v2353 = vadd.f32 0.0, %v2352
        %v2354 = vpop.f32.mrb[0].mxu0
        %v2355 = vpop.f32.mrb[0].mxu0
        %v2356 = vadd.f32 0.0, %v2355
        %v2357 = vpop.f32.mrb[0].mxu0
        %2358 = vdwg.mxu0
        %2359 = vrot.lane.b32.xlu0 %v1202, 64
        %v2360 = vpop.permute.xlu0 %2359
        %2361 = vrot.lane.b32.xlu0 %v1206, 64
        %v2362 = vpop.permute.xlu0 %2361
        %2363 = vrot.lane.b32.xlu0 %v1204, 64
        %v2364 = vpop.permute.xlu0 %2363
        %2365 = vrot.lane.b32.xlu0 %v1208, 64
        %v2366 = vpop.permute.xlu0 %2365
        %v2367 = vsel %vm1333, %v2360, 0
        %v2369 = vsel %vm1333, %v2362, 0
        %v2371 = vsel %vm1333, %v2364, 0
        %v2373 = vsel %vm1333, %v2366, 0
        %2375 = vmatprep.subr.mxu0 0.0
        %2376 = vmatpush1.xpose.msra.mxu0 %v2371
        %2377 = vmatprep.subr.mxu0 0.0
        %2378 = vmatpush1.xpose.msra.mxu0 %v2373
        %2379 = vmatprep.subr.mxu0 0.0
        %2380 = vmatpush1.xpose.msra.mxu0 0.0
        %2381 = vmatprep.subr.mxu0 0.0
        %2382 = vmatpush1.xpose.msra.mxu0 0.0
        %2383 = vmatprep.subr.mxu0 0.0
        %2384 = vmatpush1.xpose.msra.mxu0 0.0
        %2385 = vmatprep.subr.mxu0 0.0
        %2386 = vmatpush1.xpose.msra.mxu0 0.0
        %2387 = vmatprep.subr.mxu0 0.0
        %2388 = vmatpush1.xpose.msra.mxu0 0.0
        %2389 = vmatprep.subr.mxu0 0.0
        %2390 = vmatpush1.xpose.msra.mxu0 0.0
        %2391 = vmatprep.subr.mxu0 0.0
        %2392 = vmatpush1.xpose.msra.mxu0 0.0
        %2393 = vmatprep.subr.mxu0 0.0
        %2394 = vmatpush1.xpose.msra.mxu0 0.0
        %2395 = vmatprep.subr.mxu0 0.0
        %2396 = vmatpush1.xpose.msra.mxu0 0.0
        %2397 = vmatprep.subr.mxu0 0.0
        %2398 = vmatpush1.xpose.msra.mxu0 0.0
        %2399 = vmatprep.subr.mxu0 0.0
        %2400 = vmatpush1.xpose.msra.mxu0 0.0
        %2401 = vmatprep.subr.mxu0 0.0
        %2402 = vmatpush1.xpose.msra.mxu0 0.0
        %2403 = vmatprep.subr.mxu0 0.0
        %2404 = vmatpush1.xpose.msra.mxu0 0.0
        %2405 = vmatprep.subr.mxu0 0.0
        %2406 = vmatpush1.xpose.msra.mxu0 0.0
        %2407 = vmatprep.subr.mxu0 0.0
        %2408 = vmatpush1.xpose.msra.mxu0 0.0
        %2409 = vmatprep.subr.mxu0 0.0
        %2410 = vmatpush1.xpose.msra.mxu0 0.0
        %2411 = vmatprep.subr.mxu0 0.0
        %2412 = vmatpush1.xpose.msra.mxu0 0.0
        %2413 = vmatprep.subr.mxu0 0.0
        %2414 = vmatpush1.xpose.msra.mxu0 0.0
        %2415 = vmatprep.subr.mxu0 0.0
        %2416 = vmatpush1.xpose.msra.mxu0 0.0
        %2417 = vmatprep.subr.mxu0 0.0
        %2418 = vmatpush1.xpose.msra.mxu0 0.0
        %2419 = vmatprep.subr.mxu0 0.0
        %2420 = vmatpush1.xpose.msra.mxu0 0.0
        %2421 = vmatprep.subr.mxu0 0.0
        %2422 = vmatpush1.xpose.msra.mxu0 0.0
        %2423 = vmatprep.subr.mxu0 0.0
        %2424 = vmatpush1.xpose.msra.mxu0 0.0
        %2425 = vmatprep.subr.mxu0 0.0
        %2426 = vmatpush1.xpose.msra.mxu0 0.0
        %2427 = vmatprep.subr.mxu0 0.0
        %2428 = vmatpush1.xpose.msra.mxu0 0.0
        %2429 = vmatprep.subr.mxu0 0.0
        %2430 = vmatpush1.xpose.msra.mxu0 0.0
        %2431 = vmatprep.subr.mxu0 0.0
        %2432 = vmatpush1.xpose.msra.mxu0 0.0
        %2433 = vmatprep.subr.mxu0 0.0
        %2434 = vmatpush1.xpose.msra.mxu0 0.0
        %2435 = vmatprep.subr.mxu0 0.0
        %2436 = vmatpush1.xpose.msra.mxu0 0.0
        %2437 = vmatprep.subr.mxu0 0.0
        %2438 = vmatpush1.xpose.msra.mxu0 0.0
        %2439 = vmatprep.mubr.f32.mxu0 0.0
        %2440 = vmatmul.mubr.f32.gmra.mrb[0].mxu0 %v2367
        %v2441 = vpop.f32.mrb[0].mxu0
        %v2442 = vadd.f32 0.0, %v2441
        %v2443 = vpop.f32.mrb[0].mxu0
        %2444 = vmatprep.mubr.f32.mxu0 0.0
        %2445 = vmatmul.mubr.f32.gmra.mrb[0].mxu0 %v2369
        %v2446 = vpop.f32.mrb[0].mxu0
        %v2447 = vadd.f32 0.0, %v2446
        %v2448 = vpop.f32.mrb[0].mxu0
        %2449 = vdwg.mxu0
        %v2450 = vmul.f32 %v2442, 0.17677669
        %v2451 = vmul.f32 %v2447, 0.17677669
        %v2452 = vadd.f32 %v2450, %v2122
        %v2453 = vadd.f32 %v2451, %v2122
        %v2454 = vsel %vm1431, %v2452, -inf
        %2455 = vmax.xlane.f32.xlu0 %v2454
        %v2456 = vpop.xlane.xlu0 %2455
        %v2457 = vsel %vm1431, %v2453, -inf
        %2458 = vmax.xlane.f32.xlu0 %v2457
        %v2459 = vpop.xlane.xlu0 %2458
        %v2460 = vsub.f32 %v2452, %v2456
        %v2461 = vsub.f32 %v2453, %v2459
        %v2462 = vmul.f32 %v2460, 1.442695
        %v2463 = vpow.pop %v2462
        %v2464 = vmul.f32 %v2461, 1.442695
        %v2465 = vpow.pop %v2464
        %v2466 = vsel %vm1431, %v2463, 0.0
        %2467 = vadd.xlane.f32.xlu0 %v2466
        %v2468 = vpop.xlane.xlu0 %2467
        %v2469 = vsel %vm1431, %v2465, 0.0
        %2470 = vadd.xlane.f32.xlu0 %v2469
        %v2471 = vpop.xlane.xlu0 %2470
        %v2472 = vrcp.pop %v2468
        %v2473 = vrcp.pop %v2471
        %v2474 = vmul.f32 %v2463, %v2472
        %v2475 = vmul.f32 %v2465, %v2473
        %v2476 = vpack.c.bf16 %v2475, %v2474
        %2477 = vrot.lane.b32.xlu0 %v1331, 64
        %v2478 = vpop.permute.xlu0 %2477
        %v2481 = vsel %vm1431, %v2476, 0
        %2483 = vmatprep.subr.bf16.mxu0 0
        %2484 = vmatpush1.bf16.msra.mxu0 %v2478
        %2485 = vmatprep.subr.bf16.mxu0 0
        %2486 = vmatpush1.bf16.msra.mxu0 0
        %2487 = vmatprep.subr.bf16.mxu0 0
        %2488 = vmatpush1.bf16.msra.mxu0 0
        %2489 = vmatprep.subr.bf16.mxu0 0
        %2490 = vmatpush1.bf16.msra.mxu0 0
        %2491 = vmatprep.subr.bf16.mxu0 0
        %2492 = vmatpush1.bf16.msra.mxu0 0
        %2493 = vmatprep.subr.bf16.mxu0 0
        %2494 = vmatpush1.bf16.msra.mxu0 0
        %2495 = vmatprep.subr.bf16.mxu0 0
        %2496 = vmatpush1.bf16.msra.mxu0 0
        %2497 = vmatprep.subr.bf16.mxu0 0
        %2498 = vmatpush1.bf16.msra.mxu0 0
        %2499 = vmatprep.subr.bf16.mxu0 0
        %2500 = vmatpush1.bf16.msra.mxu0 0
        %2501 = vmatprep.subr.bf16.mxu0 0
        %2502 = vmatpush1.bf16.msra.mxu0 0
        %2503 = vmatprep.subr.bf16.mxu0 0
        %2504 = vmatpush1.bf16.msra.mxu0 0
        %2505 = vmatprep.subr.bf16.mxu0 0
        %2506 = vmatpush1.bf16.msra.mxu0 0
        %2507 = vmatprep.subr.bf16.mxu0 0
        %2508 = vmatpush1.bf16.msra.mxu0 0
        %2509 = vmatprep.subr.bf16.mxu0 0
        %2510 = vmatpush1.bf16.msra.mxu0 0
        %2511 = vmatprep.subr.bf16.mxu0 0
        %2512 = vmatpush1.bf16.msra.mxu0 0
        %2513 = vmatprep.subr.bf16.mxu0 0
        %2514 = vmatpush1.bf16.msra.mxu0 0
        %2515 = vmatprep.mubr.bf16.mxu0 0
        %2516 = vmatmul.mubr.bf16.gmra.mrb[0].mxu0 %v2481
        %v2517 = vpop.f32.mrb[0].mxu0
        %v2518 = vadd.f32 0.0, %v2517
        %v2519 = vpop.f32.mrb[0].mxu0
        %v2520 = vpop.f32.mrb[0].mxu0
        %v2521 = vadd.f32 0.0, %v2520
        %v2522 = vpop.f32.mrb[0].mxu0
        %2523 = vdwg.mxu0
        %2524 = vrot.lane.b32.xlu0 %v1202, 32
        %v2525 = vpop.permute.xlu0 %2524
        %2526 = vrot.lane.b32.xlu0 %v1206, 32
        %v2527 = vpop.permute.xlu0 %2526
        %2528 = vrot.lane.b32.xlu0 %v1204, 32
        %v2529 = vpop.permute.xlu0 %2528
        %2530 = vrot.lane.b32.xlu0 %v1208, 32
        %v2531 = vpop.permute.xlu0 %2530
        %v2532 = vsel %vm1333, %v2525, 0
        %v2534 = vsel %vm1333, %v2527, 0
        %v2536 = vsel %vm1333, %v2529, 0
        %v2538 = vsel %vm1333, %v2531, 0
        %2540 = vmatprep.subr.mxu0 0.0
        %2541 = vmatpush1.xpose.msra.mxu0 %v2536
        %2542 = vmatprep.subr.mxu0 0.0
        %2543 = vmatpush1.xpose.msra.mxu0 %v2538
        %2544 = vmatprep.subr.mxu0 0.0
        %2545 = vmatpush1.xpose.msra.mxu0 0.0
        %2546 = vmatprep.subr.mxu0 0.0
        %2547 = vmatpush1.xpose.msra.mxu0 0.0
        %2548 = vmatprep.subr.mxu0 0.0
        %2549 = vmatpush1.xpose.msra.mxu0 0.0
        %2550 = vmatprep.subr.mxu0 0.0
        %2551 = vmatpush1.xpose.msra.mxu0 0.0
        %2552 = vmatprep.subr.mxu0 0.0
        %2553 = vmatpush1.xpose.msra.mxu0 0.0
        %2554 = vmatprep.subr.mxu0 0.0
        %2555 = vmatpush1.xpose.msra.mxu0 0.0
        %2556 = vmatprep.subr.mxu0 0.0
        %2557 = vmatpush1.xpose.msra.mxu0 0.0
        %2558 = vmatprep.subr.mxu0 0.0
        %2559 = vmatpush1.xpose.msra.mxu0 0.0
        %2560 = vmatprep.subr.mxu0 0.0
        %2561 = vmatpush1.xpose.msra.mxu0 0.0
        %2562 = vmatprep.subr.mxu0 0.0
        %2563 = vmatpush1.xpose.msra.mxu0 0.0
        %2564 = vmatprep.subr.mxu0 0.0
        %2565 = vmatpush1.xpose.msra.mxu0 0.0
        %2566 = vmatprep.subr.mxu0 0.0
        %2567 = vmatpush1.xpose.msra.mxu0 0.0
        %2568 = vmatprep.subr.mxu0 0.0
        %2569 = vmatpush1.xpose.msra.mxu0 0.0
        %2570 = vmatprep.subr.mxu0 0.0
        %2571 = vmatpush1.xpose.msra.mxu0 0.0
        %2572 = vmatprep.subr.mxu0 0.0
        %2573 = vmatpush1.xpose.msra.mxu0 0.0
        %2574 = vmatprep.subr.mxu0 0.0
        %2575 = vmatpush1.xpose.msra.mxu0 0.0
        %2576 = vmatprep.subr.mxu0 0.0
        %2577 = vmatpush1.xpose.msra.mxu0 0.0
        %2578 = vmatprep.subr.mxu0 0.0
        %2579 = vmatpush1.xpose.msra.mxu0 0.0
        %2580 = vmatprep.subr.mxu0 0.0
        %2581 = vmatpush1.xpose.msra.mxu0 0.0
        %2582 = vmatprep.subr.mxu0 0.0
        %2583 = vmatpush1.xpose.msra.mxu0 0.0
        %2584 = vmatprep.subr.mxu0 0.0
        %2585 = vmatpush1.xpose.msra.mxu0 0.0
        %2586 = vmatprep.subr.mxu0 0.0
        %2587 = vmatpush1.xpose.msra.mxu0 0.0
        %2588 = vmatprep.subr.mxu0 0.0
        %2589 = vmatpush1.xpose.msra.mxu0 0.0
        %2590 = vmatprep.subr.mxu0 0.0
        %2591 = vmatpush1.xpose.msra.mxu0 0.0
        %2592 = vmatprep.subr.mxu0 0.0
        %2593 = vmatpush1.xpose.msra.mxu0 0.0
        %2594 = vmatprep.subr.mxu0 0.0
        %2595 = vmatpush1.xpose.msra.mxu0 0.0
        %2596 = vmatprep.subr.mxu0 0.0
        %2597 = vmatpush1.xpose.msra.mxu0 0.0
        %2598 = vmatprep.subr.mxu0 0.0
        %2599 = vmatpush1.xpose.msra.mxu0 0.0
        %2600 = vmatprep.subr.mxu0 0.0
        %2601 = vmatpush1.xpose.msra.mxu0 0.0
        %2602 = vmatprep.subr.mxu0 0.0
        %2603 = vmatpush1.xpose.msra.mxu0 0.0
        %2604 = vmatprep.mubr.f32.mxu0 0.0
        %2605 = vmatmul.mubr.f32.gmra.mrb[0].mxu0 %v2532
        %v2606 = vpop.f32.mrb[0].mxu0
        %v2607 = vadd.f32 0.0, %v2606
        %v2608 = vpop.f32.mrb[0].mxu0
        %2609 = vmatprep.mubr.f32.mxu0 0.0
        %2610 = vmatmul.mubr.f32.gmra.mrb[0].mxu0 %v2534
        %v2611 = vpop.f32.mrb[0].mxu0
        %v2612 = vadd.f32 0.0, %v2611
        %v2613 = vpop.f32.mrb[0].mxu0
        %2614 = vdwg.mxu0
        %v2615 = vmul.f32 %v2607, 0.17677669
        %v2616 = vmul.f32 %v2612, 0.17677669
        %v2617 = vadd.f32 %v2615, %v2122
        %v2618 = vadd.f32 %v2616, %v2122
        %v2619 = vsel %vm1431, %v2617, -inf
        %2620 = vmax.xlane.f32.xlu0 %v2619
        %v2621 = vpop.xlane.xlu0 %2620
        %v2622 = vsel %vm1431, %v2618, -inf
        %2623 = vmax.xlane.f32.xlu0 %v2622
        %v2624 = vpop.xlane.xlu0 %2623
        %v2625 = vsub.f32 %v2617, %v2621
        %v2626 = vsub.f32 %v2618, %v2624
        %v2627 = vmul.f32 %v2625, 1.442695
        %v2628 = vpow.pop %v2627
        %v2629 = vmul.f32 %v2626, 1.442695
        %v2630 = vpow.pop %v2629
        %v2631 = vsel %vm1431, %v2628, 0.0
        %2632 = vadd.xlane.f32.xlu0 %v2631
        %v2633 = vpop.xlane.xlu0 %2632
        %v2634 = vsel %vm1431, %v2630, 0.0
        %2635 = vadd.xlane.f32.xlu0 %v2634
        %v2636 = vpop.xlane.xlu0 %2635
        %v2637 = vrcp.pop %v2633
        %v2638 = vrcp.pop %v2636
        %v2639 = vmul.f32 %v2628, %v2637
        %v2640 = vmul.f32 %v2630, %v2638
        %v2641 = vpack.c.bf16 %v2640, %v2639
        %2642 = vrot.lane.b32.xlu0 %v1331, 32
        %v2643 = vpop.permute.xlu0 %2642
        %v2646 = vsel %vm1431, %v2641, 0
        %2648 = vmatprep.subr.bf16.mxu0 0
        %2649 = vmatpush1.bf16.msra.mxu0 %v2643
        %2650 = vmatprep.subr.bf16.mxu0 0
        %2651 = vmatpush1.bf16.msra.mxu0 0
        %2652 = vmatprep.subr.bf16.mxu0 0
        %2653 = vmatpush1.bf16.msra.mxu0 0
        %2654 = vmatprep.subr.bf16.mxu0 0
        %2655 = vmatpush1.bf16.msra.mxu0 0
        %2656 = vmatprep.subr.bf16.mxu0 0
        %2657 = vmatpush1.bf16.msra.mxu0 0
        %2658 = vmatprep.subr.bf16.mxu0 0
        %2659 = vmatpush1.bf16.msra.mxu0 0
        %2660 = vmatprep.subr.bf16.mxu0 0
        %2661 = vmatpush1.bf16.msra.mxu0 0
        %2662 = vmatprep.subr.bf16.mxu0 0
        %2663 = vmatpush1.bf16.msra.mxu0 0
        %2664 = vmatprep.subr.bf16.mxu0 0
        %2665 = vmatpush1.bf16.msra.mxu0 0
        %2666 = vmatprep.subr.bf16.mxu0 0
        %2667 = vmatpush1.bf16.msra.mxu0 0
        %2668 = vmatprep.subr.bf16.mxu0 0
        %2669 = vmatpush1.bf16.msra.mxu0 0
        %2670 = vmatprep.subr.bf16.mxu0 0
        %2671 = vmatpush1.bf16.msra.mxu0 0
        %2672 = vmatprep.subr.bf16.mxu0 0
        %2673 = vmatpush1.bf16.msra.mxu0 0
        %2674 = vmatprep.subr.bf16.mxu0 0
        %2675 = vmatpush1.bf16.msra.mxu0 0
        %2676 = vmatprep.subr.bf16.mxu0 0
        %2677 = vmatpush1.bf16.msra.mxu0 0
        %2678 = vmatprep.subr.bf16.mxu0 0
        %2679 = vmatpush1.bf16.msra.mxu0 0
        %2680 = vmatprep.mubr.bf16.mxu0 0
        %2681 = vmatmul.mubr.bf16.gmra.mrb[0].mxu0 %v2646
        %v2682 = vpop.f32.mrb[0].mxu0
        %v2683 = vadd.f32 0.0, %v2682
        %v2684 = vpop.f32.mrb[0].mxu0
        %v2685 = vpop.f32.mrb[0].mxu0
        %v2686 = vadd.f32 0.0, %v2685
        %v2687 = vpop.f32.mrb[0].mxu0
        %2688 = vdwg.mxu0
        %2691 = vrot.lane.b32.xlu0 %v2353, 32
        %v2692 = vpop.permute.xlu0 %2691
        %2693 = vrot.lane.b32.xlu0 %v2356, 32
        %v2694 = vpop.permute.xlu0 %2693
        %2699 = vrot.lane.b32.xlu0 %v2518, 64
        %v2700 = vpop.permute.xlu0 %2699
        %2701 = vrot.lane.b32.xlu0 %v2521, 64
        %v2702 = vpop.permute.xlu0 %2701
        %2707 = vrot.lane.b32.xlu0 %v2683, 96
        %v2708 = vpop.permute.xlu0 %2707
        %2709 = vrot.lane.b32.xlu0 %v2686, 96
        %v2710 = vpop.permute.xlu0 %2709
        %v2713 = vsel %vm1333, %v2187, %v2692
        %v2714 = vsel %vm1333, %v2190, %v2694
        %v2715 = vsel %vm2021, %v2713, %v2700
        %v2716 = vsel %vm2021, %v2714, %v2702
        %v2717 = vsel %vm2024, %v2715, %v2708
        %v2718 = vsel %vm2024, %v2716, %v2710
        %v2719 = vpack.c.bf16 %v2026, %v2025
        %v2720 = vpack.c.bf16 %v2718, %v2717
        %v2721 = vld [vmem:[%s847] sm:$0xf]
        %v2722 = vld [vmem:[%s847 + $0x4] sm:$0xf]
        %v2723 = vld [vmem:[%s847 + $0x8] sm:$0xf]
        %v2724 = vld [vmem:[%s847 + $0xc] sm:$0xf]
        %v2725 = vld [vmem:[%s847 + $0x10] sm:$0xf]
        %v2726 = vld [vmem:[%s847 + $0x14] sm:$0xf]
        %v2727 = vld [vmem:[%s847 + $0x18] sm:$0xf]
        %v2728 = vld [vmem:[%s847 + $0x1c] sm:$0xf]
        %v2729 = vld [vmem:[%s847 + $0x20] sm:$0xf]
        %v2730 = vld [vmem:[%s847 + $0x24] sm:$0xf]
        %v2731 = vld [vmem:[%s847 + $0x28] sm:$0xf]
        %v2732 = vld [vmem:[%s847 + $0x2c] sm:$0xf]
        %v2733 = vld [vmem:[%s847 + $0x30] sm:$0xf]
        %v2734 = vld [vmem:[%s847 + $0x34] sm:$0xf]
        %v2735 = vld [vmem:[%s847 + $0x38] sm:$0xf]
        %v2736 = vld [vmem:[%s847 + $0x3c] sm:$0xf]
        %v2737 = vld [vmem:[%s999] sm:$0x1]
        %v2739 = vlaneseq
        %v2740 = vshrl.u32 %v2739, 7
        %v2741 = vsub.s32 0, %v2740
        %v2742 = vrot.slane %v2737, %v2741
        %v2760 = vunpack.c.l.b16 %v2721
        %v2761 = vunpack.c.l.b16 %v2722
        %v2762 = vunpack.c.l.b16 %v2723
        %v2763 = vunpack.c.l.b16 %v2724
        %v2764 = vunpack.c.l.b16 %v2725
        %v2765 = vunpack.c.l.b16 %v2726
        %v2766 = vunpack.c.l.b16 %v2727
        %v2767 = vunpack.c.l.b16 %v2728
        %v2768 = vunpack.c.l.b16 %v2729
        %v2769 = vunpack.c.l.b16 %v2730
        %v2770 = vunpack.c.l.b16 %v2731
        %v2771 = vunpack.c.l.b16 %v2732
        %v2772 = vunpack.c.l.b16 %v2733
        %v2773 = vunpack.c.l.b16 %v2734
        %v2774 = vunpack.c.l.b16 %v2735
        %v2775 = vunpack.c.l.b16 %v2736
        %v2776 = vpack.c.b16 %v2761, %v2760
        %v2777 = vpack.c.b16 %v2763, %v2762
        %v2778 = vpack.c.b16 %v2765, %v2764
        %v2779 = vpack.c.b16 %v2767, %v2766
        %v2780 = vpack.c.b16 %v2769, %v2768
        %v2781 = vpack.c.b16 %v2771, %v2770
        %v2782 = vpack.c.b16 %v2773, %v2772
        %v2783 = vpack.c.b16 %v2775, %v2774
        %2792 = vmatprep.subr.bf16.mxu0 0
        %2793 = vmatpush1.bf16.msra.mxu0 %v2776
        %2794 = vmatprep.subr.bf16.mxu0 0
        %2795 = vmatpush1.bf16.msra.mxu0 %v2777
        %2796 = vmatprep.subr.bf16.mxu0 0
        %2797 = vmatpush1.bf16.msra.mxu0 %v2778
        %2798 = vmatprep.subr.bf16.mxu0 0
        %2799 = vmatpush1.bf16.msra.mxu0 %v2779
        %2800 = vmatprep.subr.bf16.mxu0 0
        %2801 = vmatpush1.bf16.msra.mxu0 %v2780
        %2802 = vmatprep.subr.bf16.mxu0 0
        %2803 = vmatpush1.bf16.msra.mxu0 %v2781
        %2804 = vmatprep.subr.bf16.mxu0 0
        %2805 = vmatpush1.bf16.msra.mxu0 %v2782
        %2806 = vmatprep.subr.bf16.mxu0 0
        %2807 = vmatpush1.bf16.msra.mxu0 %v2783
        %2808 = vmatprep.subr.bf16.mxu0 0
        %2809 = vmatpush1.bf16.msra.mxu0 0
        %2810 = vmatprep.subr.bf16.mxu0 0
        %2811 = vmatpush1.bf16.msra.mxu0 0
        %2812 = vmatprep.subr.bf16.mxu0 0
        %2813 = vmatpush1.bf16.msra.mxu0 0
        %2814 = vmatprep.subr.bf16.mxu0 0
        %2815 = vmatpush1.bf16.msra.mxu0 0
        %2816 = vmatprep.subr.bf16.mxu0 0
        %2817 = vmatpush1.bf16.msra.mxu0 0
        %2818 = vmatprep.subr.bf16.mxu0 0
        %2819 = vmatpush1.bf16.msra.mxu0 0
        %2820 = vmatprep.subr.bf16.mxu0 0
        %2821 = vmatpush1.bf16.msra.mxu0 0
        %2822 = vmatprep.subr.bf16.mxu0 0
        %2823 = vmatpush1.bf16.msra.mxu0 0
        %2824 = vmatprep.mubr.bf16.mxu0 0
        %2825 = vmatmul.mubr.bf16.gmra.mrb[0].mxu0 %v2719
        %v2826 = vpop.f32.mrb[0].mxu0
        %v2827 = vadd.f32 %v2742, %v2826
        %v2828 = vpop.f32.mrb[0].mxu0
        %v2829 = vpop.f32.mrb[0].mxu0
        %v2830 = vadd.f32 %v2742, %v2829
        %v2831 = vpop.f32.mrb[0].mxu0
        %2832 = vmatprep.mubr.bf16.mxu0 0
        %2833 = vmatmul.mubr.bf16.gmra.mrb[0].mxu0 %v2720
        %v2834 = vpop.f32.mrb[0].mxu0
        %v2835 = vadd.f32 %v2742, %v2834
        %v2836 = vpop.f32.mrb[0].mxu0
        %v2837 = vpop.f32.mrb[0].mxu0
        %v2838 = vadd.f32 %v2742, %v2837
        %v2839 = vpop.f32.mrb[0].mxu0
        %2840 = vdwg.mxu0
        %v2841 = vadd.f32 %v1033, %v2827
        %v2842 = vadd.f32 %v1034, %v2830
        %v2843 = vadd.f32 %v1035, %v2835
        %v2844 = vadd.f32 %v1036, %v2838
        %v2845 = vld [vmem:[%s1002] sm:$0x1]
        %v2846 = vld [vmem:[%s1005] sm:$0x1]
        %2847 = vadd.xlane.f32.xlu0 %v2841
        %v2848 = vpop.xlane.xlu0 %2847
        %2849 = vadd.xlane.f32.xlu0 %v2842
        %v2850 = vpop.xlane.xlu0 %2849
        %2851 = vadd.xlane.f32.xlu0 %v2843
        %v2852 = vpop.xlane.xlu0 %2851
        %2853 = vadd.xlane.f32.xlu0 %v2844
        %v2854 = vpop.xlane.xlu0 %2853
        %v2855 = vrcp.pop 128.0
        %v2856 = vmul.f32 %v2848, %v2855
        %v2857 = vmul.f32 %v2850, %v2855
        %v2858 = vmul.f32 %v2852, %v2855
        %v2859 = vmul.f32 %v2854, %v2855
        %v2860 = vsub.f32 %v2841, %v2856
        %v2861 = vsub.f32 %v2842, %v2857
        %v2862 = vsub.f32 %v2843, %v2858
        %v2863 = vsub.f32 %v2844, %v2859
        %v2864 = vmul.f32 %v2860, %v2860
        %v2865 = vmul.f32 %v2861, %v2861
        %v2866 = vmul.f32 %v2862, %v2862
        %v2867 = vmul.f32 %v2863, %v2863
        %2868 = vadd.xlane.f32.xlu0 %v2864
        %v2869 = vpop.xlane.xlu0 %2868
        %2870 = vadd.xlane.f32.xlu0 %v2865
        %v2871 = vpop.xlane.xlu0 %2870
        %2872 = vadd.xlane.f32.xlu0 %v2866
        %v2873 = vpop.xlane.xlu0 %2872
        %2874 = vadd.xlane.f32.xlu0 %v2867
        %v2875 = vpop.xlane.xlu0 %2874
        %v2876 = vmul.f32 %v2869, %v2855
        %v2877 = vmul.f32 %v2871, %v2855
        %v2878 = vmul.f32 %v2873, %v2855
        %v2879 = vmul.f32 %v2875, %v2855
        %v2880 = vadd.f32 %v2876, 1e-05
        %v2881 = vadd.f32 %v2877, 1e-05
        %v2882 = vadd.f32 %v2878, 1e-05
        %v2883 = vadd.f32 %v2879, 1e-05
        %v2884 = vrsqrt.pop %v2880
        %v2885 = vrsqrt.pop %v2881
        %v2886 = vrsqrt.pop %v2882
        %v2887 = vrsqrt.pop %v2883
        %v2888 = vmul.f32 %v2860, %v2884
        %v2889 = vmul.f32 %v2861, %v2885
        %v2890 = vmul.f32 %v2862, %v2886
        %v2891 = vmul.f32 %v2863, %v2887
        %v2893 = vlaneseq
        %v2894 = vshrl.u32 %v2893, 7
        %v2895 = vsub.s32 0, %v2894
        %v2896 = vrot.slane %v2845, %v2895
        %v2898 = vmul.f32 %v2888, %v2896
        %v2899 = vmul.f32 %v2889, %v2896
        %v2900 = vmul.f32 %v2890, %v2896
        %v2901 = vmul.f32 %v2891, %v2896
        %v2903 = vlaneseq
        %v2904 = vshrl.u32 %v2903, 7
        %v2905 = vsub.s32 0, %v2904
        %v2906 = vrot.slane %v2846, %v2905
        %v2908 = vadd.f32 %v2898, %v2906
        %v2909 = vadd.f32 %v2899, %v2906
        %v2910 = vadd.f32 %v2900, %v2906
        %v2911 = vadd.f32 %v2901, %v2906
        %v2912 = vpack.c.bf16 %v2909, %v2908
        %v2913 = vpack.c.bf16 %v2911, %v2910
        %v2914 = vld [vmem:[%s856] sm:$0xff]
        %v2915 = vld [vmem:[%s856 + $0x8] sm:$0xff]
        %v2916 = vld [vmem:[%s856 + $0x10] sm:$0xff]
        %v2917 = vld [vmem:[%s856 + $0x18] sm:$0xff]
        %v2918 = vld [vmem:[%s856 + $0x20] sm:$0xff]
        %v2919 = vld [vmem:[%s856 + $0x28] sm:$0xff]
        %v2920 = vld [vmem:[%s856 + $0x30] sm:$0xff]
        %v2921 = vld [vmem:[%s856 + $0x38] sm:$0xff]
        %v2922 = vld [vmem:[%s856 + $0x40] sm:$0xff]
        %v2923 = vld [vmem:[%s856 + $0x48] sm:$0xff]
        %v2924 = vld [vmem:[%s856 + $0x50] sm:$0xff]
        %v2925 = vld [vmem:[%s856 + $0x58] sm:$0xff]
        %v2926 = vld [vmem:[%s856 + $0x60] sm:$0xff]
        %v2927 = vld [vmem:[%s856 + $0x68] sm:$0xff]
        %v2928 = vld [vmem:[%s856 + $0x70] sm:$0xff]
        %v2929 = vld [vmem:[%s856 + $0x78] sm:$0xff]
        %v2930 = vld [vmem:[%s1009] sm:$0x3]
        %v2932 = vlaneseq
        %v2933 = vshrl.u32 %v2932, 7
        %v2934 = vsub.s32 0, %v2933
        %v2935 = vrot.slane %v2930, %v2934
        %v2936 = vlaneseq
        %v2937 = vshrl.u32 %v2936, 7
        %v2938 = vsub.s32 1, %v2937
        %v2939 = vrot.slane %v2930, %v2938
        %v2958 = vunpack.c.l.b16 %v2914
        %v2959 = vunpack.c.h.b16 %v2914
        %v2960 = vunpack.c.l.b16 %v2915
        %v2961 = vunpack.c.h.b16 %v2915
        %v2962 = vunpack.c.l.b16 %v2916
        %v2963 = vunpack.c.h.b16 %v2916
        %v2964 = vunpack.c.l.b16 %v2917
        %v2965 = vunpack.c.h.b16 %v2917
        %v2966 = vunpack.c.l.b16 %v2918
        %v2967 = vunpack.c.h.b16 %v2918
        %v2968 = vunpack.c.l.b16 %v2919
        %v2969 = vunpack.c.h.b16 %v2919
        %v2970 = vunpack.c.l.b16 %v2920
        %v2971 = vunpack.c.h.b16 %v2920
        %v2972 = vunpack.c.l.b16 %v2921
        %v2973 = vunpack.c.h.b16 %v2921
        %v2974 = vunpack.c.l.b16 %v2922
        %v2975 = vunpack.c.h.b16 %v2922
        %v2976 = vunpack.c.l.b16 %v2923
        %v2977 = vunpack.c.h.b16 %v2923
        %v2978 = vunpack.c.l.b16 %v2924
        %v2979 = vunpack.c.h.b16 %v2924
        %v2980 = vunpack.c.l.b16 %v2925
        %v2981 = vunpack.c.h.b16 %v2925
        %v2982 = vunpack.c.l.b16 %v2926
        %v2983 = vunpack.c.h.b16 %v2926
        %v2984 = vunpack.c.l.b16 %v2927
        %v2985 = vunpack.c.h.b16 %v2927
        %v2986 = vunpack.c.l.b16 %v2928
        %v2987 = vunpack.c.h.b16 %v2928
        %v2988 = vunpack.c.l.b16 %v2929
        %v2989 = vunpack.c.h.b16 %v2929
        %v2990 = vpack.c.b16 %v2960, %v2958
        %v2991 = vpack.c.b16 %v2961, %v2959
        %v2992 = vpack.c.b16 %v2964, %v2962
        %v2993 = vpack.c.b16 %v2965, %v2963
        %v2994 = vpack.c.b16 %v2968, %v2966
        %v2995 = vpack.c.b16 %v2969, %v2967
        %v2996 = vpack.c.b16 %v2972, %v2970
        %v2997 = vpack.c.b16 %v2973, %v2971
        %v2998 = vpack.c.b16 %v2976, %v2974
        %v2999 = vpack.c.b16 %v2977, %v2975
        %v3000 = vpack.c.b16 %v2980, %v2978
        %v3001 = vpack.c.b16 %v2981, %v2979
        %v3002 = vpack.c.b16 %v2984, %v2982
        %v3003 = vpack.c.b16 %v2985, %v2983
        %v3004 = vpack.c.b16 %v2988, %v2986
        %v3005 = vpack.c.b16 %v2989, %v2987
        %3022 = vmatprep.subr.bf16.mxu0 %v2991
        %3023 = vmatpush1.bf16.msra.mxu0 %v2990
        %3024 = vmatprep.subr.bf16.mxu0 %v2993
        %3025 = vmatpush1.bf16.msra.mxu0 %v2992
        %3026 = vmatprep.subr.bf16.mxu0 %v2995
        %3027 = vmatpush1.bf16.msra.mxu0 %v2994
        %3028 = vmatprep.subr.bf16.mxu0 %v2997
        %3029 = vmatpush1.bf16.msra.mxu0 %v2996
        %3030 = vmatprep.subr.bf16.mxu0 %v2999
        %3031 = vmatpush1.bf16.msra.mxu0 %v2998
        %3032 = vmatprep.subr.bf16.mxu0 %v3001
        %3033 = vmatpush1.bf16.msra.mxu0 %v3000
        %3034 = vmatprep.subr.bf16.mxu0 %v3003
        %3035 = vmatpush1.bf16.msra.mxu0 %v3002
        %3036 = vmatprep.subr.bf16.mxu0 %v3005
        %3037 = vmatpush1.bf16.msra.mxu0 %v3004
        %3038 = vmatprep.subr.bf16.mxu0 0
        %3039 = vmatpush1.bf16.msra.mxu0 0
        %3040 = vmatprep.subr.bf16.mxu0 0
        %3041 = vmatpush1.bf16.msra.mxu0 0
        %3042 = vmatprep.subr.bf16.mxu0 0
        %3043 = vmatpush1.bf16.msra.mxu0 0
        %3044 = vmatprep.subr.bf16.mxu0 0
        %3045 = vmatpush1.bf16.msra.mxu0 0
        %3046 = vmatprep.subr.bf16.mxu0 0
        %3047 = vmatpush1.bf16.msra.mxu0 0
        %3048 = vmatprep.subr.bf16.mxu0 0
        %3049 = vmatpush1.bf16.msra.mxu0 0
        %3050 = vmatprep.subr.bf16.mxu0 0
        %3051 = vmatpush1.bf16.msra.mxu0 0
        %3052 = vmatprep.subr.bf16.mxu0 0
        %3053 = vmatpush1.bf16.msra.mxu0 0
        %3054 = vmatprep.mubr.bf16.mxu0 0
        %3055 = vmatmul.mubr.bf16.gmra.mrb[0].mxu0 %v2912
        %v3056 = vpop.f32.mrb[0].mxu0
        %v3057 = vadd.f32 %v2935, %v3056
        %v3058 = vpop.f32.mrb[0].mxu0
        %v3059 = vadd.f32 %v2939, %v3058
        %v3060 = vpop.f32.mrb[0].mxu0
        %v3061 = vadd.f32 %v2935, %v3060
        %v3062 = vpop.f32.mrb[0].mxu0
        %v3063 = vadd.f32 %v2939, %v3062
        %3064 = vmatprep.mubr.bf16.mxu0 0
        %3065 = vmatmul.mubr.bf16.gmra.mrb[0].mxu0 %v2913
        %v3066 = vpop.f32.mrb[0].mxu0
        %v3067 = vadd.f32 %v2935, %v3066
        %v3068 = vpop.f32.mrb[0].mxu0
        %v3069 = vadd.f32 %v2939, %v3068
        %v3070 = vpop.f32.mrb[0].mxu0
        %v3071 = vadd.f32 %v2935, %v3070
        %v3072 = vpop.f32.mrb[0].mxu0
        %v3073 = vadd.f32 %v2939, %v3072
        %3074 = vdwg.mxu0
        %v3075 = vmax.f32 %v3057, 0.0
        %v3076 = vmax.f32 %v3059, 0.0
        %v3077 = vmax.f32 %v3061, 0.0
        %v3078 = vmax.f32 %v3063, 0.0
        %v3079 = vmax.f32 %v3067, 0.0
        %v3080 = vmax.f32 %v3069, 0.0
        %v3081 = vmax.f32 %v3071, 0.0
        %v3082 = vmax.f32 %v3073, 0.0
        %v3083 = vpack.c.bf16 %v3077, %v3075
        %v3084 = vpack.c.bf16 %v3078, %v3076
        %v3085 = vpack.c.bf16 %v3081, %v3079
        %v3086 = vpack.c.bf16 %v3082, %v3080
        %v3087 = vld [vmem:[%s865] sm:$0xf]
        %v3088 = vld [vmem:[%s865 + $0x4] sm:$0xf]
        %v3089 = vld [vmem:[%s865 + $0x8] sm:$0xf]
        %v3090 = vld [vmem:[%s865 + $0xc] sm:$0xf]
        %v3091 = vld [vmem:[%s865 + $0x10] sm:$0xf]
        %v3092 = vld [vmem:[%s865 + $0x14] sm:$0xf]
        %v3093 = vld [vmem:[%s865 + $0x18] sm:$0xf]
        %v3094 = vld [vmem:[%s865 + $0x1c] sm:$0xf]
        %v3095 = vld [vmem:[%s865 + $0x20] sm:$0xf]
        %v3096 = vld [vmem:[%s865 + $0x24] sm:$0xf]
        %v3097 = vld [vmem:[%s865 + $0x28] sm:$0xf]
        %v3098 = vld [vmem:[%s865 + $0x2c] sm:$0xf]
        %v3099 = vld [vmem:[%s865 + $0x30] sm:$0xf]
        %v3100 = vld [vmem:[%s865 + $0x34] sm:$0xf]
        %v3101 = vld [vmem:[%s865 + $0x38] sm:$0xf]
        %v3102 = vld [vmem:[%s865 + $0x3c] sm:$0xf]
        %v3103 = vld [vmem:[%s865 + $0x40] sm:$0xf]
        %v3104 = vld [vmem:[%s865 + $0x44] sm:$0xf]
        %v3105 = vld [vmem:[%s865 + $0x48] sm:$0xf]
        %v3106 = vld [vmem:[%s865 + $0x4c] sm:$0xf]
        %v3107 = vld [vmem:[%s865 + $0x50] sm:$0xf]
        %v3108 = vld [vmem:[%s865 + $0x54] sm:$0xf]
        %v3109 = vld [vmem:[%s865 + $0x58] sm:$0xf]
        %v3110 = vld [vmem:[%s865 + $0x5c] sm:$0xf]
        %v3111 = vld [vmem:[%s865 + $0x60] sm:$0xf]
        %v3112 = vld [vmem:[%s865 + $0x64] sm:$0xf]
        %v3113 = vld [vmem:[%s865 + $0x68] sm:$0xf]
        %v3114 = vld [vmem:[%s865 + $0x6c] sm:$0xf]
        %v3115 = vld [vmem:[%s865 + $0x70] sm:$0xf]
        %v3116 = vld [vmem:[%s865 + $0x74] sm:$0xf]
        %v3117 = vld [vmem:[%s865 + $0x78] sm:$0xf]
        %v3118 = vld [vmem:[%s865 + $0x7c] sm:$0xf]
        %v3119 = vld [vmem:[%s1012] sm:$0x1]
        %v3121 = vlaneseq
        %v3122 = vshrl.u32 %v3121, 7
        %v3123 = vsub.s32 0, %v3122
        %v3124 = vrot.slane %v3119, %v3123
        %v3158 = vunpack.c.l.b16 %v3087
        %v3159 = vunpack.c.l.b16 %v3088
        %v3160 = vunpack.c.l.b16 %v3089
        %v3161 = vunpack.c.l.b16 %v3090
        %v3162 = vunpack.c.l.b16 %v3091
        %v3163 = vunpack.c.l.b16 %v3092
        %v3164 = vunpack.c.l.b16 %v3093
        %v3165 = vunpack.c.l.b16 %v3094
        %v3166 = vunpack.c.l.b16 %v3095
        %v3167 = vunpack.c.l.b16 %v3096
        %v3168 = vunpack.c.l.b16 %v3097
        %v3169 = vunpack.c.l.b16 %v3098
        %v3170 = vunpack.c.l.b16 %v3099
        %v3171 = vunpack.c.l.b16 %v3100
        %v3172 = vunpack.c.l.b16 %v3101
        %v3173 = vunpack.c.l.b16 %v3102
        %v3174 = vunpack.c.l.b16 %v3103
        %v3175 = vunpack.c.l.b16 %v3104
        %v3176 = vunpack.c.l.b16 %v3105
        %v3177 = vunpack.c.l.b16 %v3106
        %v3178 = vunpack.c.l.b16 %v3107
        %v3179 = vunpack.c.l.b16 %v3108
        %v3180 = vunpack.c.l.b16 %v3109
        %v3181 = vunpack.c.l.b16 %v3110
        %v3182 = vunpack.c.l.b16 %v3111
        %v3183 = vunpack.c.l.b16 %v3112
        %v3184 = vunpack.c.l.b16 %v3113
        %v3185 = vunpack.c.l.b16 %v3114
        %v3186 = vunpack.c.l.b16 %v3115
        %v3187 = vunpack.c.l.b16 %v3116
        %v3188 = vunpack.c.l.b16 %v3117
        %v3189 = vunpack.c.l.b16 %v3118
        %v3190 = vpack.c.b16 %v3159, %v3158
        %v3191 = vpack.c.b16 %v3161, %v3160
        %v3192 = vpack.c.b16 %v3163, %v3162
        %v3193 = vpack.c.b16 %v3165, %v3164
        %v3194 = vpack.c.b16 %v3167, %v3166
        %v3195 = vpack.c.b16 %v3169, %v3168
        %v3196 = vpack.c.b16 %v3171, %v3170
        %v3197 = vpack.c.b16 %v3173, %v3172
        %v3198 = vpack.c.b16 %v3175, %v3174
        %v3199 = vpack.c.b16 %v3177, %v3176
        %v3200 = vpack.c.b16 %v3179, %v3178
        %v3201 = vpack.c.b16 %v3181, %v3180
        %v3202 = vpack.c.b16 %v3183, %v3182
        %v3203 = vpack.c.b16 %v3185, %v3184
        %v3204 = vpack.c.b16 %v3187, %v3186
        %v3205 = vpack.c.b16 %v3189, %v3188
        %3222 = vmatprep.subr.bf16.mxu0 0
        %3223 = vmatpush1.bf16.msra.mxu0 %v3190
        %3224 = vmatprep.subr.bf16.mxu0 0
        %3225 = vmatpush1.bf16.msra.mxu0 %v3191
        %3226 = vmatprep.subr.bf16.mxu0 0
        %3227 = vmatpush1.bf16.msra.mxu0 %v3192
        %3228 = vmatprep.subr.bf16.mxu0 0
        %3229 = vmatpush1.bf16.msra.mxu0 %v3193
        %3230 = vmatprep.subr.bf16.mxu0 0
        %3231 = vmatpush1.bf16.msra.mxu0 %v3194
        %3232 = vmatprep.subr.bf16.mxu0 0
        %3233 = vmatpush1.bf16.msra.mxu0 %v3195
        %3234 = vmatprep.subr.bf16.mxu0 0
        %3235 = vmatpush1.bf16.msra.mxu0 %v3196
        %3236 = vmatprep.subr.bf16.mxu0 0
        %3237 = vmatpush1.bf16.msra.mxu0 %v3197
        %3238 = vmatprep.subr.bf16.mxu0 0
        %3239 = vmatpush1.bf16.msra.mxu0 %v3198
        %3240 = vmatprep.subr.bf16.mxu0 0
        %3241 = vmatpush1.bf16.msra.mxu0 %v3199
        %3242 = vmatprep.subr.bf16.mxu0 0
        %3243 = vmatpush1.bf16.msra.mxu0 %v3200
        %3244 = vmatprep.subr.bf16.mxu0 0
        %3245 = vmatpush1.bf16.msra.mxu0 %v3201
        %3246 = vmatprep.subr.bf16.mxu0 0
        %3247 = vmatpush1.bf16.msra.mxu0 %v3202
        %3248 = vmatprep.subr.bf16.mxu0 0
        %3249 = vmatpush1.bf16.msra.mxu0 %v3203
        %3250 = vmatprep.subr.bf16.mxu0 0
        %3251 = vmatpush1.bf16.msra.mxu0 %v3204
        %3252 = vmatprep.subr.bf16.mxu0 0
        %3253 = vmatpush1.bf16.msra.mxu0 %v3205
        %3254 = vmatprep.mubr.bf16.mxu0 %v3084
        %3255 = vmatmul.mubr.bf16.gmra.mrb[0].mxu0 %v3083
        %v3256 = vpop.f32.mrb[0].mxu0
        %v3257 = vadd.f32 %v3124, %v3256
        %v3258 = vpop.f32.mrb[0].mxu0
        %v3259 = vpop.f32.mrb[0].mxu0
        %v3260 = vadd.f32 %v3124, %v3259
        %v3261 = vpop.f32.mrb[0].mxu0
        %3262 = vmatprep.mubr.bf16.mxu0 %v3086
        %3263 = vmatmul.mubr.bf16.gmra.mrb[0].mxu0 %v3085
        %v3264 = vpop.f32.mrb[0].mxu0
        %v3265 = vadd.f32 %v3124, %v3264
        %v3266 = vpop.f32.mrb[0].mxu0
        %v3267 = vpop.f32.mrb[0].mxu0
        %v3268 = vadd.f32 %v3124, %v3267
        %v3269 = vpop.f32.mrb[0].mxu0
        %3270 = vdwg.mxu0
        %v3271 = vadd.f32 %v2908, %v3257
        %v3272 = vadd.f32 %v2909, %v3260
        %v3273 = vadd.f32 %v2910, %v3265
        %v3274 = vadd.f32 %v2911, %v3268
        %v3275 = vld [vmem:[%s1015] sm:$0x1]
        %v3276 = vld [vmem:[%s1018] sm:$0x1]
        %3277 = vadd.xlane.f32.xlu0 %v3271
        %v3278 = vpop.xlane.xlu0 %3277
        %3279 = vadd.xlane.f32.xlu0 %v3272
        %v3280 = vpop.xlane.xlu0 %3279
        %3281 = vadd.xlane.f32.xlu0 %v3273
        %v3282 = vpop.xlane.xlu0 %3281
        %3283 = vadd.xlane.f32.xlu0 %v3274
        %v3284 = vpop.xlane.xlu0 %3283
        %v3285 = vmul.f32 %v3278, %v2855
        %v3286 = vmul.f32 %v3280, %v2855
        %v3287 = vmul.f32 %v3282, %v2855
        %v3288 = vmul.f32 %v3284, %v2855
        %v3289 = vsub.f32 %v3271, %v3285
        %v3290 = vsub.f32 %v3272, %v3286
        %v3291 = vsub.f32 %v3273, %v3287
        %v3292 = vsub.f32 %v3274, %v3288
        %v3293 = vmul.f32 %v3289, %v3289
        %v3294 = vmul.f32 %v3290, %v3290
        %v3295 = vmul.f32 %v3291, %v3291
        %v3296 = vmul.f32 %v3292, %v3292
        %3297 = vadd.xlane.f32.xlu0 %v3293
        %v3298 = vpop.xlane.xlu0 %3297
        %3299 = vadd.xlane.f32.xlu0 %v3294
        %v3300 = vpop.xlane.xlu0 %3299
        %3301 = vadd.xlane.f32.xlu0 %v3295
        %v3302 = vpop.xlane.xlu0 %3301
        %3303 = vadd.xlane.f32.xlu0 %v3296
        %v3304 = vpop.xlane.xlu0 %3303
        %v3305 = vmul.f32 %v3298, %v2855
        %v3306 = vmul.f32 %v3300, %v2855
        %v3307 = vmul.f32 %v3302, %v2855
        %v3308 = vmul.f32 %v3304, %v2855
        %v3309 = vadd.f32 %v3305, 1e-05
        %v3310 = vadd.f32 %v3306, 1e-05
        %v3311 = vadd.f32 %v3307, 1e-05
        %v3312 = vadd.f32 %v3308, 1e-05
        %v3313 = vrsqrt.pop %v3309
        %v3314 = vrsqrt.pop %v3310
        %v3315 = vrsqrt.pop %v3311
        %v3316 = vrsqrt.pop %v3312
        %v3317 = vmul.f32 %v3289, %v3313
        %v3318 = vmul.f32 %v3290, %v3314
        %v3319 = vmul.f32 %v3291, %v3315
        %v3320 = vmul.f32 %v3292, %v3316
        %v3322 = vlaneseq
        %v3323 = vshrl.u32 %v3322, 7
        %v3324 = vsub.s32 0, %v3323
        %v3325 = vrot.slane %v3275, %v3324
        %v3327 = vmul.f32 %v3317, %v3325
        %v3328 = vmul.f32 %v3318, %v3325
        %v3329 = vmul.f32 %v3319, %v3325
        %v3330 = vmul.f32 %v3320, %v3325
        %v3332 = vlaneseq
        %v3333 = vshrl.u32 %v3332, 7
        %v3334 = vsub.s32 0, %v3333
        %v3335 = vrot.slane %v3276, %v3334
        %v3337 = vadd.f32 %v3327, %v3335
        %v3338 = vadd.f32 %v3328, %v3335
        %v3339 = vadd.f32 %v3329, %v3335
        %v3340 = vadd.f32 %v3330, %v3335
        %3341 = vst [vmem:[#allocation2] sm:$0xff] %v3337
        %3342 = vst [vmem:[#allocation2 + $0x8] sm:$0xff] %v3338
        %3343 = vst [vmem:[#allocation2 + $0x10] sm:$0xff] %v3339
        %3344 = vst [vmem:[#allocation2 + $0x18] sm:$0xff] %v3340
        %p3345 = scmp.eq.s32.totalorder %s50, 1
        // Predicated region
        $region129: #{tpu_custom_call.1} parent=95 // pred_check
          %p3346 = pneg %p3345
        $region130: #{tpu_custom_call.1} parent=95 // pred_check_branch
          %3348 = sbr.rel (%p3346) target = $region132
        $region131: #{tpu_custom_call.1} parent=95 // pred_region
          %v3349 = vld [vmem:[%s17] sm:$0x1]
          %v3350 = vld [vmem:[%s18] sm:$0x1]
          %3351 = vadd.xlane.f32.xlu0 %v3337
          %v3352 = vpop.xlane.xlu0 %3351
          %3353 = vadd.xlane.f32.xlu0 %v3338
          %v3354 = vpop.xlane.xlu0 %3353
          %3355 = vadd.xlane.f32.xlu0 %v3339
          %v3356 = vpop.xlane.xlu0 %3355
          %3357 = vadd.xlane.f32.xlu0 %v3340
          %v3358 = vpop.xlane.xlu0 %3357
          %v3359 = vmul.f32 %v3352, %v2855
          %v3360 = vmul.f32 %v3354, %v2855
          %v3361 = vmul.f32 %v3356, %v2855
          %v3362 = vmul.f32 %v3358, %v2855
          %v3363 = vsub.f32 %v3337, %v3359
          %v3364 = vsub.f32 %v3338, %v3360
          %v3365 = vsub.f32 %v3339, %v3361
          %v3366 = vsub.f32 %v3340, %v3362
          %v3367 = vmul.f32 %v3363, %v3363
          %v3368 = vmul.f32 %v3364, %v3364
          %v3369 = vmul.f32 %v3365, %v3365
          %v3370 = vmul.f32 %v3366, %v3366
          %3371 = vadd.xlane.f32.xlu0 %v3367
          %v3372 = vpop.xlane.xlu0 %3371
          %3373 = vadd.xlane.f32.xlu0 %v3368
          %v3374 = vpop.xlane.xlu0 %3373
          %3375 = vadd.xlane.f32.xlu0 %v3369
          %v3376 = vpop.xlane.xlu0 %3375
          %3377 = vadd.xlane.f32.xlu0 %v3370
          %v3378 = vpop.xlane.xlu0 %3377
          %v3379 = vmul.f32 %v3372, %v2855
          %v3380 = vmul.f32 %v3374, %v2855
          %v3381 = vmul.f32 %v3376, %v2855
          %v3382 = vmul.f32 %v3378, %v2855
          %v3383 = vadd.f32 %v3379, 1e-05
          %v3384 = vadd.f32 %v3380, 1e-05
          %v3385 = vadd.f32 %v3381, 1e-05
          %v3386 = vadd.f32 %v3382, 1e-05
          %v3387 = vrsqrt.pop %v3383
          %v3388 = vrsqrt.pop %v3384
          %v3389 = vrsqrt.pop %v3385
          %v3390 = vrsqrt.pop %v3386
          %v3391 = vmul.f32 %v3363, %v3387
          %v3392 = vmul.f32 %v3364, %v3388
          %v3393 = vmul.f32 %v3365, %v3389
          %v3394 = vmul.f32 %v3366, %v3390
          %v3396 = vlaneseq
          %v3397 = vshrl.u32 %v3396, 7
          %v3398 = vsub.s32 0, %v3397
          %v3399 = vrot.slane %v3349, %v3398
          %v3401 = vmul.f32 %v3391, %v3399
          %v3402 = vmul.f32 %v3392, %v3399
          %v3403 = vmul.f32 %v3393, %v3399
          %v3404 = vmul.f32 %v3394, %v3399
          %v3406 = vlaneseq
          %v3407 = vshrl.u32 %v3406, 7
          %v3408 = vsub.s32 0, %v3407
          %v3409 = vrot.slane %v3350, %v3408
          %v3411 = vadd.f32 %v3401, %v3409
          %v3412 = vadd.f32 %v3402, %v3409
          %v3413 = vadd.f32 %v3403, %v3409
          %v3414 = vadd.f32 %v3404, %v3409
          %3415 = vst [vmem:[%s982] sm:$0xff] %v3411
          %3416 = vst [vmem:[%s982 + $0x8] sm:$0xff] %v3412
          %3417 = vst [vmem:[%s982 + $0x10] sm:$0xff] %v3413
          %3418 = vst [vmem:[%s982 + $0x18] sm:$0xff] %v3414
        $region132: #{tpu_custom_call.1} parent=95 // pred_fallthru
          _
        %s3419 = sand.u32 %s549, 1
        %s3420 = scalar_lea.sflag [#allocation5], %s3419
        %s3421 = sand.u32 %s549, 1
        %s3422 = smul.addr %s3421, 32
        %s3423 = scalar_lea.vmem [#allocation15], %s3422
        // Predicated region
        $region133: #{tpu_custom_call.1} parent=95 // pred_check
          %p3424 = pneg %p559
        $region134: #{tpu_custom_call.1} parent=95 // pred_check_branch
          %3426 = sbr.rel (%p3424) target = $region136
        $region135: #{tpu_custom_call.1} parent=95 // pred_region
          %s3427 = smul.u32 2, %s49
          %s3429 = ssub.s32 512, 512
          %3430 = vsyncadd %s3420, %s3429
          %s3431 = smul.addr %s3427, 2
          %s3432 = smul.addr %s3431, 128
          %s3433 = scalar_lea.hbm %s19, %s3432
          %s3434 = sshll.u32 %s3423, 4
          %s3435 = int_to_ptr.vmem [resolvable:$true] %s3434
          %3440 = dma.vmem_to_hbm [thread:$0]  %s3435, 512, %s3433, %s3420, 128, 128, 8
        $region136: #{tpu_custom_call.1} parent=95 // pred_fallthru
          _
      $region96: #{tpu_custom_call.1} parent=5 // pred_fallthru
        _
      %p3441 = scmp.le.s32.totalorder 2, %s40
      // Predicated region
      $region137: #{tpu_custom_call.1} parent=5 // pred_check
        %p3442 = pneg %p3441
      $region138: #{tpu_custom_call.1} parent=5 // pred_check_branch
        %3444 = sbr.rel (%p3442) target = $region140
      $region139: #{tpu_custom_call.1} parent=5 // pred_region
        %s3445 = ssub.s32 %s40, 2
        // Predicated region
        $region141: #{tpu_custom_call.1} parent=139 // pred_check
          %p3446 = pneg %p565
        $region142: #{tpu_custom_call.1} parent=139 // pred_check_branch
          %3448 = sbr.rel (%p3446) target = $region144
        $region143: #{tpu_custom_call.1} parent=139 // pred_region
          %s3449 = sand.u32 %s550, 1
          %s3450 = scalar_lea.sflag [#allocation5], %s3449
          %s3451 = sand.u32 %s550, 1
          %s3452 = smul.addr %s3451, 32
          %s3453 = scalar_lea.vmem [#allocation15], %s3452
          %3454 = dma.done %s3450, 512
        $region144: #{tpu_custom_call.1} parent=139 // pred_fallthru
          _
      $region140: #{tpu_custom_call.1} parent=5 // pred_fallthru
        _
    $region6: #{tpu_custom_call.1} parent=1 // loop_footer
      %s44 = sadd.s32 1, %s40
    $region7: #{tpu_custom_call.1} parent=1 // loop_footer_branch
      %39 = sbr.rel target = $region3
    $region8: #{tpu_custom_call.1} parent=1 // loop_exit
      _
    %3455 = vsyncpa [#allocation4], 1
    %s3456 = scalar_lea.sflag [#allocation4], 1
    %3457 = vsyncpa %s3456, 1
    %3458 = vsyncpa [#allocation7], 1
    %s3459 = scalar_lea.sflag [#allocation7], 1
    %3460 = vsyncpa %s3459, 1
    %3461 = vsyncpa [#allocation10], 1
    %s3462 = scalar_lea.sflag [#allocation10], 1
    %3463 = vsyncpa %s3462, 1
    %3464 = vsyncpa [#allocation13], 1
    %s3465 = scalar_lea.sflag [#allocation13], 1
    %3466 = vsyncpa %s3465, 1
    %3467 = vsyncpa [#allocation5], 1
    %s3468 = scalar_lea.sflag [#allocation5], 1
    %3469 = vsyncpa %s3468, 1

</llo_original>
